<compile_context>
chip_gen: v6e
topology: v6e:2x2x1
jax: 0.10.0
libtpu: 0.0.40
codegen_flags: <defaults>
</compile_context>

<pallas_src>
import math

import jax
import jax.numpy as jnp
from jax.experimental import pallas as pl
from jax.experimental.pallas import tpu as pltpu

HIDDEN = 1000        # mobilenet_v2 classifier output dim
HIDDEN_PAD = 1024    # 128-aligned feature dim
ATTRIB_NUM = 8       # small attrib_num for the synthetic example
ATTRIB_PAD = 128     # lane-aligned output width
BATCH = 2
SUBLANE = 8


def _mlp_head_kernel(x_ref, w123_ref, w4_ref, scales_ref, biases_ref, o_ref):
    """Whole MLP head in one kernel invocation (all operands fit in VMEM).

    x is bf16 (Bp, 1024); weights are per-output-channel int8 (padded);
    scales/biases are f32. Each layer: exact int8->bf16 weight cast, bf16 MXU
    matmul with f32 accumulation, then scale + bias + tanh on the tiny
    (Bp, width) accumulator.
    """
    h = x_ref[...]                                            # (Bp, 1024) bf16

    # fc1 .. fc3 — static unroll, static slices into the stacked operands.
    for l in range(3):
        w = w123_ref[l].astype(jnp.bfloat16)                  # exact, |q|<=127
        acc = jnp.dot(h, w, preferred_element_type=jnp.float32)
        acc = acc * scales_ref[l:l + 1, :] + biases_ref[l:l + 1, :]
        h = jnp.tanh(acc).astype(jnp.bfloat16)

    # fc4 (1024 -> 128 padded) + final tanh * 0.5 + 0.5.
    w4 = w4_ref[...].astype(jnp.bfloat16)
    acc = jnp.dot(h, w4, preferred_element_type=jnp.float32)
    acc = (acc * scales_ref[3:4, :ATTRIB_PAD]
           + biases_ref[3:4, :ATTRIB_PAD])
    o_ref[...] = jnp.tanh(acc) * jnp.float32(0.5) + jnp.float32(0.5)


def _pad2(a, rows, cols):
    r, c = a.shape
    return jnp.pad(a, ((0, rows - r), (0, cols - c)))


def _pad1(a, n, value):
    return jnp.pad(a, (0, n - a.shape[0]), constant_values=value)


def _quantize_per_channel(w):
    """Symmetric per-output-channel int8 quantization of an (in, out) weight."""
    amax = jnp.max(jnp.abs(w), axis=0)                        # (out,)
    scale = jnp.where(amax > 0, amax / 127.0, 1.0).astype(jnp.float32)
    q = jnp.clip(jnp.round(w / scale), -127.0, 127.0).astype(jnp.int8)
    return q, scale


def prepare_params(params):
    """Quantize weights to int8 (per-output-channel scale), pad to 128-aligned
    shapes, and consolidate operands:
      w123_q : (3, 1024, 1024) int8   stacked fc1/fc2/fc3 weights (in, out)
      w4_q   : (1024, 128)     int8   fc4 weight
      scales : (4, 1024)       f32    per-output-channel scales (row 3: fc4)
      biases : (4, 1024)       f32    biases (row 3: fc4)
    Zero padding keeps the math exact: padded input columns hit zero weight
    rows, and padded output columns (zero weight cols + zero bias) are sliced
    off by the wrapper.
    """
    (w1, b1), (w2, b2), (w3, b3), (w4, b4) = params

    qs, ss = [], []
    for w in (w1, w2, w3):
        q, s = _quantize_per_channel(w)
        qs.append(_pad2(q, HIDDEN_PAD, HIDDEN_PAD))
        ss.append(_pad1(s, HIDDEN_PAD, 1.0))
    q4, s4 = _quantize_per_channel(w4)

    w123_q = jnp.stack(qs)                                    # (3, 1024, 1024)
    w4_q = _pad2(q4, HIDDEN_PAD, ATTRIB_PAD)                  # (1024, 128)
    scales = jnp.stack(ss + [_pad1(s4, HIDDEN_PAD, 1.0)])     # (4, 1024)
    biases = jnp.concatenate(
        [_pad2(b1, 1, HIDDEN_PAD), _pad2(b2, 1, HIDDEN_PAD),
         _pad2(b3, 1, HIDDEN_PAD), _pad2(b4, 1, HIDDEN_PAD)], axis=0)
    return (w123_q, w4_q, scales, biases.astype(jnp.float32))


@jax.jit
def regressor_forward(x_feats, packed):
    """x_feats: (B, 1000) float32 features (output of the frozen backbone)."""
    w123_q, w4_q, scales, biases = packed
    B = x_feats.shape[0]
    b_pad = ((B + SUBLANE - 1) // SUBLANE) * SUBLANE

    # Pad batch -> multiple of 8 sublanes, feature -> 1024 lanes, cast to bf16.
    xp = _pad2(x_feats, b_pad, HIDDEN_PAD).astype(jnp.bfloat16)

    vmem_spec = pl.BlockSpec(memory_space=pltpu.MemorySpace.VMEM)
    operands = (xp, w123_q, w4_q, scales, biases)

    bytes_accessed = sum(int(a.size) * a.dtype.itemsize for a in operands)
    bytes_accessed += b_pad * ATTRIB_PAD * 4
    flops = 2 * b_pad * HIDDEN_PAD * (3 * HIDDEN_PAD + ATTRIB_PAD)
    transcendentals = b_pad * (3 * HIDDEN_PAD + ATTRIB_PAD)

    out_pad = pl.pallas_call(
        _mlp_head_kernel,
        out_shape=jax.ShapeDtypeStruct((b_pad, ATTRIB_PAD), jnp.float32),
        in_specs=[vmem_spec] * len(operands),
        out_specs=vmem_spec,
        compiler_params=pltpu.CompilerParams(
            vmem_limit_bytes=16 * 1024 * 1024),
        cost_estimate=pl.CostEstimate(
            flops=flops,
            transcendentals=transcendentals,
            bytes_accessed=bytes_accessed),
    )(*operands)

    # Slice back to the logical (B, attrib_num) result.
    return out_pad[:B, :ATTRIB_NUM]


def init_linear(key, in_features, out_features):
    """Deterministic PyTorch-style nn.Linear init (uniform(-k, k), k=1/sqrt(fan_in)).

    Weight is stored (in_features, out_features), bias as (1, out_features),
    so the kernel computes y = x @ W + b (== PyTorch x @ weight.T + bias).
    """
    kw, kb = jax.random.split(key)
    k = 1.0 / math.sqrt(in_features)
    w = jax.random.uniform(kw, (in_features, out_features), jnp.float32, -k, k)
    b = jax.random.uniform(kb, (1, out_features), jnp.float32, -k, k)
    return w, b


def reference_forward_f32(x_feats, params):
    """Module-semantics reference in full f32."""
    (w1, b1), (w2, b2), (w3, b3), (w4, b4) = params
    h = jnp.tanh(x_feats @ w1 + b1)
    h = jnp.tanh(h @ w2 + b2)
    h = jnp.tanh(h @ w3 + b3)
    h = jnp.tanh(h @ w4 + b4)
    return h * 0.5 + 0.5


def reference_forward_quant(x_feats, packed):
    """Plain-JAX reference matching the kernel's int8-weight / bf16-input /
    f32-accumulation numerics exactly (modulo reduction order / tanh impl)."""
    w123_q, w4_q, scales, biases = packed
    B = x_feats.shape[0]
    b_pad = ((B + SUBLANE - 1) // SUBLANE) * SUBLANE
    h = _pad2(x_feats, b_pad, HIDDEN_PAD).astype(jnp.bfloat16)
    for l in range(3):
        w = w123_q[l].astype(jnp.bfloat16)
        acc = jnp.dot(h, w, preferred_element_type=jnp.float32)
        acc = acc * scales[l][None, :] + biases[l][None, :]
        h = jnp.tanh(acc).astype(jnp.bfloat16)
    w4 = w4_q.astype(jnp.bfloat16)
    acc = jnp.dot(h, w4, preferred_element_type=jnp.float32)
    acc = acc * scales[3, :ATTRIB_PAD][None, :] + biases[3, :ATTRIB_PAD][None, :]
    return (jnp.tanh(acc) * 0.5 + 0.5)[:B, :ATTRIB_NUM]


if __name__ == "__main__":
    root = jax.random.PRNGKey(0)
    kx, k1, k2, k3, k4 = jax.random.split(root, 5)

    # Stand-in for the frozen mobilenet_v2 output features (B, 1000).
    x_feats = jax.random.normal(kx, (BATCH, HIDDEN), jnp.float32)

    params = (
        init_linear(k1, HIDDEN, HIDDEN),      # fc1
        init_linear(k2, HIDDEN, HIDDEN),      # fc2
        init_linear(k3, HIDDEN, HIDDEN),      # fc3
        init_linear(k4, HIDDEN, ATTRIB_NUM),  # fc4
    )
    packed = prepare_params(params)

    out = regressor_forward(x_feats, packed)
    out = jax.block_until_ready(out)
    assert out.shape == (BATCH, ATTRIB_NUM), out.shape

    # Numerics: match the quantized-weight path tightly, and the f32 module
    # semantics within bf16+int8-induced tolerance.
    ref_quant = reference_forward_quant(x_feats, packed)
    ref_f32 = reference_forward_f32(x_feats, params)
    assert jnp.allclose(out, ref_quant, atol=5e-3, rtol=0.0), \
        "mismatch vs quantization-matched reference"
    assert jnp.allclose(out, ref_f32, atol=3e-2, rtol=0.0), \
        "mismatch vs f32 module reference"
    # Output is tanh(.)*0.5+0.5, so it must lie in [0, 1].
    assert bool(jnp.all((out >= 0.0) & (out <= 1.0)))

    print("KERNEL_OK")
</pallas_src>

<mosaic_0001>
module attributes {stable_mosaic.version = 11 : i64} {
  func.func @_mlp_head_kernel(%arg0: memref<8x1024xbf16, #tpu.memory_space<vmem>>, %arg1: memref<3x1024x1024xi8, #tpu.memory_space<vmem>>, %arg2: memref<1024x128xi8, #tpu.memory_space<vmem>>, %arg3: memref<4x1024xf32, #tpu.memory_space<vmem>>, %arg4: memref<4x1024xf32, #tpu.memory_space<vmem>>, %arg5: memref<8x128xf32, #tpu.memory_space<vmem>>) attributes {dimension_semantics = [], scalar_prefetch = 0 : i64, scratch_operands = 0 : i64, tpu.core_type = #tpu.core_type<tc>} {
    %c0 = arith.constant 0 : index
    %c0_0 = arith.constant 0 : index
    %0 = vector.load %arg0[%c0, %c0_0] : memref<8x1024xbf16, #tpu.memory_space<vmem>>, vector<8x1024xbf16>
    %c0_1 = arith.constant 0 : index
    %c0_2 = arith.constant 0 : index
    %c0_3 = arith.constant 0 : index
    %1 = vector.load %arg1[%c0_1, %c0_2, %c0_3] : memref<3x1024x1024xi8, #tpu.memory_space<vmem>>, vector<1x1024x1024xi8>
    %2 = vector.shape_cast %1 : vector<1x1024x1024xi8> to vector<1024x1024xi8>
    %3 = arith.sitofp %2 : vector<1024x1024xi8> to vector<1024x1024xbf16>
    %cst = arith.constant dense<0.000000e+00> : vector<8x1024xf32>
    %4 = tpu.matmul %0, %3, %cst {dimension_numbers = #tpu.dot_dimension_numbers<[1], [0], [0], [1], [0, 0, 1, 1], [], []>} : vector<8x1024xbf16>, vector<1024x1024xbf16>, vector<8x1024xf32> -> vector<8x1024xf32>
    %c0_4 = arith.constant 0 : index
    %c0_5 = arith.constant 0 : index
    %5 = vector.load %arg3[%c0_4, %c0_5] : memref<4x1024xf32, #tpu.memory_space<vmem>>, vector<1x1024xf32>
    %6 = vector.broadcast %5 : vector<1x1024xf32> to vector<8x1024xf32>
    %7 = arith.mulf %4, %6 : vector<8x1024xf32>
    %c0_6 = arith.constant 0 : index
    %c0_7 = arith.constant 0 : index
    %8 = vector.load %arg4[%c0_6, %c0_7] : memref<4x1024xf32, #tpu.memory_space<vmem>>, vector<1x1024xf32>
    %9 = vector.broadcast %8 : vector<1x1024xf32> to vector<8x1024xf32>
    %10 = arith.addf %7, %9 : vector<8x1024xf32>
    %11 = math.tanh %10 : vector<8x1024xf32>
    %12 = arith.truncf %11 : vector<8x1024xf32> to vector<8x1024xbf16>
    %c1 = arith.constant 1 : index
    %c0_8 = arith.constant 0 : index
    %c0_9 = arith.constant 0 : index
    %13 = vector.load %arg1[%c1, %c0_8, %c0_9] : memref<3x1024x1024xi8, #tpu.memory_space<vmem>>, vector<1x1024x1024xi8>
    %14 = vector.shape_cast %13 : vector<1x1024x1024xi8> to vector<1024x1024xi8>
    %15 = arith.sitofp %14 : vector<1024x1024xi8> to vector<1024x1024xbf16>
    %cst_10 = arith.constant dense<0.000000e+00> : vector<8x1024xf32>
    %16 = tpu.matmul %12, %15, %cst_10 {dimension_numbers = #tpu.dot_dimension_numbers<[1], [0], [0], [1], [0, 0, 1, 1], [], []>} : vector<8x1024xbf16>, vector<1024x1024xbf16>, vector<8x1024xf32> -> vector<8x1024xf32>
    %c1_11 = arith.constant 1 : index
    %c0_12 = arith.constant 0 : index
    %17 = vector.load %arg3[%c1_11, %c0_12] : memref<4x1024xf32, #tpu.memory_space<vmem>>, vector<1x1024xf32>
    %18 = vector.broadcast %17 : vector<1x1024xf32> to vector<8x1024xf32>
    %19 = arith.mulf %16, %18 : vector<8x1024xf32>
    %c1_13 = arith.constant 1 : index
    %c0_14 = arith.constant 0 : index
    %20 = vector.load %arg4[%c1_13, %c0_14] : memref<4x1024xf32, #tpu.memory_space<vmem>>, vector<1x1024xf32>
    %21 = vector.broadcast %20 : vector<1x1024xf32> to vector<8x1024xf32>
    %22 = arith.addf %19, %21 : vector<8x1024xf32>
    %23 = math.tanh %22 : vector<8x1024xf32>
    %24 = arith.truncf %23 : vector<8x1024xf32> to vector<8x1024xbf16>
    %c2 = arith.constant 2 : index
    %c0_15 = arith.constant 0 : index
    %c0_16 = arith.constant 0 : index
    %25 = vector.load %arg1[%c2, %c0_15, %c0_16] : memref<3x1024x1024xi8, #tpu.memory_space<vmem>>, vector<1x1024x1024xi8>
    %26 = vector.shape_cast %25 : vector<1x1024x1024xi8> to vector<1024x1024xi8>
    %27 = arith.sitofp %26 : vector<1024x1024xi8> to vector<1024x1024xbf16>
    %cst_17 = arith.constant dense<0.000000e+00> : vector<8x1024xf32>
    %28 = tpu.matmul %24, %27, %cst_17 {dimension_numbers = #tpu.dot_dimension_numbers<[1], [0], [0], [1], [0, 0, 1, 1], [], []>} : vector<8x1024xbf16>, vector<1024x1024xbf16>, vector<8x1024xf32> -> vector<8x1024xf32>
    %c2_18 = arith.constant 2 : index
    %c0_19 = arith.constant 0 : index
    %29 = vector.load %arg3[%c2_18, %c0_19] : memref<4x1024xf32, #tpu.memory_space<vmem>>, vector<1x1024xf32>
    %30 = vector.broadcast %29 : vector<1x1024xf32> to vector<8x1024xf32>
    %31 = arith.mulf %28, %30 : vector<8x1024xf32>
    %c2_20 = arith.constant 2 : index
    %c0_21 = arith.constant 0 : index
    %32 = vector.load %arg4[%c2_20, %c0_21] : memref<4x1024xf32, #tpu.memory_space<vmem>>, vector<1x1024xf32>
    %33 = vector.broadcast %32 : vector<1x1024xf32> to vector<8x1024xf32>
    %34 = arith.addf %31, %33 : vector<8x1024xf32>
    %35 = math.tanh %34 : vector<8x1024xf32>
    %36 = arith.truncf %35 : vector<8x1024xf32> to vector<8x1024xbf16>
    %c0_22 = arith.constant 0 : index
    %c0_23 = arith.constant 0 : index
    %37 = vector.load %arg2[%c0_22, %c0_23] : memref<1024x128xi8, #tpu.memory_space<vmem>>, vector<1024x128xi8>
    %38 = arith.sitofp %37 : vector<1024x128xi8> to vector<1024x128xbf16>
    %cst_24 = arith.constant dense<0.000000e+00> : vector<8x128xf32>
    %39 = tpu.matmul %36, %38, %cst_24 {dimension_numbers = #tpu.dot_dimension_numbers<[1], [0], [0], [1], [0, 0, 1, 1], [], []>} : vector<8x1024xbf16>, vector<1024x128xbf16>, vector<8x128xf32> -> vector<8x128xf32>
    %c3 = arith.constant 3 : index
    %c0_25 = arith.constant 0 : index
    %40 = vector.load %arg3[%c3, %c0_25] : memref<4x1024xf32, #tpu.memory_space<vmem>>, vector<1x128xf32>
    %41 = vector.broadcast %40 : vector<1x128xf32> to vector<8x128xf32>
    %42 = arith.mulf %39, %41 : vector<8x128xf32>
    %c3_26 = arith.constant 3 : index
    %c0_27 = arith.constant 0 : index
    %43 = vector.load %arg4[%c3_26, %c0_27] : memref<4x1024xf32, #tpu.memory_space<vmem>>, vector<1x128xf32>
    %44 = vector.broadcast %43 : vector<1x128xf32> to vector<8x128xf32>
    %45 = arith.addf %42, %44 : vector<8x128xf32>
    %46 = math.tanh %45 : vector<8x128xf32>
    %cst_28 = arith.constant 5.000000e-01 : f32
    %47 = vector.broadcast %cst_28 : f32 to vector<8x128xf32>
    %48 = arith.mulf %46, %47 : vector<8x128xf32>
    %cst_29 = arith.constant 5.000000e-01 : f32
    %49 = vector.broadcast %cst_29 : f32 to vector<8x128xf32>
    %50 = arith.addf %48, %49 : vector<8x128xf32>
    %c0_30 = arith.constant 0 : index
    %c0_31 = arith.constant 0 : index
    %51 = vector.load %arg5[%c0_30, %c0_31] : memref<8x128xf32, #tpu.memory_space<vmem>>, vector<8x128xf32>
    tpu.vector_store %arg5[%c0_30, %c0_31], %50 {strides = array<i32>} : memref<8x128xf32, #tpu.memory_space<vmem>>, vector<8x128xf32>,
    return
  }
}

</mosaic_0001>

<llo_original>
// kernel: regressor_forward.1
$region0: #{regressor_forward.1}
  #allocation0 [shape = 'u32[]', space=smem, size = 0x4, offset = 0x4, fixed_abs, tag = 'smem constant byte address 0x4 - core index']
  #allocation1 [shape = 'u32[144,128]{1,0:T(1,128)}', space=vmem, size = 0x12000, scoped, tag = 'internal scratch']
  %s0 = inlined_call_operand.vmem [shape: bf16[8,1024], index: 0, kind: input, shape index: {}]
  %s1 = inlined_call_operand.hbm [shape: s8[3,1024,1024], index: 1, kind: input, shape index: {}]
  %s2 = inlined_call_operand.hbm [shape: s8[1024,128], index: 2, kind: input, shape index: {}]
  %s3 = inlined_call_operand.hbm [shape: f32[4,1024], index: 3, kind: input, shape index: {}]
  %s4 = inlined_call_operand.hbm [shape: f32[4,1024], index: 4, kind: input, shape index: {}]
  %s5 = inlined_call_operand.vmem [shape: f32[8,128], index: 5, kind: output, shape index: {}]
  %s6 = sld [smem:[#allocation0]]
  $region46: #{regressor_forward.1} parent=0
    _
  %s8 = ssub.s32 1, %s6
  %s9 = scalar_select 0, %s8, %s6
  $region1: #{regressor_forward.1} parent=0
    #allocation2 [shape = 'u8[3145728]{0}', space=vmem, size = 0x300000, scoped, tag = 'input window, operand 1, single buffered']
    #allocation3 [shape = 's32[1]{0}', space=sflag, size = 0x4, scoped, tag = 'scoped memory for regressor_forward.1']
    #allocation4 [shape = 'u8[131072]{0}', space=vmem, size = 0x20000, scoped, tag = 'input window, operand 2, single buffered']
    #allocation5 [shape = 's32[1]{0}', space=sflag, size = 0x4, scoped, tag = 'scoped memory for regressor_forward.1']
    #allocation6 [shape = 'u8[16384]{0}', space=vmem, size = 0x4000, scoped, tag = 'input window, operand 3, single buffered']
    #allocation7 [shape = 'u8[16384]{0}', space=vmem, size = 0x4000, scoped, tag = 'input window, operand 4, single buffered']
    #allocation8 [shape = 's32[1]{0}', space=sflag, size = 0x4, scoped, tag = 'scoped memory for regressor_forward.1']
    %10 = vsyncpa [#allocation3], 0
    %11 = vsyncpa [#allocation5], 0
    %12 = vsyncpa [#allocation8], 0
    // Predicated region
    $region2: #{regressor_forward.1} parent=1 // pred_check
      _
    $region3: #{regressor_forward.1} parent=1 // pred_check_branch
      %14 = sbr.rel (0) target = $region5
    $region4: #{regressor_forward.1} parent=1 // pred_region
      _
    $region5: #{regressor_forward.1} parent=1 // pred_fallthru
      _
    // Predicated region
    $region6: #{regressor_forward.1} parent=1 // pred_check
      _
    $region7: #{regressor_forward.1} parent=1 // pred_check_branch
      %16 = sbr.rel (0) target = $region9
    $region8: #{regressor_forward.1} parent=1 // pred_region
      %s18 = ssub.s32 98304, 98304
      %19 = vsyncadd [#allocation3], %s18
      %s20 = sshll.u32 [#allocation2], 4
      %s21 = int_to_ptr.vmem [resolvable:$true] %s20
      %26 = dma.hbm_to_vmem [thread:$0]  %s1, 98304, %s21, [#allocation3], 1024, 1024, 64
    $region9: #{regressor_forward.1} parent=1 // pred_fallthru
      _
    // Predicated region
    $region10: #{regressor_forward.1} parent=1 // pred_check
      _
    $region11: #{regressor_forward.1} parent=1 // pred_check_branch
      %28 = sbr.rel (0) target = $region13
    $region12: #{regressor_forward.1} parent=1 // pred_region
      %s30 = ssub.s32 4096, 4096
      %31 = vsyncadd [#allocation5], %s30
      %s32 = sshll.u32 [#allocation4], 4
      %s33 = int_to_ptr.vmem [resolvable:$true] %s32
      %38 = dma.hbm_to_vmem [thread:$0]  %s2, 4096, %s33, [#allocation5], 128, 128, 8
    $region13: #{regressor_forward.1} parent=1 // pred_fallthru
      _
    // Predicated region
    $region14: #{regressor_forward.1} parent=1 // pred_check
      _
    $region15: #{regressor_forward.1} parent=1 // pred_check_branch
      %40 = sbr.rel (0) target = $region17
    $region16: #{regressor_forward.1} parent=1 // pred_region
      %s42 = ssub.s32 512, 512
      %43 = vsyncadd [#allocation5], %s42
      %s45 = sshll.u32 [#allocation6], 4
      %s46 = int_to_ptr.vmem [resolvable:$true] %s45
      %48 = dma.hbm_to_vmem [thread:$0]  %s3, 512, %s46, [#allocation5]
    $region17: #{regressor_forward.1} parent=1 // pred_fallthru
      _
    // Predicated region
    $region18: #{regressor_forward.1} parent=1 // pred_check
      _
    $region19: #{regressor_forward.1} parent=1 // pred_check_branch
      %50 = sbr.rel (0) target = $region21
    $region20: #{regressor_forward.1} parent=1 // pred_region
      %s52 = ssub.s32 512, 512
      %53 = vsyncadd [#allocation8], %s52
      %s55 = sshll.u32 [#allocation7], 4
      %s56 = int_to_ptr.vmem [resolvable:$true] %s55
      %58 = dma.hbm_to_vmem [thread:$0]  %s4, 512, %s56, [#allocation8]
    $region21: #{regressor_forward.1} parent=1 // pred_fallthru
      _
    // Predicated region
    $region22: #{regressor_forward.1} parent=1 // pred_check
      _
    $region23: #{regressor_forward.1} parent=1 // pred_check_branch
      %60 = sbr.rel (0) target = $region25
    $region24: #{regressor_forward.1} parent=1 // pred_region
      %61 = dma.done [#allocation3], 98304
    $region25: #{regressor_forward.1} parent=1 // pred_fallthru
      _
    // Predicated region
    $region26: #{regressor_forward.1} parent=1 // pred_check
      _
    $region27: #{regressor_forward.1} parent=1 // pred_check_branch
      %63 = sbr.rel (0) target = $region29
    $region28: #{regressor_forward.1} parent=1 // pred_region
      %64 = dma.done [#allocation5], 4096
    $region29: #{regressor_forward.1} parent=1 // pred_fallthru
      _
    // Predicated region
    $region30: #{regressor_forward.1} parent=1 // pred_check
      _
    $region31: #{regressor_forward.1} parent=1 // pred_check_branch
      %66 = sbr.rel (0) target = $region33
    $region32: #{regressor_forward.1} parent=1 // pred_region
      %67 = dma.done [#allocation5], 512
    $region33: #{regressor_forward.1} parent=1 // pred_fallthru
      _
    // Predicated region
    $region34: #{regressor_forward.1} parent=1 // pred_check
      _
    $region35: #{regressor_forward.1} parent=1 // pred_check_branch
      %69 = sbr.rel (0) target = $region37
    $region36: #{regressor_forward.1} parent=1 // pred_region
      %70 = dma.done [#allocation8], 512
    $region37: #{regressor_forward.1} parent=1 // pred_fallthru
      _
    %v72 = vld [vmem:[%s0] sm:$0xff]
    %v73 = vld [vmem:[%s0 + $0x8] sm:$0xff]
    %v74 = vld [vmem:[%s0 + $0x10] sm:$0xff]
    %v75 = vld [vmem:[%s0 + $0x18] sm:$0xff]
    %v76 = vld [vmem:[#allocation2] sm:$0xff]
    %v77 = vld [vmem:[#allocation2 + $0x8] sm:$0xff]
    %v78 = vld [vmem:[#allocation2 + $0x10] sm:$0xff]
    %v79 = vld [vmem:[#allocation2 + $0x18] sm:$0xff]
    %v80 = vld [vmem:[#allocation2 + $0x20] sm:$0xff]
    %v81 = vld [vmem:[#allocation2 + $0x28] sm:$0xff]
    %v82 = vld [vmem:[#allocation2 + $0x30] sm:$0xff]
    %v83 = vld [vmem:[#allocation2 + $0x38] sm:$0xff]
    %v84 = vld [vmem:[#allocation2 + $0x40] sm:$0xff]
    %v85 = vld [vmem:[#allocation2 + $0x48] sm:$0xff]
    %v86 = vld [vmem:[#allocation2 + $0x50] sm:$0xff]
    %v87 = vld [vmem:[#allocation2 + $0x58] sm:$0xff]
    %v88 = vld [vmem:[#allocation2 + $0x60] sm:$0xff]
    %v89 = vld [vmem:[#allocation2 + $0x68] sm:$0xff]
    %v90 = vld [vmem:[#allocation2 + $0x70] sm:$0xff]
    %v91 = vld [vmem:[#allocation2 + $0x78] sm:$0xff]
    %v92 = vld [vmem:[#allocation2 + $0x80] sm:$0xff]
    %v93 = vld [vmem:[#allocation2 + $0x88] sm:$0xff]
    %v94 = vld [vmem:[#allocation2 + $0x90] sm:$0xff]
    %v95 = vld [vmem:[#allocation2 + $0x98] sm:$0xff]
    %v96 = vld [vmem:[#allocation2 + $0xa0] sm:$0xff]
    %v97 = vld [vmem:[#allocation2 + $0xa8] sm:$0xff]
    %v98 = vld [vmem:[#allocation2 + $0xb0] sm:$0xff]
    %v99 = vld [vmem:[#allocation2 + $0xb8] sm:$0xff]
    %v100 = vld [vmem:[#allocation2 + $0xc0] sm:$0xff]
    %v101 = vld [vmem:[#allocation2 + $0xc8] sm:$0xff]
    %v102 = vld [vmem:[#allocation2 + $0xd0] sm:$0xff]
    %v103 = vld [vmem:[#allocation2 + $0xd8] sm:$0xff]
    %v104 = vld [vmem:[#allocation2 + $0xe0] sm:$0xff]
    %v105 = vld [vmem:[#allocation2 + $0xe8] sm:$0xff]
    %v106 = vld [vmem:[#allocation2 + $0xf0] sm:$0xff]
    %v107 = vld [vmem:[#allocation2 + $0xf8] sm:$0xff]
    %v108 = vld [vmem:[#allocation2 + $0x100] sm:$0xff]
    %v109 = vld [vmem:[#allocation2 + $0x108] sm:$0xff]
    %v110 = vld [vmem:[#allocation2 + $0x110] sm:$0xff]
    %v111 = vld [vmem:[#allocation2 + $0x118] sm:$0xff]
    %v112 = vld [vmem:[#allocation2 + $0x120] sm:$0xff]
    %v113 = vld [vmem:[#allocation2 + $0x128] sm:$0xff]
    %v114 = vld [vmem:[#allocation2 + $0x130] sm:$0xff]
    %v115 = vld [vmem:[#allocation2 + $0x138] sm:$0xff]
    %v116 = vld [vmem:[#allocation2 + $0x140] sm:$0xff]
    %v117 = vld [vmem:[#allocation2 + $0x148] sm:$0xff]
    %v118 = vld [vmem:[#allocation2 + $0x150] sm:$0xff]
    %v119 = vld [vmem:[#allocation2 + $0x158] sm:$0xff]
    %v120 = vld [vmem:[#allocation2 + $0x160] sm:$0xff]
    %v121 = vld [vmem:[#allocation2 + $0x168] sm:$0xff]
    %v122 = vld [vmem:[#allocation2 + $0x170] sm:$0xff]
    %v123 = vld [vmem:[#allocation2 + $0x178] sm:$0xff]
    %v124 = vld [vmem:[#allocation2 + $0x180] sm:$0xff]
    %v125 = vld [vmem:[#allocation2 + $0x188] sm:$0xff]
    %v126 = vld [vmem:[#allocation2 + $0x190] sm:$0xff]
    %v127 = vld [vmem:[#allocation2 + $0x198] sm:$0xff]
    %v128 = vld [vmem:[#allocation2 + $0x1a0] sm:$0xff]
    %v129 = vld [vmem:[#allocation2 + $0x1a8] sm:$0xff]
    %v130 = vld [vmem:[#allocation2 + $0x1b0] sm:$0xff]
    %v131 = vld [vmem:[#allocation2 + $0x1b8] sm:$0xff]
    %v132 = vld [vmem:[#allocation2 + $0x1c0] sm:$0xff]
    %v133 = vld [vmem:[#allocation2 + $0x1c8] sm:$0xff]
    %v134 = vld [vmem:[#allocation2 + $0x1d0] sm:$0xff]
    %v135 = vld [vmem:[#allocation2 + $0x1d8] sm:$0xff]
    %v136 = vld [vmem:[#allocation2 + $0x1e0] sm:$0xff]
    %v137 = vld [vmem:[#allocation2 + $0x1e8] sm:$0xff]
    %v138 = vld [vmem:[#allocation2 + $0x1f0] sm:$0xff]
    %v139 = vld [vmem:[#allocation2 + $0x1f8] sm:$0xff]
    %v140 = vld [vmem:[#allocation2 + $0x200] sm:$0xff]
    %v141 = vld [vmem:[#allocation2 + $0x208] sm:$0xff]
    %v142 = vld [vmem:[#allocation2 + $0x210] sm:$0xff]
    %v143 = vld [vmem:[#allocation2 + $0x218] sm:$0xff]
    %v144 = vld [vmem:[#allocation2 + $0x220] sm:$0xff]
    %v145 = vld [vmem:[#allocation2 + $0x228] sm:$0xff]
    %v146 = vld [vmem:[#allocation2 + $0x230] sm:$0xff]
    %v147 = vld [vmem:[#allocation2 + $0x238] sm:$0xff]
    %v148 = vld [vmem:[#allocation2 + $0x240] sm:$0xff]
    %v149 = vld [vmem:[#allocation2 + $0x248] sm:$0xff]
    %v150 = vld [vmem:[#allocation2 + $0x250] sm:$0xff]
    %v151 = vld [vmem:[#allocation2 + $0x258] sm:$0xff]
    %v152 = vld [vmem:[#allocation2 + $0x260] sm:$0xff]
    %v153 = vld [vmem:[#allocation2 + $0x268] sm:$0xff]
    %v154 = vld [vmem:[#allocation2 + $0x270] sm:$0xff]
    %v155 = vld [vmem:[#allocation2 + $0x278] sm:$0xff]
    %v156 = vld [vmem:[#allocation2 + $0x280] sm:$0xff]
    %v157 = vld [vmem:[#allocation2 + $0x288] sm:$0xff]
    %v158 = vld [vmem:[#allocation2 + $0x290] sm:$0xff]
    %v159 = vld [vmem:[#allocation2 + $0x298] sm:$0xff]
    %v160 = vld [vmem:[#allocation2 + $0x2a0] sm:$0xff]
    %v161 = vld [vmem:[#allocation2 + $0x2a8] sm:$0xff]
    %v162 = vld [vmem:[#allocation2 + $0x2b0] sm:$0xff]
    %v163 = vld [vmem:[#allocation2 + $0x2b8] sm:$0xff]
    %v164 = vld [vmem:[#allocation2 + $0x2c0] sm:$0xff]
    %v165 = vld [vmem:[#allocation2 + $0x2c8] sm:$0xff]
    %v166 = vld [vmem:[#allocation2 + $0x2d0] sm:$0xff]
    %v167 = vld [vmem:[#allocation2 + $0x2d8] sm:$0xff]
    %v168 = vld [vmem:[#allocation2 + $0x2e0] sm:$0xff]
    %v169 = vld [vmem:[#allocation2 + $0x2e8] sm:$0xff]
    %v170 = vld [vmem:[#allocation2 + $0x2f0] sm:$0xff]
    %v171 = vld [vmem:[#allocation2 + $0x2f8] sm:$0xff]
    %v172 = vld [vmem:[#allocation2 + $0x300] sm:$0xff]
    %v173 = vld [vmem:[#allocation2 + $0x308] sm:$0xff]
    %v174 = vld [vmem:[#allocation2 + $0x310] sm:$0xff]
    %v175 = vld [vmem:[#allocation2 + $0x318] sm:$0xff]
    %v176 = vld [vmem:[#allocation2 + $0x320] sm:$0xff]
    %v177 = vld [vmem:[#allocation2 + $0x328] sm:$0xff]
    %v178 = vld [vmem:[#allocation2 + $0x330] sm:$0xff]
    %v179 = vld [vmem:[#allocation2 + $0x338] sm:$0xff]
    %v180 = vld [vmem:[#allocation2 + $0x340] sm:$0xff]
    %v181 = vld [vmem:[#allocation2 + $0x348] sm:$0xff]
    %v182 = vld [vmem:[#allocation2 + $0x350] sm:$0xff]
    %v183 = vld [vmem:[#allocation2 + $0x358] sm:$0xff]
    %v184 = vld [vmem:[#allocation2 + $0x360] sm:$0xff]
    %v185 = vld [vmem:[#allocation2 + $0x368] sm:$0xff]
    %v186 = vld [vmem:[#allocation2 + $0x370] sm:$0xff]
    %v187 = vld [vmem:[#allocation2 + $0x378] sm:$0xff]
    %v188 = vld [vmem:[#allocation2 + $0x380] sm:$0xff]
    %v189 = vld [vmem:[#allocation2 + $0x388] sm:$0xff]
    %v190 = vld [vmem:[#allocation2 + $0x390] sm:$0xff]
    %v191 = vld [vmem:[#allocation2 + $0x398] sm:$0xff]
    %v192 = vld [vmem:[#allocation2 + $0x3a0] sm:$0xff]
    %v193 = vld [vmem:[#allocation2 + $0x3a8] sm:$0xff]
    %v194 = vld [vmem:[#allocation2 + $0x3b0] sm:$0xff]
    %v195 = vld [vmem:[#allocation2 + $0x3b8] sm:$0xff]
    %v196 = vld [vmem:[#allocation2 + $0x3c0] sm:$0xff]
    %v197 = vld [vmem:[#allocation2 + $0x3c8] sm:$0xff]
    %v198 = vld [vmem:[#allocation2 + $0x3d0] sm:$0xff]
    %v199 = vld [vmem:[#allocation2 + $0x3d8] sm:$0xff]
    %v200 = vld [vmem:[#allocation2 + $0x3e0] sm:$0xff]
    %v201 = vld [vmem:[#allocation2 + $0x3e8] sm:$0xff]
    %v202 = vld [vmem:[#allocation2 + $0x3f0] sm:$0xff]
    %v203 = vld [vmem:[#allocation2 + $0x3f8] sm:$0xff]
    %v204 = vld [vmem:[#allocation2 + $0x400] sm:$0xff]
    %v205 = vld [vmem:[#allocation2 + $0x408] sm:$0xff]
    %v206 = vld [vmem:[#allocation2 + $0x410] sm:$0xff]
    %v207 = vld [vmem:[#allocation2 + $0x418] sm:$0xff]
    %v208 = vld [vmem:[#allocation2 + $0x420] sm:$0xff]
    %v209 = vld [vmem:[#allocation2 + $0x428] sm:$0xff]
    %v210 = vld [vmem:[#allocation2 + $0x430] sm:$0xff]
    %v211 = vld [vmem:[#allocation2 + $0x438] sm:$0xff]
    %v212 = vld [vmem:[#allocation2 + $0x440] sm:$0xff]
    %v213 = vld [vmem:[#allocation2 + $0x448] sm:$0xff]
    %v214 = vld [vmem:[#allocation2 + $0x450] sm:$0xff]
    %v215 = vld [vmem:[#allocation2 + $0x458] sm:$0xff]
    %v216 = vld [vmem:[#allocation2 + $0x460] sm:$0xff]
    %v217 = vld [vmem:[#allocation2 + $0x468] sm:$0xff]
    %v218 = vld [vmem:[#allocation2 + $0x470] sm:$0xff]
    %v219 = vld [vmem:[#allocation2 + $0x478] sm:$0xff]
    %v220 = vld [vmem:[#allocation2 + $0x480] sm:$0xff]
    %v221 = vld [vmem:[#allocation2 + $0x488] sm:$0xff]
    %v222 = vld [vmem:[#allocation2 + $0x490] sm:$0xff]
    %v223 = vld [vmem:[#allocation2 + $0x498] sm:$0xff]
    %v224 = vld [vmem:[#allocation2 + $0x4a0] sm:$0xff]
    %v225 = vld [vmem:[#allocation2 + $0x4a8] sm:$0xff]
    %v226 = vld [vmem:[#allocation2 + $0x4b0] sm:$0xff]
    %v227 = vld [vmem:[#allocation2 + $0x4b8] sm:$0xff]
    %v228 = vld [vmem:[#allocation2 + $0x4c0] sm:$0xff]
    %v229 = vld [vmem:[#allocation2 + $0x4c8] sm:$0xff]
    %v230 = vld [vmem:[#allocation2 + $0x4d0] sm:$0xff]
    %v231 = vld [vmem:[#allocation2 + $0x4d8] sm:$0xff]
    %v232 = vld [vmem:[#allocation2 + $0x4e0] sm:$0xff]
    %v233 = vld [vmem:[#allocation2 + $0x4e8] sm:$0xff]
    %v234 = vld [vmem:[#allocation2 + $0x4f0] sm:$0xff]
    %v235 = vld [vmem:[#allocation2 + $0x4f8] sm:$0xff]
    %v236 = vld [vmem:[#allocation2 + $0x500] sm:$0xff]
    %v237 = vld [vmem:[#allocation2 + $0x508] sm:$0xff]
    %v238 = vld [vmem:[#allocation2 + $0x510] sm:$0xff]
    %v239 = vld [vmem:[#allocation2 + $0x518] sm:$0xff]
    %v240 = vld [vmem:[#allocation2 + $0x520] sm:$0xff]
    %v241 = vld [vmem:[#allocation2 + $0x528] sm:$0xff]
    %v242 = vld [vmem:[#allocation2 + $0x530] sm:$0xff]
    %v243 = vld [vmem:[#allocation2 + $0x538] sm:$0xff]
    %v244 = vld [vmem:[#allocation2 + $0x540] sm:$0xff]
    %v245 = vld [vmem:[#allocation2 + $0x548] sm:$0xff]
    %v246 = vld [vmem:[#allocation2 + $0x550] sm:$0xff]
    %v247 = vld [vmem:[#allocation2 + $0x558] sm:$0xff]
    %v248 = vld [vmem:[#allocation2 + $0x560] sm:$0xff]
    %v249 = vld [vmem:[#allocation2 + $0x568] sm:$0xff]
    %v250 = vld [vmem:[#allocation2 + $0x570] sm:$0xff]
    %v251 = vld [vmem:[#allocation2 + $0x578] sm:$0xff]
    %v252 = vld [vmem:[#allocation2 + $0x580] sm:$0xff]
    %v253 = vld [vmem:[#allocation2 + $0x588] sm:$0xff]
    %v254 = vld [vmem:[#allocation2 + $0x590] sm:$0xff]
    %v255 = vld [vmem:[#allocation2 + $0x598] sm:$0xff]
    %v256 = vld [vmem:[#allocation2 + $0x5a0] sm:$0xff]
    %v257 = vld [vmem:[#allocation2 + $0x5a8] sm:$0xff]
    %v258 = vld [vmem:[#allocation2 + $0x5b0] sm:$0xff]
    %v259 = vld [vmem:[#allocation2 + $0x5b8] sm:$0xff]
    %v260 = vld [vmem:[#allocation2 + $0x5c0] sm:$0xff]
    %v261 = vld [vmem:[#allocation2 + $0x5c8] sm:$0xff]
    %v262 = vld [vmem:[#allocation2 + $0x5d0] sm:$0xff]
    %v263 = vld [vmem:[#allocation2 + $0x5d8] sm:$0xff]
    %v264 = vld [vmem:[#allocation2 + $0x5e0] sm:$0xff]
    %v265 = vld [vmem:[#allocation2 + $0x5e8] sm:$0xff]
    %v266 = vld [vmem:[#allocation2 + $0x5f0] sm:$0xff]
    %v267 = vld [vmem:[#allocation2 + $0x5f8] sm:$0xff]
    %v268 = vld [vmem:[#allocation2 + $0x600] sm:$0xff]
    %v269 = vld [vmem:[#allocation2 + $0x608] sm:$0xff]
    %v270 = vld [vmem:[#allocation2 + $0x610] sm:$0xff]
    %v271 = vld [vmem:[#allocation2 + $0x618] sm:$0xff]
    %v272 = vld [vmem:[#allocation2 + $0x620] sm:$0xff]
    %v273 = vld [vmem:[#allocation2 + $0x628] sm:$0xff]
    %v274 = vld [vmem:[#allocation2 + $0x630] sm:$0xff]
    %v275 = vld [vmem:[#allocation2 + $0x638] sm:$0xff]
    %v276 = vld [vmem:[#allocation2 + $0x640] sm:$0xff]
    %v277 = vld [vmem:[#allocation2 + $0x648] sm:$0xff]
    %v278 = vld [vmem:[#allocation2 + $0x650] sm:$0xff]
    %v279 = vld [vmem:[#allocation2 + $0x658] sm:$0xff]
    %v280 = vld [vmem:[#allocation2 + $0x660] sm:$0xff]
    %v281 = vld [vmem:[#allocation2 + $0x668] sm:$0xff]
    %v282 = vld [vmem:[#allocation2 + $0x670] sm:$0xff]
    %v283 = vld [vmem:[#allocation2 + $0x678] sm:$0xff]
    %v284 = vld [vmem:[#allocation2 + $0x680] sm:$0xff]
    %v285 = vld [vmem:[#allocation2 + $0x688] sm:$0xff]
    %v286 = vld [vmem:[#allocation2 + $0x690] sm:$0xff]
    %v287 = vld [vmem:[#allocation2 + $0x698] sm:$0xff]
    %v288 = vld [vmem:[#allocation2 + $0x6a0] sm:$0xff]
    %v289 = vld [vmem:[#allocation2 + $0x6a8] sm:$0xff]
    %v290 = vld [vmem:[#allocation2 + $0x6b0] sm:$0xff]
    %v291 = vld [vmem:[#allocation2 + $0x6b8] sm:$0xff]
    %v292 = vld [vmem:[#allocation2 + $0x6c0] sm:$0xff]
    %v293 = vld [vmem:[#allocation2 + $0x6c8] sm:$0xff]
    %v294 = vld [vmem:[#allocation2 + $0x6d0] sm:$0xff]
    %v295 = vld [vmem:[#allocation2 + $0x6d8] sm:$0xff]
    %v296 = vld [vmem:[#allocation2 + $0x6e0] sm:$0xff]
    %v297 = vld [vmem:[#allocation2 + $0x6e8] sm:$0xff]
    %v298 = vld [vmem:[#allocation2 + $0x6f0] sm:$0xff]
    %v299 = vld [vmem:[#allocation2 + $0x6f8] sm:$0xff]
    %v300 = vld [vmem:[#allocation2 + $0x700] sm:$0xff]
    %v301 = vld [vmem:[#allocation2 + $0x708] sm:$0xff]
    %v302 = vld [vmem:[#allocation2 + $0x710] sm:$0xff]
    %v303 = vld [vmem:[#allocation2 + $0x718] sm:$0xff]
    %v304 = vld [vmem:[#allocation2 + $0x720] sm:$0xff]
    %v305 = vld [vmem:[#allocation2 + $0x728] sm:$0xff]
    %v306 = vld [vmem:[#allocation2 + $0x730] sm:$0xff]
    %v307 = vld [vmem:[#allocation2 + $0x738] sm:$0xff]
    %v308 = vld [vmem:[#allocation2 + $0x740] sm:$0xff]
    %v309 = vld [vmem:[#allocation2 + $0x748] sm:$0xff]
    %v310 = vld [vmem:[#allocation2 + $0x750] sm:$0xff]
    %v311 = vld [vmem:[#allocation2 + $0x758] sm:$0xff]
    %v312 = vld [vmem:[#allocation2 + $0x760] sm:$0xff]
    %v313 = vld [vmem:[#allocation2 + $0x768] sm:$0xff]
    %v314 = vld [vmem:[#allocation2 + $0x770] sm:$0xff]
    %v315 = vld [vmem:[#allocation2 + $0x778] sm:$0xff]
    %v316 = vld [vmem:[#allocation2 + $0x780] sm:$0xff]
    %v317 = vld [vmem:[#allocation2 + $0x788] sm:$0xff]
    %v318 = vld [vmem:[#allocation2 + $0x790] sm:$0xff]
    %v319 = vld [vmem:[#allocation2 + $0x798] sm:$0xff]
    %v320 = vld [vmem:[#allocation2 + $0x7a0] sm:$0xff]
    %v321 = vld [vmem:[#allocation2 + $0x7a8] sm:$0xff]
    %v322 = vld [vmem:[#allocation2 + $0x7b0] sm:$0xff]
    %v323 = vld [vmem:[#allocation2 + $0x7b8] sm:$0xff]
    %v324 = vld [vmem:[#allocation2 + $0x7c0] sm:$0xff]
    %v325 = vld [vmem:[#allocation2 + $0x7c8] sm:$0xff]
    %v326 = vld [vmem:[#allocation2 + $0x7d0] sm:$0xff]
    %v327 = vld [vmem:[#allocation2 + $0x7d8] sm:$0xff]
    %v328 = vld [vmem:[#allocation2 + $0x7e0] sm:$0xff]
    %v329 = vld [vmem:[#allocation2 + $0x7e8] sm:$0xff]
    %v330 = vld [vmem:[#allocation2 + $0x7f0] sm:$0xff]
    %v331 = vld [vmem:[#allocation2 + $0x7f8] sm:$0xff]
    %v332 = vunpack.c.l.s8.bf16 %v76
    %v333 = vunpack.c.l.s8.bf16 %v77
    %v334 = vunpack.c.l.s8.bf16 %v78
    %v335 = vunpack.c.l.s8.bf16 %v79
    %v336 = vunpack.c.l.s8.bf16 %v80
    %v337 = vunpack.c.l.s8.bf16 %v81
    %v338 = vunpack.c.l.s8.bf16 %v82
    %v339 = vunpack.c.l.s8.bf16 %v83
    %v340 = vunpack.c.h.s8.bf16 %v76
    %v341 = vunpack.c.h.s8.bf16 %v77
    %v342 = vunpack.c.h.s8.bf16 %v78
    %v343 = vunpack.c.h.s8.bf16 %v79
    %v344 = vunpack.c.h.s8.bf16 %v80
    %v345 = vunpack.c.h.s8.bf16 %v81
    %v346 = vunpack.c.h.s8.bf16 %v82
    %v347 = vunpack.c.h.s8.bf16 %v83
    %v348 = vunpack.c.l.s8.bf16 %v84
    %v349 = vunpack.c.l.s8.bf16 %v85
    %v350 = vunpack.c.l.s8.bf16 %v86
    %v351 = vunpack.c.l.s8.bf16 %v87
    %v352 = vunpack.c.l.s8.bf16 %v88
    %v353 = vunpack.c.l.s8.bf16 %v89
    %v354 = vunpack.c.l.s8.bf16 %v90
    %v355 = vunpack.c.l.s8.bf16 %v91
    %v356 = vunpack.c.h.s8.bf16 %v84
    %v357 = vunpack.c.h.s8.bf16 %v85
    %v358 = vunpack.c.h.s8.bf16 %v86
    %v359 = vunpack.c.h.s8.bf16 %v87
    %v360 = vunpack.c.h.s8.bf16 %v88
    %v361 = vunpack.c.h.s8.bf16 %v89
    %v362 = vunpack.c.h.s8.bf16 %v90
    %v363 = vunpack.c.h.s8.bf16 %v91
    %v364 = vunpack.c.l.s8.bf16 %v92
    %v365 = vunpack.c.l.s8.bf16 %v93
    %v366 = vunpack.c.l.s8.bf16 %v94
    %v367 = vunpack.c.l.s8.bf16 %v95
    %v368 = vunpack.c.l.s8.bf16 %v96
    %v369 = vunpack.c.l.s8.bf16 %v97
    %v370 = vunpack.c.l.s8.bf16 %v98
    %v371 = vunpack.c.l.s8.bf16 %v99
    %v372 = vunpack.c.h.s8.bf16 %v92
    %v373 = vunpack.c.h.s8.bf16 %v93
    %v374 = vunpack.c.h.s8.bf16 %v94
    %v375 = vunpack.c.h.s8.bf16 %v95
    %v376 = vunpack.c.h.s8.bf16 %v96
    %v377 = vunpack.c.h.s8.bf16 %v97
    %v378 = vunpack.c.h.s8.bf16 %v98
    %v379 = vunpack.c.h.s8.bf16 %v99
    %v380 = vunpack.c.l.s8.bf16 %v100
    %v381 = vunpack.c.l.s8.bf16 %v101
    %v382 = vunpack.c.l.s8.bf16 %v102
    %v383 = vunpack.c.l.s8.bf16 %v103
    %v384 = vunpack.c.l.s8.bf16 %v104
    %v385 = vunpack.c.l.s8.bf16 %v105
    %v386 = vunpack.c.l.s8.bf16 %v106
    %v387 = vunpack.c.l.s8.bf16 %v107
    %v388 = vunpack.c.h.s8.bf16 %v100
    %v389 = vunpack.c.h.s8.bf16 %v101
    %v390 = vunpack.c.h.s8.bf16 %v102
    %v391 = vunpack.c.h.s8.bf16 %v103
    %v392 = vunpack.c.h.s8.bf16 %v104
    %v393 = vunpack.c.h.s8.bf16 %v105
    %v394 = vunpack.c.h.s8.bf16 %v106
    %v395 = vunpack.c.h.s8.bf16 %v107
    %v396 = vunpack.c.l.s8.bf16 %v108
    %v397 = vunpack.c.l.s8.bf16 %v109
    %v398 = vunpack.c.l.s8.bf16 %v110
    %v399 = vunpack.c.l.s8.bf16 %v111
    %v400 = vunpack.c.l.s8.bf16 %v112
    %v401 = vunpack.c.l.s8.bf16 %v113
    %v402 = vunpack.c.l.s8.bf16 %v114
    %v403 = vunpack.c.l.s8.bf16 %v115
    %v404 = vunpack.c.h.s8.bf16 %v108
    %v405 = vunpack.c.h.s8.bf16 %v109
    %v406 = vunpack.c.h.s8.bf16 %v110
    %v407 = vunpack.c.h.s8.bf16 %v111
    %v408 = vunpack.c.h.s8.bf16 %v112
    %v409 = vunpack.c.h.s8.bf16 %v113
    %v410 = vunpack.c.h.s8.bf16 %v114
    %v411 = vunpack.c.h.s8.bf16 %v115
    %v412 = vunpack.c.l.s8.bf16 %v116
    %v413 = vunpack.c.l.s8.bf16 %v117
    %v414 = vunpack.c.l.s8.bf16 %v118
    %v415 = vunpack.c.l.s8.bf16 %v119
    %v416 = vunpack.c.l.s8.bf16 %v120
    %v417 = vunpack.c.l.s8.bf16 %v121
    %v418 = vunpack.c.l.s8.bf16 %v122
    %v419 = vunpack.c.l.s8.bf16 %v123
    %v420 = vunpack.c.h.s8.bf16 %v116
    %v421 = vunpack.c.h.s8.bf16 %v117
    %v422 = vunpack.c.h.s8.bf16 %v118
    %v423 = vunpack.c.h.s8.bf16 %v119
    %v424 = vunpack.c.h.s8.bf16 %v120
    %v425 = vunpack.c.h.s8.bf16 %v121
    %v426 = vunpack.c.h.s8.bf16 %v122
    %v427 = vunpack.c.h.s8.bf16 %v123
    %v428 = vunpack.c.l.s8.bf16 %v124
    %v429 = vunpack.c.l.s8.bf16 %v125
    %v430 = vunpack.c.l.s8.bf16 %v126
    %v431 = vunpack.c.l.s8.bf16 %v127
    %v432 = vunpack.c.l.s8.bf16 %v128
    %v433 = vunpack.c.l.s8.bf16 %v129
    %v434 = vunpack.c.l.s8.bf16 %v130
    %v435 = vunpack.c.l.s8.bf16 %v131
    %v436 = vunpack.c.h.s8.bf16 %v124
    %v437 = vunpack.c.h.s8.bf16 %v125
    %v438 = vunpack.c.h.s8.bf16 %v126
    %v439 = vunpack.c.h.s8.bf16 %v127
    %v440 = vunpack.c.h.s8.bf16 %v128
    %v441 = vunpack.c.h.s8.bf16 %v129
    %v442 = vunpack.c.h.s8.bf16 %v130
    %v443 = vunpack.c.h.s8.bf16 %v131
    %v444 = vunpack.c.l.s8.bf16 %v132
    %v445 = vunpack.c.l.s8.bf16 %v133
    %v446 = vunpack.c.l.s8.bf16 %v134
    %v447 = vunpack.c.l.s8.bf16 %v135
    %v448 = vunpack.c.l.s8.bf16 %v136
    %v449 = vunpack.c.l.s8.bf16 %v137
    %v450 = vunpack.c.l.s8.bf16 %v138
    %v451 = vunpack.c.l.s8.bf16 %v139
    %v452 = vunpack.c.h.s8.bf16 %v132
    %v453 = vunpack.c.h.s8.bf16 %v133
    %v454 = vunpack.c.h.s8.bf16 %v134
    %v455 = vunpack.c.h.s8.bf16 %v135
    %v456 = vunpack.c.h.s8.bf16 %v136
    %v457 = vunpack.c.h.s8.bf16 %v137
    %v458 = vunpack.c.h.s8.bf16 %v138
    %v459 = vunpack.c.h.s8.bf16 %v139
    %v460 = vunpack.c.l.s8.bf16 %v140
    %v461 = vunpack.c.l.s8.bf16 %v141
    %v462 = vunpack.c.l.s8.bf16 %v142
    %v463 = vunpack.c.l.s8.bf16 %v143
    %v464 = vunpack.c.l.s8.bf16 %v144
    %v465 = vunpack.c.l.s8.bf16 %v145
    %v466 = vunpack.c.l.s8.bf16 %v146
    %v467 = vunpack.c.l.s8.bf16 %v147
    %v468 = vunpack.c.h.s8.bf16 %v140
    %v469 = vunpack.c.h.s8.bf16 %v141
    %v470 = vunpack.c.h.s8.bf16 %v142
    %v471 = vunpack.c.h.s8.bf16 %v143
    %v472 = vunpack.c.h.s8.bf16 %v144
    %v473 = vunpack.c.h.s8.bf16 %v145
    %v474 = vunpack.c.h.s8.bf16 %v146
    %v475 = vunpack.c.h.s8.bf16 %v147
    %v476 = vunpack.c.l.s8.bf16 %v148
    %v477 = vunpack.c.l.s8.bf16 %v149
    %v478 = vunpack.c.l.s8.bf16 %v150
    %v479 = vunpack.c.l.s8.bf16 %v151
    %v480 = vunpack.c.l.s8.bf16 %v152
    %v481 = vunpack.c.l.s8.bf16 %v153
    %v482 = vunpack.c.l.s8.bf16 %v154
    %v483 = vunpack.c.l.s8.bf16 %v155
    %v484 = vunpack.c.h.s8.bf16 %v148
    %v485 = vunpack.c.h.s8.bf16 %v149
    %v486 = vunpack.c.h.s8.bf16 %v150
    %v487 = vunpack.c.h.s8.bf16 %v151
    %v488 = vunpack.c.h.s8.bf16 %v152
    %v489 = vunpack.c.h.s8.bf16 %v153
    %v490 = vunpack.c.h.s8.bf16 %v154
    %v491 = vunpack.c.h.s8.bf16 %v155
    %v492 = vunpack.c.l.s8.bf16 %v156
    %v493 = vunpack.c.l.s8.bf16 %v157
    %v494 = vunpack.c.l.s8.bf16 %v158
    %v495 = vunpack.c.l.s8.bf16 %v159
    %v496 = vunpack.c.l.s8.bf16 %v160
    %v497 = vunpack.c.l.s8.bf16 %v161
    %v498 = vunpack.c.l.s8.bf16 %v162
    %v499 = vunpack.c.l.s8.bf16 %v163
    %v500 = vunpack.c.h.s8.bf16 %v156
    %v501 = vunpack.c.h.s8.bf16 %v157
    %v502 = vunpack.c.h.s8.bf16 %v158
    %v503 = vunpack.c.h.s8.bf16 %v159
    %v504 = vunpack.c.h.s8.bf16 %v160
    %v505 = vunpack.c.h.s8.bf16 %v161
    %v506 = vunpack.c.h.s8.bf16 %v162
    %v507 = vunpack.c.h.s8.bf16 %v163
    %v508 = vunpack.c.l.s8.bf16 %v164
    %v509 = vunpack.c.l.s8.bf16 %v165
    %v510 = vunpack.c.l.s8.bf16 %v166
    %v511 = vunpack.c.l.s8.bf16 %v167
    %v512 = vunpack.c.l.s8.bf16 %v168
    %v513 = vunpack.c.l.s8.bf16 %v169
    %v514 = vunpack.c.l.s8.bf16 %v170
    %v515 = vunpack.c.l.s8.bf16 %v171
    %v516 = vunpack.c.h.s8.bf16 %v164
    %v517 = vunpack.c.h.s8.bf16 %v165
    %v518 = vunpack.c.h.s8.bf16 %v166
    %v519 = vunpack.c.h.s8.bf16 %v167
    %v520 = vunpack.c.h.s8.bf16 %v168
    %v521 = vunpack.c.h.s8.bf16 %v169
    %v522 = vunpack.c.h.s8.bf16 %v170
    %v523 = vunpack.c.h.s8.bf16 %v171
    %v524 = vunpack.c.l.s8.bf16 %v172
    %v525 = vunpack.c.l.s8.bf16 %v173
    %v526 = vunpack.c.l.s8.bf16 %v174
    %v527 = vunpack.c.l.s8.bf16 %v175
    %v528 = vunpack.c.l.s8.bf16 %v176
    %v529 = vunpack.c.l.s8.bf16 %v177
    %v530 = vunpack.c.l.s8.bf16 %v178
    %v531 = vunpack.c.l.s8.bf16 %v179
    %v532 = vunpack.c.h.s8.bf16 %v172
    %v533 = vunpack.c.h.s8.bf16 %v173
    %v534 = vunpack.c.h.s8.bf16 %v174
    %v535 = vunpack.c.h.s8.bf16 %v175
    %v536 = vunpack.c.h.s8.bf16 %v176
    %v537 = vunpack.c.h.s8.bf16 %v177
    %v538 = vunpack.c.h.s8.bf16 %v178
    %v539 = vunpack.c.h.s8.bf16 %v179
    %v540 = vunpack.c.l.s8.bf16 %v180
    %v541 = vunpack.c.l.s8.bf16 %v181
    %v542 = vunpack.c.l.s8.bf16 %v182
    %v543 = vunpack.c.l.s8.bf16 %v183
    %v544 = vunpack.c.l.s8.bf16 %v184
    %v545 = vunpack.c.l.s8.bf16 %v185
    %v546 = vunpack.c.l.s8.bf16 %v186
    %v547 = vunpack.c.l.s8.bf16 %v187
    %v548 = vunpack.c.h.s8.bf16 %v180
    %v549 = vunpack.c.h.s8.bf16 %v181
    %v550 = vunpack.c.h.s8.bf16 %v182
    %v551 = vunpack.c.h.s8.bf16 %v183
    %v552 = vunpack.c.h.s8.bf16 %v184
    %v553 = vunpack.c.h.s8.bf16 %v185
    %v554 = vunpack.c.h.s8.bf16 %v186
    %v555 = vunpack.c.h.s8.bf16 %v187
    %v556 = vunpack.c.l.s8.bf16 %v188
    %v557 = vunpack.c.l.s8.bf16 %v189
    %v558 = vunpack.c.l.s8.bf16 %v190
    %v559 = vunpack.c.l.s8.bf16 %v191
    %v560 = vunpack.c.l.s8.bf16 %v192
    %v561 = vunpack.c.l.s8.bf16 %v193
    %v562 = vunpack.c.l.s8.bf16 %v194
    %v563 = vunpack.c.l.s8.bf16 %v195
    %v564 = vunpack.c.h.s8.bf16 %v188
    %v565 = vunpack.c.h.s8.bf16 %v189
    %v566 = vunpack.c.h.s8.bf16 %v190
    %v567 = vunpack.c.h.s8.bf16 %v191
    %v568 = vunpack.c.h.s8.bf16 %v192
    %v569 = vunpack.c.h.s8.bf16 %v193
    %v570 = vunpack.c.h.s8.bf16 %v194
    %v571 = vunpack.c.h.s8.bf16 %v195
    %v572 = vunpack.c.l.s8.bf16 %v196
    %v573 = vunpack.c.l.s8.bf16 %v197
    %v574 = vunpack.c.l.s8.bf16 %v198
    %v575 = vunpack.c.l.s8.bf16 %v199
    %v576 = vunpack.c.l.s8.bf16 %v200
    %v577 = vunpack.c.l.s8.bf16 %v201
    %v578 = vunpack.c.l.s8.bf16 %v202
    %v579 = vunpack.c.l.s8.bf16 %v203
    %v580 = vunpack.c.h.s8.bf16 %v196
    %v581 = vunpack.c.h.s8.bf16 %v197
    %v582 = vunpack.c.h.s8.bf16 %v198
    %v583 = vunpack.c.h.s8.bf16 %v199
    %v584 = vunpack.c.h.s8.bf16 %v200
    %v585 = vunpack.c.h.s8.bf16 %v201
    %v586 = vunpack.c.h.s8.bf16 %v202
    %v587 = vunpack.c.h.s8.bf16 %v203
    %v588 = vunpack.c.l.s8.bf16 %v204
    %v589 = vunpack.c.l.s8.bf16 %v205
    %v590 = vunpack.c.l.s8.bf16 %v206
    %v591 = vunpack.c.l.s8.bf16 %v207
    %v592 = vunpack.c.l.s8.bf16 %v208
    %v593 = vunpack.c.l.s8.bf16 %v209
    %v594 = vunpack.c.l.s8.bf16 %v210
    %v595 = vunpack.c.l.s8.bf16 %v211
    %v596 = vunpack.c.h.s8.bf16 %v204
    %v597 = vunpack.c.h.s8.bf16 %v205
    %v598 = vunpack.c.h.s8.bf16 %v206
    %v599 = vunpack.c.h.s8.bf16 %v207
    %v600 = vunpack.c.h.s8.bf16 %v208
    %v601 = vunpack.c.h.s8.bf16 %v209
    %v602 = vunpack.c.h.s8.bf16 %v210
    %v603 = vunpack.c.h.s8.bf16 %v211
    %v604 = vunpack.c.l.s8.bf16 %v212
    %v605 = vunpack.c.l.s8.bf16 %v213
    %v606 = vunpack.c.l.s8.bf16 %v214
    %v607 = vunpack.c.l.s8.bf16 %v215
    %v608 = vunpack.c.l.s8.bf16 %v216
    %v609 = vunpack.c.l.s8.bf16 %v217
    %v610 = vunpack.c.l.s8.bf16 %v218
    %v611 = vunpack.c.l.s8.bf16 %v219
    %v612 = vunpack.c.h.s8.bf16 %v212
    %v613 = vunpack.c.h.s8.bf16 %v213
    %v614 = vunpack.c.h.s8.bf16 %v214
    %v615 = vunpack.c.h.s8.bf16 %v215
    %v616 = vunpack.c.h.s8.bf16 %v216
    %v617 = vunpack.c.h.s8.bf16 %v217
    %v618 = vunpack.c.h.s8.bf16 %v218
    %v619 = vunpack.c.h.s8.bf16 %v219
    %v620 = vunpack.c.l.s8.bf16 %v220
    %v621 = vunpack.c.l.s8.bf16 %v221
    %v622 = vunpack.c.l.s8.bf16 %v222
    %v623 = vunpack.c.l.s8.bf16 %v223
    %v624 = vunpack.c.l.s8.bf16 %v224
    %v625 = vunpack.c.l.s8.bf16 %v225
    %v626 = vunpack.c.l.s8.bf16 %v226
    %v627 = vunpack.c.l.s8.bf16 %v227
    %v628 = vunpack.c.h.s8.bf16 %v220
    %v629 = vunpack.c.h.s8.bf16 %v221
    %v630 = vunpack.c.h.s8.bf16 %v222
    %v631 = vunpack.c.h.s8.bf16 %v223
    %v632 = vunpack.c.h.s8.bf16 %v224
    %v633 = vunpack.c.h.s8.bf16 %v225
    %v634 = vunpack.c.h.s8.bf16 %v226
    %v635 = vunpack.c.h.s8.bf16 %v227
    %v636 = vunpack.c.l.s8.bf16 %v228
    %v637 = vunpack.c.l.s8.bf16 %v229
    %v638 = vunpack.c.l.s8.bf16 %v230
    %v639 = vunpack.c.l.s8.bf16 %v231
    %v640 = vunpack.c.l.s8.bf16 %v232
    %v641 = vunpack.c.l.s8.bf16 %v233
    %v642 = vunpack.c.l.s8.bf16 %v234
    %v643 = vunpack.c.l.s8.bf16 %v235
    %v644 = vunpack.c.h.s8.bf16 %v228
    %v645 = vunpack.c.h.s8.bf16 %v229
    %v646 = vunpack.c.h.s8.bf16 %v230
    %v647 = vunpack.c.h.s8.bf16 %v231
    %v648 = vunpack.c.h.s8.bf16 %v232
    %v649 = vunpack.c.h.s8.bf16 %v233
    %v650 = vunpack.c.h.s8.bf16 %v234
    %v651 = vunpack.c.h.s8.bf16 %v235
    %v652 = vunpack.c.l.s8.bf16 %v236
    %v653 = vunpack.c.l.s8.bf16 %v237
    %v654 = vunpack.c.l.s8.bf16 %v238
    %v655 = vunpack.c.l.s8.bf16 %v239
    %v656 = vunpack.c.l.s8.bf16 %v240
    %v657 = vunpack.c.l.s8.bf16 %v241
    %v658 = vunpack.c.l.s8.bf16 %v242
    %v659 = vunpack.c.l.s8.bf16 %v243
    %v660 = vunpack.c.h.s8.bf16 %v236
    %v661 = vunpack.c.h.s8.bf16 %v237
    %v662 = vunpack.c.h.s8.bf16 %v238
    %v663 = vunpack.c.h.s8.bf16 %v239
    %v664 = vunpack.c.h.s8.bf16 %v240
    %v665 = vunpack.c.h.s8.bf16 %v241
    %v666 = vunpack.c.h.s8.bf16 %v242
    %v667 = vunpack.c.h.s8.bf16 %v243
    %v668 = vunpack.c.l.s8.bf16 %v244
    %v669 = vunpack.c.l.s8.bf16 %v245
    %v670 = vunpack.c.l.s8.bf16 %v246
    %v671 = vunpack.c.l.s8.bf16 %v247
    %v672 = vunpack.c.l.s8.bf16 %v248
    %v673 = vunpack.c.l.s8.bf16 %v249
    %v674 = vunpack.c.l.s8.bf16 %v250
    %v675 = vunpack.c.l.s8.bf16 %v251
    %v676 = vunpack.c.h.s8.bf16 %v244
    %v677 = vunpack.c.h.s8.bf16 %v245
    %v678 = vunpack.c.h.s8.bf16 %v246
    %v679 = vunpack.c.h.s8.bf16 %v247
    %v680 = vunpack.c.h.s8.bf16 %v248
    %v681 = vunpack.c.h.s8.bf16 %v249
    %v682 = vunpack.c.h.s8.bf16 %v250
    %v683 = vunpack.c.h.s8.bf16 %v251
    %v684 = vunpack.c.l.s8.bf16 %v252
    %v685 = vunpack.c.l.s8.bf16 %v253
    %v686 = vunpack.c.l.s8.bf16 %v254
    %v687 = vunpack.c.l.s8.bf16 %v255
    %v688 = vunpack.c.l.s8.bf16 %v256
    %v689 = vunpack.c.l.s8.bf16 %v257
    %v690 = vunpack.c.l.s8.bf16 %v258
    %v691 = vunpack.c.l.s8.bf16 %v259
    %v692 = vunpack.c.h.s8.bf16 %v252
    %v693 = vunpack.c.h.s8.bf16 %v253
    %v694 = vunpack.c.h.s8.bf16 %v254
    %v695 = vunpack.c.h.s8.bf16 %v255
    %v696 = vunpack.c.h.s8.bf16 %v256
    %v697 = vunpack.c.h.s8.bf16 %v257
    %v698 = vunpack.c.h.s8.bf16 %v258
    %v699 = vunpack.c.h.s8.bf16 %v259
    %v700 = vunpack.c.l.s8.bf16 %v260
    %v701 = vunpack.c.l.s8.bf16 %v261
    %v702 = vunpack.c.l.s8.bf16 %v262
    %v703 = vunpack.c.l.s8.bf16 %v263
    %v704 = vunpack.c.l.s8.bf16 %v264
    %v705 = vunpack.c.l.s8.bf16 %v265
    %v706 = vunpack.c.l.s8.bf16 %v266
    %v707 = vunpack.c.l.s8.bf16 %v267
    %v708 = vunpack.c.h.s8.bf16 %v260
    %v709 = vunpack.c.h.s8.bf16 %v261
    %v710 = vunpack.c.h.s8.bf16 %v262
    %v711 = vunpack.c.h.s8.bf16 %v263
    %v712 = vunpack.c.h.s8.bf16 %v264
    %v713 = vunpack.c.h.s8.bf16 %v265
    %v714 = vunpack.c.h.s8.bf16 %v266
    %v715 = vunpack.c.h.s8.bf16 %v267
    %v716 = vunpack.c.l.s8.bf16 %v268
    %v717 = vunpack.c.l.s8.bf16 %v269
    %v718 = vunpack.c.l.s8.bf16 %v270
    %v719 = vunpack.c.l.s8.bf16 %v271
    %v720 = vunpack.c.l.s8.bf16 %v272
    %v721 = vunpack.c.l.s8.bf16 %v273
    %v722 = vunpack.c.l.s8.bf16 %v274
    %v723 = vunpack.c.l.s8.bf16 %v275
    %v724 = vunpack.c.h.s8.bf16 %v268
    %v725 = vunpack.c.h.s8.bf16 %v269
    %v726 = vunpack.c.h.s8.bf16 %v270
    %v727 = vunpack.c.h.s8.bf16 %v271
    %v728 = vunpack.c.h.s8.bf16 %v272
    %v729 = vunpack.c.h.s8.bf16 %v273
    %v730 = vunpack.c.h.s8.bf16 %v274
    %v731 = vunpack.c.h.s8.bf16 %v275
    %v732 = vunpack.c.l.s8.bf16 %v276
    %v733 = vunpack.c.l.s8.bf16 %v277
    %v734 = vunpack.c.l.s8.bf16 %v278
    %v735 = vunpack.c.l.s8.bf16 %v279
    %v736 = vunpack.c.l.s8.bf16 %v280
    %v737 = vunpack.c.l.s8.bf16 %v281
    %v738 = vunpack.c.l.s8.bf16 %v282
    %v739 = vunpack.c.l.s8.bf16 %v283
    %v740 = vunpack.c.h.s8.bf16 %v276
    %v741 = vunpack.c.h.s8.bf16 %v277
    %v742 = vunpack.c.h.s8.bf16 %v278
    %v743 = vunpack.c.h.s8.bf16 %v279
    %v744 = vunpack.c.h.s8.bf16 %v280
    %v745 = vunpack.c.h.s8.bf16 %v281
    %v746 = vunpack.c.h.s8.bf16 %v282
    %v747 = vunpack.c.h.s8.bf16 %v283
    %v748 = vunpack.c.l.s8.bf16 %v284
    %v749 = vunpack.c.l.s8.bf16 %v285
    %v750 = vunpack.c.l.s8.bf16 %v286
    %v751 = vunpack.c.l.s8.bf16 %v287
    %v752 = vunpack.c.l.s8.bf16 %v288
    %v753 = vunpack.c.l.s8.bf16 %v289
    %v754 = vunpack.c.l.s8.bf16 %v290
    %v755 = vunpack.c.l.s8.bf16 %v291
    %v756 = vunpack.c.h.s8.bf16 %v284
    %v757 = vunpack.c.h.s8.bf16 %v285
    %v758 = vunpack.c.h.s8.bf16 %v286
    %v759 = vunpack.c.h.s8.bf16 %v287
    %v760 = vunpack.c.h.s8.bf16 %v288
    %v761 = vunpack.c.h.s8.bf16 %v289
    %v762 = vunpack.c.h.s8.bf16 %v290
    %v763 = vunpack.c.h.s8.bf16 %v291
    %v764 = vunpack.c.l.s8.bf16 %v292
    %v765 = vunpack.c.l.s8.bf16 %v293
    %v766 = vunpack.c.l.s8.bf16 %v294
    %v767 = vunpack.c.l.s8.bf16 %v295
    %v768 = vunpack.c.l.s8.bf16 %v296
    %v769 = vunpack.c.l.s8.bf16 %v297
    %v770 = vunpack.c.l.s8.bf16 %v298
    %v771 = vunpack.c.l.s8.bf16 %v299
    %v772 = vunpack.c.h.s8.bf16 %v292
    %v773 = vunpack.c.h.s8.bf16 %v293
    %v774 = vunpack.c.h.s8.bf16 %v294
    %v775 = vunpack.c.h.s8.bf16 %v295
    %v776 = vunpack.c.h.s8.bf16 %v296
    %v777 = vunpack.c.h.s8.bf16 %v297
    %v778 = vunpack.c.h.s8.bf16 %v298
    %v779 = vunpack.c.h.s8.bf16 %v299
    %v780 = vunpack.c.l.s8.bf16 %v300
    %v781 = vunpack.c.l.s8.bf16 %v301
    %v782 = vunpack.c.l.s8.bf16 %v302
    %v783 = vunpack.c.l.s8.bf16 %v303
    %v784 = vunpack.c.l.s8.bf16 %v304
    %v785 = vunpack.c.l.s8.bf16 %v305
    %v786 = vunpack.c.l.s8.bf16 %v306
    %v787 = vunpack.c.l.s8.bf16 %v307
    %v788 = vunpack.c.h.s8.bf16 %v300
    %v789 = vunpack.c.h.s8.bf16 %v301
    %v790 = vunpack.c.h.s8.bf16 %v302
    %v791 = vunpack.c.h.s8.bf16 %v303
    %v792 = vunpack.c.h.s8.bf16 %v304
    %v793 = vunpack.c.h.s8.bf16 %v305
    %v794 = vunpack.c.h.s8.bf16 %v306
    %v795 = vunpack.c.h.s8.bf16 %v307
    %v796 = vunpack.c.l.s8.bf16 %v308
    %v797 = vunpack.c.l.s8.bf16 %v309
    %v798 = vunpack.c.l.s8.bf16 %v310
    %v799 = vunpack.c.l.s8.bf16 %v311
    %v800 = vunpack.c.l.s8.bf16 %v312
    %v801 = vunpack.c.l.s8.bf16 %v313
    %v802 = vunpack.c.l.s8.bf16 %v314
    %v803 = vunpack.c.l.s8.bf16 %v315
    %v804 = vunpack.c.h.s8.bf16 %v308
    %v805 = vunpack.c.h.s8.bf16 %v309
    %v806 = vunpack.c.h.s8.bf16 %v310
    %v807 = vunpack.c.h.s8.bf16 %v311
    %v808 = vunpack.c.h.s8.bf16 %v312
    %v809 = vunpack.c.h.s8.bf16 %v313
    %v810 = vunpack.c.h.s8.bf16 %v314
    %v811 = vunpack.c.h.s8.bf16 %v315
    %v812 = vunpack.c.l.s8.bf16 %v316
    %v813 = vunpack.c.l.s8.bf16 %v317
    %v814 = vunpack.c.l.s8.bf16 %v318
    %v815 = vunpack.c.l.s8.bf16 %v319
    %v816 = vunpack.c.l.s8.bf16 %v320
    %v817 = vunpack.c.l.s8.bf16 %v321
    %v818 = vunpack.c.l.s8.bf16 %v322
    %v819 = vunpack.c.l.s8.bf16 %v323
    %v820 = vunpack.c.h.s8.bf16 %v316
    %v821 = vunpack.c.h.s8.bf16 %v317
    %v822 = vunpack.c.h.s8.bf16 %v318
    %v823 = vunpack.c.h.s8.bf16 %v319
    %v824 = vunpack.c.h.s8.bf16 %v320
    %v825 = vunpack.c.h.s8.bf16 %v321
    %v826 = vunpack.c.h.s8.bf16 %v322
    %v827 = vunpack.c.h.s8.bf16 %v323
    %v828 = vunpack.c.l.s8.bf16 %v324
    %v829 = vunpack.c.l.s8.bf16 %v325
    %v830 = vunpack.c.l.s8.bf16 %v326
    %v831 = vunpack.c.l.s8.bf16 %v327
    %v832 = vunpack.c.l.s8.bf16 %v328
    %v833 = vunpack.c.l.s8.bf16 %v329
    %v834 = vunpack.c.l.s8.bf16 %v330
    %v835 = vunpack.c.l.s8.bf16 %v331
    %v836 = vunpack.c.h.s8.bf16 %v324
    %v837 = vunpack.c.h.s8.bf16 %v325
    %v838 = vunpack.c.h.s8.bf16 %v326
    %v839 = vunpack.c.h.s8.bf16 %v327
    %v840 = vunpack.c.h.s8.bf16 %v328
    %v841 = vunpack.c.h.s8.bf16 %v329
    %v842 = vunpack.c.h.s8.bf16 %v330
    %v843 = vunpack.c.h.s8.bf16 %v331
    %v848 = vunpack.c.l.b16 %v72
    %v849 = vunpack.c.h.b16 %v72
    %v850 = vunpack.c.l.b16 %v73
    %v851 = vunpack.c.h.b16 %v73
    %v852 = vunpack.c.l.b16 %v74
    %v853 = vunpack.c.h.b16 %v74
    %v854 = vunpack.c.l.b16 %v75
    %v855 = vunpack.c.h.b16 %v75
    %v856 = vpack.c.b16 %v848, %v848
    %v857 = vpack.c.b16 %v849, %v849
    %v858 = vpack.c.b16 %v850, %v850
    %v859 = vpack.c.b16 %v851, %v851
    %v860 = vpack.c.b16 %v852, %v852
    %v861 = vpack.c.b16 %v853, %v853
    %v862 = vpack.c.b16 %v854, %v854
    %v863 = vpack.c.b16 %v855, %v855
    %872 = vmatprep.subr.bf16.mxu0 %v389
    %873 = vmatpush1.bf16.msra.mxu0 %v388
    %874 = vmatprep.subr.bf16.mxu0 %v381
    %875 = vmatpush1.bf16.msra.mxu0 %v380
    %876 = vmatprep.subr.bf16.mxu0 %v373
    %877 = vmatpush1.bf16.msra.mxu0 %v372
    %878 = vmatprep.subr.bf16.mxu0 %v365
    %879 = vmatpush1.bf16.msra.mxu0 %v364
    %880 = vmatprep.subr.bf16.mxu0 %v357
    %881 = vmatpush1.bf16.msra.mxu0 %v356
    %882 = vmatprep.subr.bf16.mxu0 %v349
    %883 = vmatpush1.bf16.msra.mxu0 %v348
    %884 = vmatprep.subr.bf16.mxu0 %v341
    %885 = vmatpush1.bf16.msra.mxu0 %v340
    %886 = vmatprep.subr.bf16.mxu0 %v333
    %887 = vmatpush1.bf16.msra.mxu0 %v332
    %888 = vmatprep.subr.bf16.mxu0 %v453
    %889 = vmatpush2.bf16.msra.mxu0 %v452
    %890 = vmatprep.subr.bf16.mxu0 %v445
    %891 = vmatpush2.bf16.msra.mxu0 %v444
    %892 = vmatprep.subr.bf16.mxu0 %v437
    %893 = vmatpush2.bf16.msra.mxu0 %v436
    %894 = vmatprep.subr.bf16.mxu0 %v429
    %895 = vmatpush2.bf16.msra.mxu0 %v428
    %896 = vmatprep.subr.bf16.mxu0 %v421
    %897 = vmatpush2.bf16.msra.mxu0 %v420
    %898 = vmatprep.subr.bf16.mxu0 %v413
    %899 = vmatpush2.bf16.msra.mxu0 %v412
    %900 = vmatprep.subr.bf16.mxu0 %v405
    %901 = vmatpush2.bf16.msra.mxu0 %v404
    %902 = vmatprep.subr.bf16.mxu0 %v397
    %903 = vmatpush2.bf16.msra.mxu0 %v396
    %904 = vmatprep.mubr.bf16.mxu0 %v857
    %905 = vmatmul.mubr.bf16.gmra.mxu0 %v856
    %v906 = vpop.f32.mrf.mxu0
    %v907 = vadd.f32 0.0, %v906
    %v908 = vpop.f32.mrf.mxu0
    %v909 = vadd.f32 0.0, %v908
    %v910 = vpop.f32.mrf.mxu0
    %v911 = vpop.f32.mrf.mxu0
    %912 = vdwg.mxu0
    %913 = vmatprep.subr.bf16.mxu0 %v517
    %914 = vmatpush1.bf16.msra.mxu0 %v516
    %915 = vmatprep.subr.bf16.mxu0 %v509
    %916 = vmatpush1.bf16.msra.mxu0 %v508
    %917 = vmatprep.subr.bf16.mxu0 %v501
    %918 = vmatpush1.bf16.msra.mxu0 %v500
    %919 = vmatprep.subr.bf16.mxu0 %v493
    %920 = vmatpush1.bf16.msra.mxu0 %v492
    %921 = vmatprep.subr.bf16.mxu0 %v485
    %922 = vmatpush1.bf16.msra.mxu0 %v484
    %923 = vmatprep.subr.bf16.mxu0 %v477
    %924 = vmatpush1.bf16.msra.mxu0 %v476
    %925 = vmatprep.subr.bf16.mxu0 %v469
    %926 = vmatpush1.bf16.msra.mxu0 %v468
    %927 = vmatprep.subr.bf16.mxu0 %v461
    %928 = vmatpush1.bf16.msra.mxu0 %v460
    %929 = vmatprep.subr.bf16.mxu0 %v581
    %930 = vmatpush2.bf16.msra.mxu0 %v580
    %931 = vmatprep.subr.bf16.mxu0 %v573
    %932 = vmatpush2.bf16.msra.mxu0 %v572
    %933 = vmatprep.subr.bf16.mxu0 %v565
    %934 = vmatpush2.bf16.msra.mxu0 %v564
    %935 = vmatprep.subr.bf16.mxu0 %v557
    %936 = vmatpush2.bf16.msra.mxu0 %v556
    %937 = vmatprep.subr.bf16.mxu0 %v549
    %938 = vmatpush2.bf16.msra.mxu0 %v548
    %939 = vmatprep.subr.bf16.mxu0 %v541
    %940 = vmatpush2.bf16.msra.mxu0 %v540
    %941 = vmatprep.subr.bf16.mxu0 %v533
    %942 = vmatpush2.bf16.msra.mxu0 %v532
    %943 = vmatprep.subr.bf16.mxu0 %v525
    %944 = vmatpush2.bf16.msra.mxu0 %v524
    %945 = vmatprep.mubr.bf16.mxu0 %v859
    %946 = vmatmul.mubr.bf16.gmra.mxu0 %v858
    %v947 = vpop.f32.mrf.mxu0
    %v948 = vadd.f32 %v907, %v947
    %v949 = vpop.f32.mrf.mxu0
    %v950 = vadd.f32 %v909, %v949
    %v951 = vpop.f32.mrf.mxu0
    %v952 = vpop.f32.mrf.mxu0
    %953 = vdwg.mxu0
    %954 = vmatprep.subr.bf16.mxu0 %v645
    %955 = vmatpush1.bf16.msra.mxu0 %v644
    %956 = vmatprep.subr.bf16.mxu0 %v637
    %957 = vmatpush1.bf16.msra.mxu0 %v636
    %958 = vmatprep.subr.bf16.mxu0 %v629
    %959 = vmatpush1.bf16.msra.mxu0 %v628
    %960 = vmatprep.subr.bf16.mxu0 %v621
    %961 = vmatpush1.bf16.msra.mxu0 %v620
    %962 = vmatprep.subr.bf16.mxu0 %v613
    %963 = vmatpush1.bf16.msra.mxu0 %v612
    %964 = vmatprep.subr.bf16.mxu0 %v605
    %965 = vmatpush1.bf16.msra.mxu0 %v604
    %966 = vmatprep.subr.bf16.mxu0 %v597
    %967 = vmatpush1.bf16.msra.mxu0 %v596
    %968 = vmatprep.subr.bf16.mxu0 %v589
    %969 = vmatpush1.bf16.msra.mxu0 %v588
    %970 = vmatprep.subr.bf16.mxu0 %v709
    %971 = vmatpush2.bf16.msra.mxu0 %v708
    %972 = vmatprep.subr.bf16.mxu0 %v701
    %973 = vmatpush2.bf16.msra.mxu0 %v700
    %974 = vmatprep.subr.bf16.mxu0 %v693
    %975 = vmatpush2.bf16.msra.mxu0 %v692
    %976 = vmatprep.subr.bf16.mxu0 %v685
    %977 = vmatpush2.bf16.msra.mxu0 %v684
    %978 = vmatprep.subr.bf16.mxu0 %v677
    %979 = vmatpush2.bf16.msra.mxu0 %v676
    %980 = vmatprep.subr.bf16.mxu0 %v669
    %981 = vmatpush2.bf16.msra.mxu0 %v668
    %982 = vmatprep.subr.bf16.mxu0 %v661
    %983 = vmatpush2.bf16.msra.mxu0 %v660
    %984 = vmatprep.subr.bf16.mxu0 %v653
    %985 = vmatpush2.bf16.msra.mxu0 %v652
    %986 = vmatprep.mubr.bf16.mxu0 %v861
    %987 = vmatmul.mubr.bf16.gmra.mxu0 %v860
    %v988 = vpop.f32.mrf.mxu0
    %v989 = vadd.f32 %v948, %v988
    %v990 = vpop.f32.mrf.mxu0
    %v991 = vadd.f32 %v950, %v990
    %v992 = vpop.f32.mrf.mxu0
    %v993 = vpop.f32.mrf.mxu0
    %994 = vdwg.mxu0
    %995 = vmatprep.subr.bf16.mxu0 %v773
    %996 = vmatpush1.bf16.msra.mxu0 %v772
    %997 = vmatprep.subr.bf16.mxu0 %v765
    %998 = vmatpush1.bf16.msra.mxu0 %v764
    %999 = vmatprep.subr.bf16.mxu0 %v757
    %1000 = vmatpush1.bf16.msra.mxu0 %v756
    %1001 = vmatprep.subr.bf16.mxu0 %v749
    %1002 = vmatpush1.bf16.msra.mxu0 %v748
    %1003 = vmatprep.subr.bf16.mxu0 %v741
    %1004 = vmatpush1.bf16.msra.mxu0 %v740
    %1005 = vmatprep.subr.bf16.mxu0 %v733
    %1006 = vmatpush1.bf16.msra.mxu0 %v732
    %1007 = vmatprep.subr.bf16.mxu0 %v725
    %1008 = vmatpush1.bf16.msra.mxu0 %v724
    %1009 = vmatprep.subr.bf16.mxu0 %v717
    %1010 = vmatpush1.bf16.msra.mxu0 %v716
    %1011 = vmatprep.subr.bf16.mxu0 %v837
    %1012 = vmatpush2.bf16.msra.mxu0 %v836
    %1013 = vmatprep.subr.bf16.mxu0 %v829
    %1014 = vmatpush2.bf16.msra.mxu0 %v828
    %1015 = vmatprep.subr.bf16.mxu0 %v821
    %1016 = vmatpush2.bf16.msra.mxu0 %v820
    %1017 = vmatprep.subr.bf16.mxu0 %v813
    %1018 = vmatpush2.bf16.msra.mxu0 %v812
    %1019 = vmatprep.subr.bf16.mxu0 %v805
    %1020 = vmatpush2.bf16.msra.mxu0 %v804
    %1021 = vmatprep.subr.bf16.mxu0 %v797
    %1022 = vmatpush2.bf16.msra.mxu0 %v796
    %1023 = vmatprep.subr.bf16.mxu0 %v789
    %1024 = vmatpush2.bf16.msra.mxu0 %v788
    %1025 = vmatprep.subr.bf16.mxu0 %v781
    %1026 = vmatpush2.bf16.msra.mxu0 %v780
    %1027 = vmatprep.mubr.bf16.mxu0 %v863
    %1028 = vmatmul.mubr.bf16.gmra.mxu0 %v862
    %v1029 = vpop.f32.mrf.mxu0
    %v1030 = vadd.f32 %v989, %v1029
    %v1031 = vpop.f32.mrf.mxu0
    %v1032 = vadd.f32 %v991, %v1031
    %v1033 = vpop.f32.mrf.mxu0
    %v1034 = vpop.f32.mrf.mxu0
    %1035 = vdwg.mxu0
    %1036 = vmatprep.subr.bf16.mxu0 %v391
    %1037 = vmatpush1.bf16.msra.mxu0 %v390
    %1038 = vmatprep.subr.bf16.mxu0 %v383
    %1039 = vmatpush1.bf16.msra.mxu0 %v382
    %1040 = vmatprep.subr.bf16.mxu0 %v375
    %1041 = vmatpush1.bf16.msra.mxu0 %v374
    %1042 = vmatprep.subr.bf16.mxu0 %v367
    %1043 = vmatpush1.bf16.msra.mxu0 %v366
    %1044 = vmatprep.subr.bf16.mxu0 %v359
    %1045 = vmatpush1.bf16.msra.mxu0 %v358
    %1046 = vmatprep.subr.bf16.mxu0 %v351
    %1047 = vmatpush1.bf16.msra.mxu0 %v350
    %1048 = vmatprep.subr.bf16.mxu0 %v343
    %1049 = vmatpush1.bf16.msra.mxu0 %v342
    %1050 = vmatprep.subr.bf16.mxu0 %v335
    %1051 = vmatpush1.bf16.msra.mxu0 %v334
    %1052 = vmatprep.subr.bf16.mxu0 %v455
    %1053 = vmatpush2.bf16.msra.mxu0 %v454
    %1054 = vmatprep.subr.bf16.mxu0 %v447
    %1055 = vmatpush2.bf16.msra.mxu0 %v446
    %1056 = vmatprep.subr.bf16.mxu0 %v439
    %1057 = vmatpush2.bf16.msra.mxu0 %v438
    %1058 = vmatprep.subr.bf16.mxu0 %v431
    %1059 = vmatpush2.bf16.msra.mxu0 %v430
    %1060 = vmatprep.subr.bf16.mxu0 %v423
    %1061 = vmatpush2.bf16.msra.mxu0 %v422
    %1062 = vmatprep.subr.bf16.mxu0 %v415
    %1063 = vmatpush2.bf16.msra.mxu0 %v414
    %1064 = vmatprep.subr.bf16.mxu0 %v407
    %1065 = vmatpush2.bf16.msra.mxu0 %v406
    %1066 = vmatprep.subr.bf16.mxu0 %v399
    %1067 = vmatpush2.bf16.msra.mxu0 %v398
    %1068 = vmatprep.mubr.bf16.mxu0 %v857
    %1069 = vmatmul.mubr.bf16.gmra.mxu0 %v856
    %v1070 = vpop.f32.mrf.mxu0
    %v1071 = vadd.f32 0.0, %v1070
    %v1072 = vpop.f32.mrf.mxu0
    %v1073 = vadd.f32 0.0, %v1072
    %v1074 = vpop.f32.mrf.mxu0
    %v1075 = vpop.f32.mrf.mxu0
    %1076 = vdwg.mxu0
    %1077 = vmatprep.subr.bf16.mxu0 %v519
    %1078 = vmatpush1.bf16.msra.mxu0 %v518
    %1079 = vmatprep.subr.bf16.mxu0 %v511
    %1080 = vmatpush1.bf16.msra.mxu0 %v510
    %1081 = vmatprep.subr.bf16.mxu0 %v503
    %1082 = vmatpush1.bf16.msra.mxu0 %v502
    %1083 = vmatprep.subr.bf16.mxu0 %v495
    %1084 = vmatpush1.bf16.msra.mxu0 %v494
    %1085 = vmatprep.subr.bf16.mxu0 %v487
    %1086 = vmatpush1.bf16.msra.mxu0 %v486
    %1087 = vmatprep.subr.bf16.mxu0 %v479
    %1088 = vmatpush1.bf16.msra.mxu0 %v478
    %1089 = vmatprep.subr.bf16.mxu0 %v471
    %1090 = vmatpush1.bf16.msra.mxu0 %v470
    %1091 = vmatprep.subr.bf16.mxu0 %v463
    %1092 = vmatpush1.bf16.msra.mxu0 %v462
    %1093 = vmatprep.subr.bf16.mxu0 %v583
    %1094 = vmatpush2.bf16.msra.mxu0 %v582
    %1095 = vmatprep.subr.bf16.mxu0 %v575
    %1096 = vmatpush2.bf16.msra.mxu0 %v574
    %1097 = vmatprep.subr.bf16.mxu0 %v567
    %1098 = vmatpush2.bf16.msra.mxu0 %v566
    %1099 = vmatprep.subr.bf16.mxu0 %v559
    %1100 = vmatpush2.bf16.msra.mxu0 %v558
    %1101 = vmatprep.subr.bf16.mxu0 %v551
    %1102 = vmatpush2.bf16.msra.mxu0 %v550
    %1103 = vmatprep.subr.bf16.mxu0 %v543
    %1104 = vmatpush2.bf16.msra.mxu0 %v542
    %1105 = vmatprep.subr.bf16.mxu0 %v535
    %1106 = vmatpush2.bf16.msra.mxu0 %v534
    %1107 = vmatprep.subr.bf16.mxu0 %v527
    %1108 = vmatpush2.bf16.msra.mxu0 %v526
    %1109 = vmatprep.mubr.bf16.mxu0 %v859
    %1110 = vmatmul.mubr.bf16.gmra.mxu0 %v858
    %v1111 = vpop.f32.mrf.mxu0
    %v1112 = vadd.f32 %v1071, %v1111
    %v1113 = vpop.f32.mrf.mxu0
    %v1114 = vadd.f32 %v1073, %v1113
    %v1115 = vpop.f32.mrf.mxu0
    %v1116 = vpop.f32.mrf.mxu0
    %1117 = vdwg.mxu0
    %1118 = vmatprep.subr.bf16.mxu0 %v647
    %1119 = vmatpush1.bf16.msra.mxu0 %v646
    %1120 = vmatprep.subr.bf16.mxu0 %v639
    %1121 = vmatpush1.bf16.msra.mxu0 %v638
    %1122 = vmatprep.subr.bf16.mxu0 %v631
    %1123 = vmatpush1.bf16.msra.mxu0 %v630
    %1124 = vmatprep.subr.bf16.mxu0 %v623
    %1125 = vmatpush1.bf16.msra.mxu0 %v622
    %1126 = vmatprep.subr.bf16.mxu0 %v615
    %1127 = vmatpush1.bf16.msra.mxu0 %v614
    %1128 = vmatprep.subr.bf16.mxu0 %v607
    %1129 = vmatpush1.bf16.msra.mxu0 %v606
    %1130 = vmatprep.subr.bf16.mxu0 %v599
    %1131 = vmatpush1.bf16.msra.mxu0 %v598
    %1132 = vmatprep.subr.bf16.mxu0 %v591
    %1133 = vmatpush1.bf16.msra.mxu0 %v590
    %1134 = vmatprep.subr.bf16.mxu0 %v711
    %1135 = vmatpush2.bf16.msra.mxu0 %v710
    %1136 = vmatprep.subr.bf16.mxu0 %v703
    %1137 = vmatpush2.bf16.msra.mxu0 %v702
    %1138 = vmatprep.subr.bf16.mxu0 %v695
    %1139 = vmatpush2.bf16.msra.mxu0 %v694
    %1140 = vmatprep.subr.bf16.mxu0 %v687
    %1141 = vmatpush2.bf16.msra.mxu0 %v686
    %1142 = vmatprep.subr.bf16.mxu0 %v679
    %1143 = vmatpush2.bf16.msra.mxu0 %v678
    %1144 = vmatprep.subr.bf16.mxu0 %v671
    %1145 = vmatpush2.bf16.msra.mxu0 %v670
    %1146 = vmatprep.subr.bf16.mxu0 %v663
    %1147 = vmatpush2.bf16.msra.mxu0 %v662
    %1148 = vmatprep.subr.bf16.mxu0 %v655
    %1149 = vmatpush2.bf16.msra.mxu0 %v654
    %1150 = vmatprep.mubr.bf16.mxu0 %v861
    %1151 = vmatmul.mubr.bf16.gmra.mxu0 %v860
    %v1152 = vpop.f32.mrf.mxu0
    %v1153 = vadd.f32 %v1112, %v1152
    %v1154 = vpop.f32.mrf.mxu0
    %v1155 = vadd.f32 %v1114, %v1154
    %v1156 = vpop.f32.mrf.mxu0
    %v1157 = vpop.f32.mrf.mxu0
    %1158 = vdwg.mxu0
    %1159 = vmatprep.subr.bf16.mxu0 %v775
    %1160 = vmatpush1.bf16.msra.mxu0 %v774
    %1161 = vmatprep.subr.bf16.mxu0 %v767
    %1162 = vmatpush1.bf16.msra.mxu0 %v766
    %1163 = vmatprep.subr.bf16.mxu0 %v759
    %1164 = vmatpush1.bf16.msra.mxu0 %v758
    %1165 = vmatprep.subr.bf16.mxu0 %v751
    %1166 = vmatpush1.bf16.msra.mxu0 %v750
    %1167 = vmatprep.subr.bf16.mxu0 %v743
    %1168 = vmatpush1.bf16.msra.mxu0 %v742
    %1169 = vmatprep.subr.bf16.mxu0 %v735
    %1170 = vmatpush1.bf16.msra.mxu0 %v734
    %1171 = vmatprep.subr.bf16.mxu0 %v727
    %1172 = vmatpush1.bf16.msra.mxu0 %v726
    %1173 = vmatprep.subr.bf16.mxu0 %v719
    %1174 = vmatpush1.bf16.msra.mxu0 %v718
    %1175 = vmatprep.subr.bf16.mxu0 %v839
    %1176 = vmatpush2.bf16.msra.mxu0 %v838
    %1177 = vmatprep.subr.bf16.mxu0 %v831
    %1178 = vmatpush2.bf16.msra.mxu0 %v830
    %1179 = vmatprep.subr.bf16.mxu0 %v823
    %1180 = vmatpush2.bf16.msra.mxu0 %v822
    %1181 = vmatprep.subr.bf16.mxu0 %v815
    %1182 = vmatpush2.bf16.msra.mxu0 %v814
    %1183 = vmatprep.subr.bf16.mxu0 %v807
    %1184 = vmatpush2.bf16.msra.mxu0 %v806
    %1185 = vmatprep.subr.bf16.mxu0 %v799
    %1186 = vmatpush2.bf16.msra.mxu0 %v798
    %1187 = vmatprep.subr.bf16.mxu0 %v791
    %1188 = vmatpush2.bf16.msra.mxu0 %v790
    %1189 = vmatprep.subr.bf16.mxu0 %v783
    %1190 = vmatpush2.bf16.msra.mxu0 %v782
    %1191 = vmatprep.mubr.bf16.mxu0 %v863
    %1192 = vmatmul.mubr.bf16.gmra.mxu0 %v862
    %v1193 = vpop.f32.mrf.mxu0
    %v1194 = vadd.f32 %v1153, %v1193
    %v1195 = vpop.f32.mrf.mxu0
    %v1196 = vadd.f32 %v1155, %v1195
    %v1197 = vpop.f32.mrf.mxu0
    %v1198 = vpop.f32.mrf.mxu0
    %1199 = vdwg.mxu0
    %1200 = vmatprep.subr.bf16.mxu0 %v393
    %1201 = vmatpush1.bf16.msra.mxu0 %v392
    %1202 = vmatprep.subr.bf16.mxu0 %v385
    %1203 = vmatpush1.bf16.msra.mxu0 %v384
    %1204 = vmatprep.subr.bf16.mxu0 %v377
    %1205 = vmatpush1.bf16.msra.mxu0 %v376
    %1206 = vmatprep.subr.bf16.mxu0 %v369
    %1207 = vmatpush1.bf16.msra.mxu0 %v368
    %1208 = vmatprep.subr.bf16.mxu0 %v361
    %1209 = vmatpush1.bf16.msra.mxu0 %v360
    %1210 = vmatprep.subr.bf16.mxu0 %v353
    %1211 = vmatpush1.bf16.msra.mxu0 %v352
    %1212 = vmatprep.subr.bf16.mxu0 %v345
    %1213 = vmatpush1.bf16.msra.mxu0 %v344
    %1214 = vmatprep.subr.bf16.mxu0 %v337
    %1215 = vmatpush1.bf16.msra.mxu0 %v336
    %1216 = vmatprep.subr.bf16.mxu0 %v457
    %1217 = vmatpush2.bf16.msra.mxu0 %v456
    %1218 = vmatprep.subr.bf16.mxu0 %v449
    %1219 = vmatpush2.bf16.msra.mxu0 %v448
    %1220 = vmatprep.subr.bf16.mxu0 %v441
    %1221 = vmatpush2.bf16.msra.mxu0 %v440
    %1222 = vmatprep.subr.bf16.mxu0 %v433
    %1223 = vmatpush2.bf16.msra.mxu0 %v432
    %1224 = vmatprep.subr.bf16.mxu0 %v425
    %1225 = vmatpush2.bf16.msra.mxu0 %v424
    %1226 = vmatprep.subr.bf16.mxu0 %v417
    %1227 = vmatpush2.bf16.msra.mxu0 %v416
    %1228 = vmatprep.subr.bf16.mxu0 %v409
    %1229 = vmatpush2.bf16.msra.mxu0 %v408
    %1230 = vmatprep.subr.bf16.mxu0 %v401
    %1231 = vmatpush2.bf16.msra.mxu0 %v400
    %1232 = vmatprep.mubr.bf16.mxu0 %v857
    %1233 = vmatmul.mubr.bf16.gmra.mxu0 %v856
    %v1234 = vpop.f32.mrf.mxu0
    %v1235 = vadd.f32 0.0, %v1234
    %v1236 = vpop.f32.mrf.mxu0
    %v1237 = vadd.f32 0.0, %v1236
    %v1238 = vpop.f32.mrf.mxu0
    %v1239 = vpop.f32.mrf.mxu0
    %1240 = vdwg.mxu0
    %1241 = vmatprep.subr.bf16.mxu0 %v521
    %1242 = vmatpush1.bf16.msra.mxu0 %v520
    %1243 = vmatprep.subr.bf16.mxu0 %v513
    %1244 = vmatpush1.bf16.msra.mxu0 %v512
    %1245 = vmatprep.subr.bf16.mxu0 %v505
    %1246 = vmatpush1.bf16.msra.mxu0 %v504
    %1247 = vmatprep.subr.bf16.mxu0 %v497
    %1248 = vmatpush1.bf16.msra.mxu0 %v496
    %1249 = vmatprep.subr.bf16.mxu0 %v489
    %1250 = vmatpush1.bf16.msra.mxu0 %v488
    %1251 = vmatprep.subr.bf16.mxu0 %v481
    %1252 = vmatpush1.bf16.msra.mxu0 %v480
    %1253 = vmatprep.subr.bf16.mxu0 %v473
    %1254 = vmatpush1.bf16.msra.mxu0 %v472
    %1255 = vmatprep.subr.bf16.mxu0 %v465
    %1256 = vmatpush1.bf16.msra.mxu0 %v464
    %1257 = vmatprep.subr.bf16.mxu0 %v585
    %1258 = vmatpush2.bf16.msra.mxu0 %v584
    %1259 = vmatprep.subr.bf16.mxu0 %v577
    %1260 = vmatpush2.bf16.msra.mxu0 %v576
    %1261 = vmatprep.subr.bf16.mxu0 %v569
    %1262 = vmatpush2.bf16.msra.mxu0 %v568
    %1263 = vmatprep.subr.bf16.mxu0 %v561
    %1264 = vmatpush2.bf16.msra.mxu0 %v560
    %1265 = vmatprep.subr.bf16.mxu0 %v553
    %1266 = vmatpush2.bf16.msra.mxu0 %v552
    %1267 = vmatprep.subr.bf16.mxu0 %v545
    %1268 = vmatpush2.bf16.msra.mxu0 %v544
    %1269 = vmatprep.subr.bf16.mxu0 %v537
    %1270 = vmatpush2.bf16.msra.mxu0 %v536
    %1271 = vmatprep.subr.bf16.mxu0 %v529
    %1272 = vmatpush2.bf16.msra.mxu0 %v528
    %1273 = vmatprep.mubr.bf16.mxu0 %v859
    %1274 = vmatmul.mubr.bf16.gmra.mxu0 %v858
    %v1275 = vpop.f32.mrf.mxu0
    %v1276 = vadd.f32 %v1235, %v1275
    %v1277 = vpop.f32.mrf.mxu0
    %v1278 = vadd.f32 %v1237, %v1277
    %v1279 = vpop.f32.mrf.mxu0
    %v1280 = vpop.f32.mrf.mxu0
    %1281 = vdwg.mxu0
    %1282 = vmatprep.subr.bf16.mxu0 %v649
    %1283 = vmatpush1.bf16.msra.mxu0 %v648
    %1284 = vmatprep.subr.bf16.mxu0 %v641
    %1285 = vmatpush1.bf16.msra.mxu0 %v640
    %1286 = vmatprep.subr.bf16.mxu0 %v633
    %1287 = vmatpush1.bf16.msra.mxu0 %v632
    %1288 = vmatprep.subr.bf16.mxu0 %v625
    %1289 = vmatpush1.bf16.msra.mxu0 %v624
    %1290 = vmatprep.subr.bf16.mxu0 %v617
    %1291 = vmatpush1.bf16.msra.mxu0 %v616
    %1292 = vmatprep.subr.bf16.mxu0 %v609
    %1293 = vmatpush1.bf16.msra.mxu0 %v608
    %1294 = vmatprep.subr.bf16.mxu0 %v601
    %1295 = vmatpush1.bf16.msra.mxu0 %v600
    %1296 = vmatprep.subr.bf16.mxu0 %v593
    %1297 = vmatpush1.bf16.msra.mxu0 %v592
    %1298 = vmatprep.subr.bf16.mxu0 %v713
    %1299 = vmatpush2.bf16.msra.mxu0 %v712
    %1300 = vmatprep.subr.bf16.mxu0 %v705
    %1301 = vmatpush2.bf16.msra.mxu0 %v704
    %1302 = vmatprep.subr.bf16.mxu0 %v697
    %1303 = vmatpush2.bf16.msra.mxu0 %v696
    %1304 = vmatprep.subr.bf16.mxu0 %v689
    %1305 = vmatpush2.bf16.msra.mxu0 %v688
    %1306 = vmatprep.subr.bf16.mxu0 %v681
    %1307 = vmatpush2.bf16.msra.mxu0 %v680
    %1308 = vmatprep.subr.bf16.mxu0 %v673
    %1309 = vmatpush2.bf16.msra.mxu0 %v672
    %1310 = vmatprep.subr.bf16.mxu0 %v665
    %1311 = vmatpush2.bf16.msra.mxu0 %v664
    %1312 = vmatprep.subr.bf16.mxu0 %v657
    %1313 = vmatpush2.bf16.msra.mxu0 %v656
    %1314 = vmatprep.mubr.bf16.mxu0 %v861
    %1315 = vmatmul.mubr.bf16.gmra.mxu0 %v860
    %v1316 = vpop.f32.mrf.mxu0
    %v1317 = vadd.f32 %v1276, %v1316
    %v1318 = vpop.f32.mrf.mxu0
    %v1319 = vadd.f32 %v1278, %v1318
    %v1320 = vpop.f32.mrf.mxu0
    %v1321 = vpop.f32.mrf.mxu0
    %1322 = vdwg.mxu0
    %1323 = vmatprep.subr.bf16.mxu0 %v777
    %1324 = vmatpush1.bf16.msra.mxu0 %v776
    %1325 = vmatprep.subr.bf16.mxu0 %v769
    %1326 = vmatpush1.bf16.msra.mxu0 %v768
    %1327 = vmatprep.subr.bf16.mxu0 %v761
    %1328 = vmatpush1.bf16.msra.mxu0 %v760
    %1329 = vmatprep.subr.bf16.mxu0 %v753
    %1330 = vmatpush1.bf16.msra.mxu0 %v752
    %1331 = vmatprep.subr.bf16.mxu0 %v745
    %1332 = vmatpush1.bf16.msra.mxu0 %v744
    %1333 = vmatprep.subr.bf16.mxu0 %v737
    %1334 = vmatpush1.bf16.msra.mxu0 %v736
    %1335 = vmatprep.subr.bf16.mxu0 %v729
    %1336 = vmatpush1.bf16.msra.mxu0 %v728
    %1337 = vmatprep.subr.bf16.mxu0 %v721
    %1338 = vmatpush1.bf16.msra.mxu0 %v720
    %1339 = vmatprep.subr.bf16.mxu0 %v841
    %1340 = vmatpush2.bf16.msra.mxu0 %v840
    %1341 = vmatprep.subr.bf16.mxu0 %v833
    %1342 = vmatpush2.bf16.msra.mxu0 %v832
    %1343 = vmatprep.subr.bf16.mxu0 %v825
    %1344 = vmatpush2.bf16.msra.mxu0 %v824
    %1345 = vmatprep.subr.bf16.mxu0 %v817
    %1346 = vmatpush2.bf16.msra.mxu0 %v816
    %1347 = vmatprep.subr.bf16.mxu0 %v809
    %1348 = vmatpush2.bf16.msra.mxu0 %v808
    %1349 = vmatprep.subr.bf16.mxu0 %v801
    %1350 = vmatpush2.bf16.msra.mxu0 %v800
    %1351 = vmatprep.subr.bf16.mxu0 %v793
    %1352 = vmatpush2.bf16.msra.mxu0 %v792
    %1353 = vmatprep.subr.bf16.mxu0 %v785
    %1354 = vmatpush2.bf16.msra.mxu0 %v784
    %1355 = vmatprep.mubr.bf16.mxu0 %v863
    %1356 = vmatmul.mubr.bf16.gmra.mxu0 %v862
    %v1357 = vpop.f32.mrf.mxu0
    %v1358 = vadd.f32 %v1317, %v1357
    %v1359 = vpop.f32.mrf.mxu0
    %v1360 = vadd.f32 %v1319, %v1359
    %v1361 = vpop.f32.mrf.mxu0
    %v1362 = vpop.f32.mrf.mxu0
    %1363 = vdwg.mxu0
    %1364 = vmatprep.subr.bf16.mxu0 %v395
    %1365 = vmatpush1.bf16.msra.mxu0 %v394
    %1366 = vmatprep.subr.bf16.mxu0 %v387
    %1367 = vmatpush1.bf16.msra.mxu0 %v386
    %1368 = vmatprep.subr.bf16.mxu0 %v379
    %1369 = vmatpush1.bf16.msra.mxu0 %v378
    %1370 = vmatprep.subr.bf16.mxu0 %v371
    %1371 = vmatpush1.bf16.msra.mxu0 %v370
    %1372 = vmatprep.subr.bf16.mxu0 %v363
    %1373 = vmatpush1.bf16.msra.mxu0 %v362
    %1374 = vmatprep.subr.bf16.mxu0 %v355
    %1375 = vmatpush1.bf16.msra.mxu0 %v354
    %1376 = vmatprep.subr.bf16.mxu0 %v347
    %1377 = vmatpush1.bf16.msra.mxu0 %v346
    %1378 = vmatprep.subr.bf16.mxu0 %v339
    %1379 = vmatpush1.bf16.msra.mxu0 %v338
    %1380 = vmatprep.subr.bf16.mxu0 %v459
    %1381 = vmatpush2.bf16.msra.mxu0 %v458
    %1382 = vmatprep.subr.bf16.mxu0 %v451
    %1383 = vmatpush2.bf16.msra.mxu0 %v450
    %1384 = vmatprep.subr.bf16.mxu0 %v443
    %1385 = vmatpush2.bf16.msra.mxu0 %v442
    %1386 = vmatprep.subr.bf16.mxu0 %v435
    %1387 = vmatpush2.bf16.msra.mxu0 %v434
    %1388 = vmatprep.subr.bf16.mxu0 %v427
    %1389 = vmatpush2.bf16.msra.mxu0 %v426
    %1390 = vmatprep.subr.bf16.mxu0 %v419
    %1391 = vmatpush2.bf16.msra.mxu0 %v418
    %1392 = vmatprep.subr.bf16.mxu0 %v411
    %1393 = vmatpush2.bf16.msra.mxu0 %v410
    %1394 = vmatprep.subr.bf16.mxu0 %v403
    %1395 = vmatpush2.bf16.msra.mxu0 %v402
    %1396 = vmatprep.mubr.bf16.mxu0 %v857
    %1397 = vmatmul.mubr.bf16.gmra.mxu0 %v856
    %v1398 = vpop.f32.mrf.mxu0
    %v1399 = vadd.f32 0.0, %v1398
    %v1400 = vpop.f32.mrf.mxu0
    %v1401 = vadd.f32 0.0, %v1400
    %v1402 = vpop.f32.mrf.mxu0
    %v1403 = vpop.f32.mrf.mxu0
    %1404 = vdwg.mxu0
    %1405 = vmatprep.subr.bf16.mxu0 %v523
    %1406 = vmatpush1.bf16.msra.mxu0 %v522
    %1407 = vmatprep.subr.bf16.mxu0 %v515
    %1408 = vmatpush1.bf16.msra.mxu0 %v514
    %1409 = vmatprep.subr.bf16.mxu0 %v507
    %1410 = vmatpush1.bf16.msra.mxu0 %v506
    %1411 = vmatprep.subr.bf16.mxu0 %v499
    %1412 = vmatpush1.bf16.msra.mxu0 %v498
    %1413 = vmatprep.subr.bf16.mxu0 %v491
    %1414 = vmatpush1.bf16.msra.mxu0 %v490
    %1415 = vmatprep.subr.bf16.mxu0 %v483
    %1416 = vmatpush1.bf16.msra.mxu0 %v482
    %1417 = vmatprep.subr.bf16.mxu0 %v475
    %1418 = vmatpush1.bf16.msra.mxu0 %v474
    %1419 = vmatprep.subr.bf16.mxu0 %v467
    %1420 = vmatpush1.bf16.msra.mxu0 %v466
    %1421 = vmatprep.subr.bf16.mxu0 %v587
    %1422 = vmatpush2.bf16.msra.mxu0 %v586
    %1423 = vmatprep.subr.bf16.mxu0 %v579
    %1424 = vmatpush2.bf16.msra.mxu0 %v578
    %1425 = vmatprep.subr.bf16.mxu0 %v571
    %1426 = vmatpush2.bf16.msra.mxu0 %v570
    %1427 = vmatprep.subr.bf16.mxu0 %v563
    %1428 = vmatpush2.bf16.msra.mxu0 %v562
    %1429 = vmatprep.subr.bf16.mxu0 %v555
    %1430 = vmatpush2.bf16.msra.mxu0 %v554
    %1431 = vmatprep.subr.bf16.mxu0 %v547
    %1432 = vmatpush2.bf16.msra.mxu0 %v546
    %1433 = vmatprep.subr.bf16.mxu0 %v539
    %1434 = vmatpush2.bf16.msra.mxu0 %v538
    %1435 = vmatprep.subr.bf16.mxu0 %v531
    %1436 = vmatpush2.bf16.msra.mxu0 %v530
    %1437 = vmatprep.mubr.bf16.mxu0 %v859
    %1438 = vmatmul.mubr.bf16.gmra.mxu0 %v858
    %v1439 = vpop.f32.mrf.mxu0
    %v1440 = vadd.f32 %v1399, %v1439
    %v1441 = vpop.f32.mrf.mxu0
    %v1442 = vadd.f32 %v1401, %v1441
    %v1443 = vpop.f32.mrf.mxu0
    %v1444 = vpop.f32.mrf.mxu0
    %1445 = vdwg.mxu0
    %1446 = vmatprep.subr.bf16.mxu0 %v651
    %1447 = vmatpush1.bf16.msra.mxu0 %v650
    %1448 = vmatprep.subr.bf16.mxu0 %v643
    %1449 = vmatpush1.bf16.msra.mxu0 %v642
    %1450 = vmatprep.subr.bf16.mxu0 %v635
    %1451 = vmatpush1.bf16.msra.mxu0 %v634
    %1452 = vmatprep.subr.bf16.mxu0 %v627
    %1453 = vmatpush1.bf16.msra.mxu0 %v626
    %1454 = vmatprep.subr.bf16.mxu0 %v619
    %1455 = vmatpush1.bf16.msra.mxu0 %v618
    %1456 = vmatprep.subr.bf16.mxu0 %v611
    %1457 = vmatpush1.bf16.msra.mxu0 %v610
    %1458 = vmatprep.subr.bf16.mxu0 %v603
    %1459 = vmatpush1.bf16.msra.mxu0 %v602
    %1460 = vmatprep.subr.bf16.mxu0 %v595
    %1461 = vmatpush1.bf16.msra.mxu0 %v594
    %1462 = vmatprep.subr.bf16.mxu0 %v715
    %1463 = vmatpush2.bf16.msra.mxu0 %v714
    %1464 = vmatprep.subr.bf16.mxu0 %v707
    %1465 = vmatpush2.bf16.msra.mxu0 %v706
    %1466 = vmatprep.subr.bf16.mxu0 %v699
    %1467 = vmatpush2.bf16.msra.mxu0 %v698
    %1468 = vmatprep.subr.bf16.mxu0 %v691
    %1469 = vmatpush2.bf16.msra.mxu0 %v690
    %1470 = vmatprep.subr.bf16.mxu0 %v683
    %1471 = vmatpush2.bf16.msra.mxu0 %v682
    %1472 = vmatprep.subr.bf16.mxu0 %v675
    %1473 = vmatpush2.bf16.msra.mxu0 %v674
    %1474 = vmatprep.subr.bf16.mxu0 %v667
    %1475 = vmatpush2.bf16.msra.mxu0 %v666
    %1476 = vmatprep.subr.bf16.mxu0 %v659
    %1477 = vmatpush2.bf16.msra.mxu0 %v658
    %1478 = vmatprep.mubr.bf16.mxu0 %v861
    %1479 = vmatmul.mubr.bf16.gmra.mxu0 %v860
    %v1480 = vpop.f32.mrf.mxu0
    %v1481 = vadd.f32 %v1440, %v1480
    %v1482 = vpop.f32.mrf.mxu0
    %v1483 = vadd.f32 %v1442, %v1482
    %v1484 = vpop.f32.mrf.mxu0
    %v1485 = vpop.f32.mrf.mxu0
    %1486 = vdwg.mxu0
    %1487 = vmatprep.subr.bf16.mxu0 %v779
    %1488 = vmatpush1.bf16.msra.mxu0 %v778
    %1489 = vmatprep.subr.bf16.mxu0 %v771
    %1490 = vmatpush1.bf16.msra.mxu0 %v770
    %1491 = vmatprep.subr.bf16.mxu0 %v763
    %1492 = vmatpush1.bf16.msra.mxu0 %v762
    %1493 = vmatprep.subr.bf16.mxu0 %v755
    %1494 = vmatpush1.bf16.msra.mxu0 %v754
    %1495 = vmatprep.subr.bf16.mxu0 %v747
    %1496 = vmatpush1.bf16.msra.mxu0 %v746
    %1497 = vmatprep.subr.bf16.mxu0 %v739
    %1498 = vmatpush1.bf16.msra.mxu0 %v738
    %1499 = vmatprep.subr.bf16.mxu0 %v731
    %1500 = vmatpush1.bf16.msra.mxu0 %v730
    %1501 = vmatprep.subr.bf16.mxu0 %v723
    %1502 = vmatpush1.bf16.msra.mxu0 %v722
    %1503 = vmatprep.subr.bf16.mxu0 %v843
    %1504 = vmatpush2.bf16.msra.mxu0 %v842
    %1505 = vmatprep.subr.bf16.mxu0 %v835
    %1506 = vmatpush2.bf16.msra.mxu0 %v834
    %1507 = vmatprep.subr.bf16.mxu0 %v827
    %1508 = vmatpush2.bf16.msra.mxu0 %v826
    %1509 = vmatprep.subr.bf16.mxu0 %v819
    %1510 = vmatpush2.bf16.msra.mxu0 %v818
    %1511 = vmatprep.subr.bf16.mxu0 %v811
    %1512 = vmatpush2.bf16.msra.mxu0 %v810
    %1513 = vmatprep.subr.bf16.mxu0 %v803
    %1514 = vmatpush2.bf16.msra.mxu0 %v802
    %1515 = vmatprep.subr.bf16.mxu0 %v795
    %1516 = vmatpush2.bf16.msra.mxu0 %v794
    %1517 = vmatprep.subr.bf16.mxu0 %v787
    %1518 = vmatpush2.bf16.msra.mxu0 %v786
    %1519 = vmatprep.mubr.bf16.mxu0 %v863
    %1520 = vmatmul.mubr.bf16.gmra.mxu0 %v862
    %v1521 = vpop.f32.mrf.mxu0
    %v1522 = vadd.f32 %v1481, %v1521
    %v1523 = vpop.f32.mrf.mxu0
    %v1524 = vadd.f32 %v1483, %v1523
    %v1525 = vpop.f32.mrf.mxu0
    %v1526 = vpop.f32.mrf.mxu0
    %1527 = vdwg.mxu0
    %v1528 = vld [vmem:[#allocation6] ss:$4 sm:$0xff]
    %v1530 = vlaneseq
    %v1531 = vshrl.u32 %v1530, 7
    %v1532 = vsub.s32 0, %v1531
    %v1533 = vrot.slane %v1528, %v1532
    %v1534 = vlaneseq
    %v1535 = vshrl.u32 %v1534, 7
    %v1536 = vsub.s32 1, %v1535
    %v1537 = vrot.slane %v1528, %v1536
    %v1538 = vlaneseq
    %v1539 = vshrl.u32 %v1538, 7
    %v1540 = vsub.s32 2, %v1539
    %v1541 = vrot.slane %v1528, %v1540
    %v1542 = vlaneseq
    %v1543 = vshrl.u32 %v1542, 7
    %v1544 = vsub.s32 3, %v1543
    %v1545 = vrot.slane %v1528, %v1544
    %v1546 = vlaneseq
    %v1547 = vshrl.u32 %v1546, 7
    %v1548 = vsub.s32 4, %v1547
    %v1549 = vrot.slane %v1528, %v1548
    %v1550 = vlaneseq
    %v1551 = vshrl.u32 %v1550, 7
    %v1552 = vsub.s32 5, %v1551
    %v1553 = vrot.slane %v1528, %v1552
    %v1554 = vlaneseq
    %v1555 = vshrl.u32 %v1554, 7
    %v1556 = vsub.s32 6, %v1555
    %v1557 = vrot.slane %v1528, %v1556
    %v1558 = vlaneseq
    %v1559 = vshrl.u32 %v1558, 7
    %v1560 = vsub.s32 7, %v1559
    %v1561 = vrot.slane %v1528, %v1560
    %v1570 = vmul.f32 %v1030, %v1533
    %v1571 = vmul.f32 %v1032, %v1537
    %v1572 = vmul.f32 %v1194, %v1541
    %v1573 = vmul.f32 %v1196, %v1545
    %v1574 = vmul.f32 %v1358, %v1549
    %v1575 = vmul.f32 %v1360, %v1553
    %v1576 = vmul.f32 %v1522, %v1557
    %v1577 = vmul.f32 %v1524, %v1561
    %v1578 = vld [vmem:[#allocation7] ss:$4 sm:$0xff]
    %v1580 = vlaneseq
    %v1581 = vshrl.u32 %v1580, 7
    %v1582 = vsub.s32 0, %v1581
    %v1583 = vrot.slane %v1578, %v1582
    %v1584 = vlaneseq
    %v1585 = vshrl.u32 %v1584, 7
    %v1586 = vsub.s32 1, %v1585
    %v1587 = vrot.slane %v1578, %v1586
    %v1588 = vlaneseq
    %v1589 = vshrl.u32 %v1588, 7
    %v1590 = vsub.s32 2, %v1589
    %v1591 = vrot.slane %v1578, %v1590
    %v1592 = vlaneseq
    %v1593 = vshrl.u32 %v1592, 7
    %v1594 = vsub.s32 3, %v1593
    %v1595 = vrot.slane %v1578, %v1594
    %v1596 = vlaneseq
    %v1597 = vshrl.u32 %v1596, 7
    %v1598 = vsub.s32 4, %v1597
    %v1599 = vrot.slane %v1578, %v1598
    %v1600 = vlaneseq
    %v1601 = vshrl.u32 %v1600, 7
    %v1602 = vsub.s32 5, %v1601
    %v1603 = vrot.slane %v1578, %v1602
    %v1604 = vlaneseq
    %v1605 = vshrl.u32 %v1604, 7
    %v1606 = vsub.s32 6, %v1605
    %v1607 = vrot.slane %v1578, %v1606
    %v1608 = vlaneseq
    %v1609 = vshrl.u32 %v1608, 7
    %v1610 = vsub.s32 7, %v1609
    %v1611 = vrot.slane %v1578, %v1610
    %v1620 = vadd.f32 %v1570, %v1583
    %v1621 = vadd.f32 %v1571, %v1587
    %v1622 = vadd.f32 %v1572, %v1591
    %v1623 = vadd.f32 %v1573, %v1595
    %v1624 = vadd.f32 %v1574, %v1599
    %v1625 = vadd.f32 %v1575, %v1603
    %v1626 = vadd.f32 %v1576, %v1607
    %v1627 = vadd.f32 %v1577, %v1611
    %v1628 = vtanh.pop %v1620
    %v1629 = vtanh.pop %v1621
    %v1630 = vtanh.pop %v1622
    %v1631 = vtanh.pop %v1623
    %v1632 = vtanh.pop %v1624
    %v1633 = vtanh.pop %v1625
    %v1634 = vtanh.pop %v1626
    %v1635 = vtanh.pop %v1627
    %v1636 = vpack.c.bf16 %v1628, %v1628
    %v1637 = vpack.c.bf16 %v1629, %v1629
    %v1638 = vpack.c.bf16 %v1630, %v1630
    %v1639 = vpack.c.bf16 %v1631, %v1631
    %v1640 = vpack.c.bf16 %v1632, %v1632
    %v1641 = vpack.c.bf16 %v1633, %v1633
    %v1642 = vpack.c.bf16 %v1634, %v1634
    %v1643 = vpack.c.bf16 %v1635, %v1635
    %s1644 = scalar_lea.vmem [#allocation2], 2048
    %v1645 = vld [vmem:[%s1644] sm:$0xff]
    %v1646 = vld [vmem:[%s1644 + $0x8] sm:$0xff]
    %v1647 = vld [vmem:[%s1644 + $0x10] sm:$0xff]
    %v1648 = vld [vmem:[%s1644 + $0x18] sm:$0xff]
    %v1649 = vld [vmem:[%s1644 + $0x20] sm:$0xff]
    %v1650 = vld [vmem:[%s1644 + $0x28] sm:$0xff]
    %v1651 = vld [vmem:[%s1644 + $0x30] sm:$0xff]
    %v1652 = vld [vmem:[%s1644 + $0x38] sm:$0xff]
    %v1653 = vld [vmem:[%s1644 + $0x40] sm:$0xff]
    %v1654 = vld [vmem:[%s1644 + $0x48] sm:$0xff]
    %v1655 = vld [vmem:[%s1644 + $0x50] sm:$0xff]
    %v1656 = vld [vmem:[%s1644 + $0x58] sm:$0xff]
    %v1657 = vld [vmem:[%s1644 + $0x60] sm:$0xff]
    %v1658 = vld [vmem:[%s1644 + $0x68] sm:$0xff]
    %v1659 = vld [vmem:[%s1644 + $0x70] sm:$0xff]
    %v1660 = vld [vmem:[%s1644 + $0x78] sm:$0xff]
    %v1661 = vld [vmem:[%s1644 + $0x80] sm:$0xff]
    %v1662 = vld [vmem:[%s1644 + $0x88] sm:$0xff]
    %v1663 = vld [vmem:[%s1644 + $0x90] sm:$0xff]
    %v1664 = vld [vmem:[%s1644 + $0x98] sm:$0xff]
    %v1665 = vld [vmem:[%s1644 + $0xa0] sm:$0xff]
    %v1666 = vld [vmem:[%s1644 + $0xa8] sm:$0xff]
    %v1667 = vld [vmem:[%s1644 + $0xb0] sm:$0xff]
    %v1668 = vld [vmem:[%s1644 + $0xb8] sm:$0xff]
    %v1669 = vld [vmem:[%s1644 + $0xc0] sm:$0xff]
    %v1670 = vld [vmem:[%s1644 + $0xc8] sm:$0xff]
    %v1671 = vld [vmem:[%s1644 + $0xd0] sm:$0xff]
    %v1672 = vld [vmem:[%s1644 + $0xd8] sm:$0xff]
    %v1673 = vld [vmem:[%s1644 + $0xe0] sm:$0xff]
    %v1674 = vld [vmem:[%s1644 + $0xe8] sm:$0xff]
    %v1675 = vld [vmem:[%s1644 + $0xf0] sm:$0xff]
    %v1676 = vld [vmem:[%s1644 + $0xf8] sm:$0xff]
    %v1677 = vld [vmem:[%s1644 + $0x100] sm:$0xff]
    %v1678 = vld [vmem:[%s1644 + $0x108] sm:$0xff]
    %v1679 = vld [vmem:[%s1644 + $0x110] sm:$0xff]
    %v1680 = vld [vmem:[%s1644 + $0x118] sm:$0xff]
    %v1681 = vld [vmem:[%s1644 + $0x120] sm:$0xff]
    %v1682 = vld [vmem:[%s1644 + $0x128] sm:$0xff]
    %v1683 = vld [vmem:[%s1644 + $0x130] sm:$0xff]
    %v1684 = vld [vmem:[%s1644 + $0x138] sm:$0xff]
    %v1685 = vld [vmem:[%s1644 + $0x140] sm:$0xff]
    %v1686 = vld [vmem:[%s1644 + $0x148] sm:$0xff]
    %v1687 = vld [vmem:[%s1644 + $0x150] sm:$0xff]
    %v1688 = vld [vmem:[%s1644 + $0x158] sm:$0xff]
    %v1689 = vld [vmem:[%s1644 + $0x160] sm:$0xff]
    %v1690 = vld [vmem:[%s1644 + $0x168] sm:$0xff]
    %v1691 = vld [vmem:[%s1644 + $0x170] sm:$0xff]
    %v1692 = vld [vmem:[%s1644 + $0x178] sm:$0xff]
    %v1693 = vld [vmem:[%s1644 + $0x180] sm:$0xff]
    %v1694 = vld [vmem:[%s1644 + $0x188] sm:$0xff]
    %v1695 = vld [vmem:[%s1644 + $0x190] sm:$0xff]
    %v1696 = vld [vmem:[%s1644 + $0x198] sm:$0xff]
    %v1697 = vld [vmem:[%s1644 + $0x1a0] sm:$0xff]
    %v1698 = vld [vmem:[%s1644 + $0x1a8] sm:$0xff]
    %v1699 = vld [vmem:[%s1644 + $0x1b0] sm:$0xff]
    %v1700 = vld [vmem:[%s1644 + $0x1b8] sm:$0xff]
    %v1701 = vld [vmem:[%s1644 + $0x1c0] sm:$0xff]
    %v1702 = vld [vmem:[%s1644 + $0x1c8] sm:$0xff]
    %v1703 = vld [vmem:[%s1644 + $0x1d0] sm:$0xff]
    %v1704 = vld [vmem:[%s1644 + $0x1d8] sm:$0xff]
    %v1705 = vld [vmem:[%s1644 + $0x1e0] sm:$0xff]
    %v1706 = vld [vmem:[%s1644 + $0x1e8] sm:$0xff]
    %v1707 = vld [vmem:[%s1644 + $0x1f0] sm:$0xff]
    %v1708 = vld [vmem:[%s1644 + $0x1f8] sm:$0xff]
    %v1709 = vld [vmem:[%s1644 + $0x200] sm:$0xff]
    %v1710 = vld [vmem:[%s1644 + $0x208] sm:$0xff]
    %v1711 = vld [vmem:[%s1644 + $0x210] sm:$0xff]
    %v1712 = vld [vmem:[%s1644 + $0x218] sm:$0xff]
    %v1713 = vld [vmem:[%s1644 + $0x220] sm:$0xff]
    %v1714 = vld [vmem:[%s1644 + $0x228] sm:$0xff]
    %v1715 = vld [vmem:[%s1644 + $0x230] sm:$0xff]
    %v1716 = vld [vmem:[%s1644 + $0x238] sm:$0xff]
    %v1717 = vld [vmem:[%s1644 + $0x240] sm:$0xff]
    %v1718 = vld [vmem:[%s1644 + $0x248] sm:$0xff]
    %v1719 = vld [vmem:[%s1644 + $0x250] sm:$0xff]
    %v1720 = vld [vmem:[%s1644 + $0x258] sm:$0xff]
    %v1721 = vld [vmem:[%s1644 + $0x260] sm:$0xff]
    %v1722 = vld [vmem:[%s1644 + $0x268] sm:$0xff]
    %v1723 = vld [vmem:[%s1644 + $0x270] sm:$0xff]
    %v1724 = vld [vmem:[%s1644 + $0x278] sm:$0xff]
    %v1725 = vld [vmem:[%s1644 + $0x280] sm:$0xff]
    %v1726 = vld [vmem:[%s1644 + $0x288] sm:$0xff]
    %v1727 = vld [vmem:[%s1644 + $0x290] sm:$0xff]
    %v1728 = vld [vmem:[%s1644 + $0x298] sm:$0xff]
    %v1729 = vld [vmem:[%s1644 + $0x2a0] sm:$0xff]
    %v1730 = vld [vmem:[%s1644 + $0x2a8] sm:$0xff]
    %v1731 = vld [vmem:[%s1644 + $0x2b0] sm:$0xff]
    %v1732 = vld [vmem:[%s1644 + $0x2b8] sm:$0xff]
    %v1733 = vld [vmem:[%s1644 + $0x2c0] sm:$0xff]
    %v1734 = vld [vmem:[%s1644 + $0x2c8] sm:$0xff]
    %v1735 = vld [vmem:[%s1644 + $0x2d0] sm:$0xff]
    %v1736 = vld [vmem:[%s1644 + $0x2d8] sm:$0xff]
    %v1737 = vld [vmem:[%s1644 + $0x2e0] sm:$0xff]
    %v1738 = vld [vmem:[%s1644 + $0x2e8] sm:$0xff]
    %v1739 = vld [vmem:[%s1644 + $0x2f0] sm:$0xff]
    %v1740 = vld [vmem:[%s1644 + $0x2f8] sm:$0xff]
    %v1741 = vld [vmem:[%s1644 + $0x300] sm:$0xff]
    %v1742 = vld [vmem:[%s1644 + $0x308] sm:$0xff]
    %v1743 = vld [vmem:[%s1644 + $0x310] sm:$0xff]
    %v1744 = vld [vmem:[%s1644 + $0x318] sm:$0xff]
    %v1745 = vld [vmem:[%s1644 + $0x320] sm:$0xff]
    %v1746 = vld [vmem:[%s1644 + $0x328] sm:$0xff]
    %v1747 = vld [vmem:[%s1644 + $0x330] sm:$0xff]
    %v1748 = vld [vmem:[%s1644 + $0x338] sm:$0xff]
    %v1749 = vld [vmem:[%s1644 + $0x340] sm:$0xff]
    %v1750 = vld [vmem:[%s1644 + $0x348] sm:$0xff]
    %v1751 = vld [vmem:[%s1644 + $0x350] sm:$0xff]
    %v1752 = vld [vmem:[%s1644 + $0x358] sm:$0xff]
    %v1753 = vld [vmem:[%s1644 + $0x360] sm:$0xff]
    %v1754 = vld [vmem:[%s1644 + $0x368] sm:$0xff]
    %v1755 = vld [vmem:[%s1644 + $0x370] sm:$0xff]
    %v1756 = vld [vmem:[%s1644 + $0x378] sm:$0xff]
    %v1757 = vld [vmem:[%s1644 + $0x380] sm:$0xff]
    %v1758 = vld [vmem:[%s1644 + $0x388] sm:$0xff]
    %v1759 = vld [vmem:[%s1644 + $0x390] sm:$0xff]
    %v1760 = vld [vmem:[%s1644 + $0x398] sm:$0xff]
    %v1761 = vld [vmem:[%s1644 + $0x3a0] sm:$0xff]
    %v1762 = vld [vmem:[%s1644 + $0x3a8] sm:$0xff]
    %v1763 = vld [vmem:[%s1644 + $0x3b0] sm:$0xff]
    %v1764 = vld [vmem:[%s1644 + $0x3b8] sm:$0xff]
    %v1765 = vld [vmem:[%s1644 + $0x3c0] sm:$0xff]
    %v1766 = vld [vmem:[%s1644 + $0x3c8] sm:$0xff]
    %v1767 = vld [vmem:[%s1644 + $0x3d0] sm:$0xff]
    %v1768 = vld [vmem:[%s1644 + $0x3d8] sm:$0xff]
    %v1769 = vld [vmem:[%s1644 + $0x3e0] sm:$0xff]
    %v1770 = vld [vmem:[%s1644 + $0x3e8] sm:$0xff]
    %v1771 = vld [vmem:[%s1644 + $0x3f0] sm:$0xff]
    %v1772 = vld [vmem:[%s1644 + $0x3f8] sm:$0xff]
    %v1773 = vld [vmem:[%s1644 + $0x400] sm:$0xff]
    %v1774 = vld [vmem:[%s1644 + $0x408] sm:$0xff]
    %v1775 = vld [vmem:[%s1644 + $0x410] sm:$0xff]
    %v1776 = vld [vmem:[%s1644 + $0x418] sm:$0xff]
    %v1777 = vld [vmem:[%s1644 + $0x420] sm:$0xff]
    %v1778 = vld [vmem:[%s1644 + $0x428] sm:$0xff]
    %v1779 = vld [vmem:[%s1644 + $0x430] sm:$0xff]
    %v1780 = vld [vmem:[%s1644 + $0x438] sm:$0xff]
    %v1781 = vld [vmem:[%s1644 + $0x440] sm:$0xff]
    %v1782 = vld [vmem:[%s1644 + $0x448] sm:$0xff]
    %v1783 = vld [vmem:[%s1644 + $0x450] sm:$0xff]
    %v1784 = vld [vmem:[%s1644 + $0x458] sm:$0xff]
    %v1785 = vld [vmem:[%s1644 + $0x460] sm:$0xff]
    %v1786 = vld [vmem:[%s1644 + $0x468] sm:$0xff]
    %v1787 = vld [vmem:[%s1644 + $0x470] sm:$0xff]
    %v1788 = vld [vmem:[%s1644 + $0x478] sm:$0xff]
    %v1789 = vld [vmem:[%s1644 + $0x480] sm:$0xff]
    %v1790 = vld [vmem:[%s1644 + $0x488] sm:$0xff]
    %v1791 = vld [vmem:[%s1644 + $0x490] sm:$0xff]
    %v1792 = vld [vmem:[%s1644 + $0x498] sm:$0xff]
    %v1793 = vld [vmem:[%s1644 + $0x4a0] sm:$0xff]
    %v1794 = vld [vmem:[%s1644 + $0x4a8] sm:$0xff]
    %v1795 = vld [vmem:[%s1644 + $0x4b0] sm:$0xff]
    %v1796 = vld [vmem:[%s1644 + $0x4b8] sm:$0xff]
    %v1797 = vld [vmem:[%s1644 + $0x4c0] sm:$0xff]
    %v1798 = vld [vmem:[%s1644 + $0x4c8] sm:$0xff]
    %v1799 = vld [vmem:[%s1644 + $0x4d0] sm:$0xff]
    %v1800 = vld [vmem:[%s1644 + $0x4d8] sm:$0xff]
    %v1801 = vld [vmem:[%s1644 + $0x4e0] sm:$0xff]
    %v1802 = vld [vmem:[%s1644 + $0x4e8] sm:$0xff]
    %v1803 = vld [vmem:[%s1644 + $0x4f0] sm:$0xff]
    %v1804 = vld [vmem:[%s1644 + $0x4f8] sm:$0xff]
    %v1805 = vld [vmem:[%s1644 + $0x500] sm:$0xff]
    %v1806 = vld [vmem:[%s1644 + $0x508] sm:$0xff]
    %v1807 = vld [vmem:[%s1644 + $0x510] sm:$0xff]
    %v1808 = vld [vmem:[%s1644 + $0x518] sm:$0xff]
    %v1809 = vld [vmem:[%s1644 + $0x520] sm:$0xff]
    %v1810 = vld [vmem:[%s1644 + $0x528] sm:$0xff]
    %v1811 = vld [vmem:[%s1644 + $0x530] sm:$0xff]
    %v1812 = vld [vmem:[%s1644 + $0x538] sm:$0xff]
    %v1813 = vld [vmem:[%s1644 + $0x540] sm:$0xff]
    %v1814 = vld [vmem:[%s1644 + $0x548] sm:$0xff]
    %v1815 = vld [vmem:[%s1644 + $0x550] sm:$0xff]
    %v1816 = vld [vmem:[%s1644 + $0x558] sm:$0xff]
    %v1817 = vld [vmem:[%s1644 + $0x560] sm:$0xff]
    %v1818 = vld [vmem:[%s1644 + $0x568] sm:$0xff]
    %v1819 = vld [vmem:[%s1644 + $0x570] sm:$0xff]
    %v1820 = vld [vmem:[%s1644 + $0x578] sm:$0xff]
    %v1821 = vld [vmem:[%s1644 + $0x580] sm:$0xff]
    %v1822 = vld [vmem:[%s1644 + $0x588] sm:$0xff]
    %v1823 = vld [vmem:[%s1644 + $0x590] sm:$0xff]
    %v1824 = vld [vmem:[%s1644 + $0x598] sm:$0xff]
    %v1825 = vld [vmem:[%s1644 + $0x5a0] sm:$0xff]
    %v1826 = vld [vmem:[%s1644 + $0x5a8] sm:$0xff]
    %v1827 = vld [vmem:[%s1644 + $0x5b0] sm:$0xff]
    %v1828 = vld [vmem:[%s1644 + $0x5b8] sm:$0xff]
    %v1829 = vld [vmem:[%s1644 + $0x5c0] sm:$0xff]
    %v1830 = vld [vmem:[%s1644 + $0x5c8] sm:$0xff]
    %v1831 = vld [vmem:[%s1644 + $0x5d0] sm:$0xff]
    %v1832 = vld [vmem:[%s1644 + $0x5d8] sm:$0xff]
    %v1833 = vld [vmem:[%s1644 + $0x5e0] sm:$0xff]
    %v1834 = vld [vmem:[%s1644 + $0x5e8] sm:$0xff]
    %v1835 = vld [vmem:[%s1644 + $0x5f0] sm:$0xff]
    %v1836 = vld [vmem:[%s1644 + $0x5f8] sm:$0xff]
    %v1837 = vld [vmem:[%s1644 + $0x600] sm:$0xff]
    %v1838 = vld [vmem:[%s1644 + $0x608] sm:$0xff]
    %v1839 = vld [vmem:[%s1644 + $0x610] sm:$0xff]
    %v1840 = vld [vmem:[%s1644 + $0x618] sm:$0xff]
    %v1841 = vld [vmem:[%s1644 + $0x620] sm:$0xff]
    %v1842 = vld [vmem:[%s1644 + $0x628] sm:$0xff]
    %v1843 = vld [vmem:[%s1644 + $0x630] sm:$0xff]
    %v1844 = vld [vmem:[%s1644 + $0x638] sm:$0xff]
    %v1845 = vld [vmem:[%s1644 + $0x640] sm:$0xff]
    %v1846 = vld [vmem:[%s1644 + $0x648] sm:$0xff]
    %v1847 = vld [vmem:[%s1644 + $0x650] sm:$0xff]
    %v1848 = vld [vmem:[%s1644 + $0x658] sm:$0xff]
    %v1849 = vld [vmem:[%s1644 + $0x660] sm:$0xff]
    %v1850 = vld [vmem:[%s1644 + $0x668] sm:$0xff]
    %v1851 = vld [vmem:[%s1644 + $0x670] sm:$0xff]
    %v1852 = vld [vmem:[%s1644 + $0x678] sm:$0xff]
    %v1853 = vld [vmem:[%s1644 + $0x680] sm:$0xff]
    %v1854 = vld [vmem:[%s1644 + $0x688] sm:$0xff]
    %v1855 = vld [vmem:[%s1644 + $0x690] sm:$0xff]
    %v1856 = vld [vmem:[%s1644 + $0x698] sm:$0xff]
    %v1857 = vld [vmem:[%s1644 + $0x6a0] sm:$0xff]
    %v1858 = vld [vmem:[%s1644 + $0x6a8] sm:$0xff]
    %v1859 = vld [vmem:[%s1644 + $0x6b0] sm:$0xff]
    %v1860 = vld [vmem:[%s1644 + $0x6b8] sm:$0xff]
    %v1861 = vld [vmem:[%s1644 + $0x6c0] sm:$0xff]
    %v1862 = vld [vmem:[%s1644 + $0x6c8] sm:$0xff]
    %v1863 = vld [vmem:[%s1644 + $0x6d0] sm:$0xff]
    %v1864 = vld [vmem:[%s1644 + $0x6d8] sm:$0xff]
    %v1865 = vld [vmem:[%s1644 + $0x6e0] sm:$0xff]
    %v1866 = vld [vmem:[%s1644 + $0x6e8] sm:$0xff]
    %v1867 = vld [vmem:[%s1644 + $0x6f0] sm:$0xff]
    %v1868 = vld [vmem:[%s1644 + $0x6f8] sm:$0xff]
    %v1869 = vld [vmem:[%s1644 + $0x700] sm:$0xff]
    %v1870 = vld [vmem:[%s1644 + $0x708] sm:$0xff]
    %v1871 = vld [vmem:[%s1644 + $0x710] sm:$0xff]
    %v1872 = vld [vmem:[%s1644 + $0x718] sm:$0xff]
    %v1873 = vld [vmem:[%s1644 + $0x720] sm:$0xff]
    %v1874 = vld [vmem:[%s1644 + $0x728] sm:$0xff]
    %v1875 = vld [vmem:[%s1644 + $0x730] sm:$0xff]
    %v1876 = vld [vmem:[%s1644 + $0x738] sm:$0xff]
    %v1877 = vld [vmem:[%s1644 + $0x740] sm:$0xff]
    %v1878 = vld [vmem:[%s1644 + $0x748] sm:$0xff]
    %v1879 = vld [vmem:[%s1644 + $0x750] sm:$0xff]
    %v1880 = vld [vmem:[%s1644 + $0x758] sm:$0xff]
    %v1881 = vld [vmem:[%s1644 + $0x760] sm:$0xff]
    %v1882 = vld [vmem:[%s1644 + $0x768] sm:$0xff]
    %v1883 = vld [vmem:[%s1644 + $0x770] sm:$0xff]
    %v1884 = vld [vmem:[%s1644 + $0x778] sm:$0xff]
    %v1885 = vld [vmem:[%s1644 + $0x780] sm:$0xff]
    %v1886 = vld [vmem:[%s1644 + $0x788] sm:$0xff]
    %v1887 = vld [vmem:[%s1644 + $0x790] sm:$0xff]
    %v1888 = vld [vmem:[%s1644 + $0x798] sm:$0xff]
    %v1889 = vld [vmem:[%s1644 + $0x7a0] sm:$0xff]
    %v1890 = vld [vmem:[%s1644 + $0x7a8] sm:$0xff]
    %v1891 = vld [vmem:[%s1644 + $0x7b0] sm:$0xff]
    %v1892 = vld [vmem:[%s1644 + $0x7b8] sm:$0xff]
    %v1893 = vld [vmem:[%s1644 + $0x7c0] sm:$0xff]
    %v1894 = vld [vmem:[%s1644 + $0x7c8] sm:$0xff]
    %v1895 = vld [vmem:[%s1644 + $0x7d0] sm:$0xff]
    %v1896 = vld [vmem:[%s1644 + $0x7d8] sm:$0xff]
    %v1897 = vld [vmem:[%s1644 + $0x7e0] sm:$0xff]
    %v1898 = vld [vmem:[%s1644 + $0x7e8] sm:$0xff]
    %v1899 = vld [vmem:[%s1644 + $0x7f0] sm:$0xff]
    %v1900 = vld [vmem:[%s1644 + $0x7f8] sm:$0xff]
    %v1901 = vunpack.c.l.s8.bf16 %v1645
    %v1902 = vunpack.c.l.s8.bf16 %v1646
    %v1903 = vunpack.c.l.s8.bf16 %v1647
    %v1904 = vunpack.c.l.s8.bf16 %v1648
    %v1905 = vunpack.c.l.s8.bf16 %v1649
    %v1906 = vunpack.c.l.s8.bf16 %v1650
    %v1907 = vunpack.c.l.s8.bf16 %v1651
    %v1908 = vunpack.c.l.s8.bf16 %v1652
    %v1909 = vunpack.c.h.s8.bf16 %v1645
    %v1910 = vunpack.c.h.s8.bf16 %v1646
    %v1911 = vunpack.c.h.s8.bf16 %v1647
    %v1912 = vunpack.c.h.s8.bf16 %v1648
    %v1913 = vunpack.c.h.s8.bf16 %v1649
    %v1914 = vunpack.c.h.s8.bf16 %v1650
    %v1915 = vunpack.c.h.s8.bf16 %v1651
    %v1916 = vunpack.c.h.s8.bf16 %v1652
    %v1917 = vunpack.c.l.s8.bf16 %v1653
    %v1918 = vunpack.c.l.s8.bf16 %v1654
    %v1919 = vunpack.c.l.s8.bf16 %v1655
    %v1920 = vunpack.c.l.s8.bf16 %v1656
    %v1921 = vunpack.c.l.s8.bf16 %v1657
    %v1922 = vunpack.c.l.s8.bf16 %v1658
    %v1923 = vunpack.c.l.s8.bf16 %v1659
    %v1924 = vunpack.c.l.s8.bf16 %v1660
    %v1925 = vunpack.c.h.s8.bf16 %v1653
    %v1926 = vunpack.c.h.s8.bf16 %v1654
    %v1927 = vunpack.c.h.s8.bf16 %v1655
    %v1928 = vunpack.c.h.s8.bf16 %v1656
    %v1929 = vunpack.c.h.s8.bf16 %v1657
    %v1930 = vunpack.c.h.s8.bf16 %v1658
    %v1931 = vunpack.c.h.s8.bf16 %v1659
    %v1932 = vunpack.c.h.s8.bf16 %v1660
    %v1933 = vunpack.c.l.s8.bf16 %v1661
    %v1934 = vunpack.c.l.s8.bf16 %v1662
    %v1935 = vunpack.c.l.s8.bf16 %v1663
    %v1936 = vunpack.c.l.s8.bf16 %v1664
    %v1937 = vunpack.c.l.s8.bf16 %v1665
    %v1938 = vunpack.c.l.s8.bf16 %v1666
    %v1939 = vunpack.c.l.s8.bf16 %v1667
    %v1940 = vunpack.c.l.s8.bf16 %v1668
    %v1941 = vunpack.c.h.s8.bf16 %v1661
    %v1942 = vunpack.c.h.s8.bf16 %v1662
    %v1943 = vunpack.c.h.s8.bf16 %v1663
    %v1944 = vunpack.c.h.s8.bf16 %v1664
    %v1945 = vunpack.c.h.s8.bf16 %v1665
    %v1946 = vunpack.c.h.s8.bf16 %v1666
    %v1947 = vunpack.c.h.s8.bf16 %v1667
    %v1948 = vunpack.c.h.s8.bf16 %v1668
    %v1949 = vunpack.c.l.s8.bf16 %v1669
    %v1950 = vunpack.c.l.s8.bf16 %v1670
    %v1951 = vunpack.c.l.s8.bf16 %v1671
    %v1952 = vunpack.c.l.s8.bf16 %v1672
    %v1953 = vunpack.c.l.s8.bf16 %v1673
    %v1954 = vunpack.c.l.s8.bf16 %v1674
    %v1955 = vunpack.c.l.s8.bf16 %v1675
    %v1956 = vunpack.c.l.s8.bf16 %v1676
    %v1957 = vunpack.c.h.s8.bf16 %v1669
    %v1958 = vunpack.c.h.s8.bf16 %v1670
    %v1959 = vunpack.c.h.s8.bf16 %v1671
    %v1960 = vunpack.c.h.s8.bf16 %v1672
    %v1961 = vunpack.c.h.s8.bf16 %v1673
    %v1962 = vunpack.c.h.s8.bf16 %v1674
    %v1963 = vunpack.c.h.s8.bf16 %v1675
    %v1964 = vunpack.c.h.s8.bf16 %v1676
    %v1965 = vunpack.c.l.s8.bf16 %v1677
    %v1966 = vunpack.c.l.s8.bf16 %v1678
    %v1967 = vunpack.c.l.s8.bf16 %v1679
    %v1968 = vunpack.c.l.s8.bf16 %v1680
    %v1969 = vunpack.c.l.s8.bf16 %v1681
    %v1970 = vunpack.c.l.s8.bf16 %v1682
    %v1971 = vunpack.c.l.s8.bf16 %v1683
    %v1972 = vunpack.c.l.s8.bf16 %v1684
    %v1973 = vunpack.c.h.s8.bf16 %v1677
    %v1974 = vunpack.c.h.s8.bf16 %v1678
    %v1975 = vunpack.c.h.s8.bf16 %v1679
    %v1976 = vunpack.c.h.s8.bf16 %v1680
    %v1977 = vunpack.c.h.s8.bf16 %v1681
    %v1978 = vunpack.c.h.s8.bf16 %v1682
    %v1979 = vunpack.c.h.s8.bf16 %v1683
    %v1980 = vunpack.c.h.s8.bf16 %v1684
    %v1981 = vunpack.c.l.s8.bf16 %v1685
    %v1982 = vunpack.c.l.s8.bf16 %v1686
    %v1983 = vunpack.c.l.s8.bf16 %v1687
    %v1984 = vunpack.c.l.s8.bf16 %v1688
    %v1985 = vunpack.c.l.s8.bf16 %v1689
    %v1986 = vunpack.c.l.s8.bf16 %v1690
    %v1987 = vunpack.c.l.s8.bf16 %v1691
    %v1988 = vunpack.c.l.s8.bf16 %v1692
    %v1989 = vunpack.c.h.s8.bf16 %v1685
    %v1990 = vunpack.c.h.s8.bf16 %v1686
    %v1991 = vunpack.c.h.s8.bf16 %v1687
    %v1992 = vunpack.c.h.s8.bf16 %v1688
    %v1993 = vunpack.c.h.s8.bf16 %v1689
    %v1994 = vunpack.c.h.s8.bf16 %v1690
    %v1995 = vunpack.c.h.s8.bf16 %v1691
    %v1996 = vunpack.c.h.s8.bf16 %v1692
    %v1997 = vunpack.c.l.s8.bf16 %v1693
    %v1998 = vunpack.c.l.s8.bf16 %v1694
    %v1999 = vunpack.c.l.s8.bf16 %v1695
    %v2000 = vunpack.c.l.s8.bf16 %v1696
    %v2001 = vunpack.c.l.s8.bf16 %v1697
    %v2002 = vunpack.c.l.s8.bf16 %v1698
    %v2003 = vunpack.c.l.s8.bf16 %v1699
    %v2004 = vunpack.c.l.s8.bf16 %v1700
    %v2005 = vunpack.c.h.s8.bf16 %v1693
    %v2006 = vunpack.c.h.s8.bf16 %v1694
    %v2007 = vunpack.c.h.s8.bf16 %v1695
    %v2008 = vunpack.c.h.s8.bf16 %v1696
    %v2009 = vunpack.c.h.s8.bf16 %v1697
    %v2010 = vunpack.c.h.s8.bf16 %v1698
    %v2011 = vunpack.c.h.s8.bf16 %v1699
    %v2012 = vunpack.c.h.s8.bf16 %v1700
    %v2013 = vunpack.c.l.s8.bf16 %v1701
    %v2014 = vunpack.c.l.s8.bf16 %v1702
    %v2015 = vunpack.c.l.s8.bf16 %v1703
    %v2016 = vunpack.c.l.s8.bf16 %v1704
    %v2017 = vunpack.c.l.s8.bf16 %v1705
    %v2018 = vunpack.c.l.s8.bf16 %v1706
    %v2019 = vunpack.c.l.s8.bf16 %v1707
    %v2020 = vunpack.c.l.s8.bf16 %v1708
    %v2021 = vunpack.c.h.s8.bf16 %v1701
    %v2022 = vunpack.c.h.s8.bf16 %v1702
    %v2023 = vunpack.c.h.s8.bf16 %v1703
    %v2024 = vunpack.c.h.s8.bf16 %v1704
    %v2025 = vunpack.c.h.s8.bf16 %v1705
    %v2026 = vunpack.c.h.s8.bf16 %v1706
    %v2027 = vunpack.c.h.s8.bf16 %v1707
    %v2028 = vunpack.c.h.s8.bf16 %v1708
    %v2029 = vunpack.c.l.s8.bf16 %v1709
    %v2030 = vunpack.c.l.s8.bf16 %v1710
    %v2031 = vunpack.c.l.s8.bf16 %v1711
    %v2032 = vunpack.c.l.s8.bf16 %v1712
    %v2033 = vunpack.c.l.s8.bf16 %v1713
    %v2034 = vunpack.c.l.s8.bf16 %v1714
    %v2035 = vunpack.c.l.s8.bf16 %v1715
    %v2036 = vunpack.c.l.s8.bf16 %v1716
    %v2037 = vunpack.c.h.s8.bf16 %v1709
    %v2038 = vunpack.c.h.s8.bf16 %v1710
    %v2039 = vunpack.c.h.s8.bf16 %v1711
    %v2040 = vunpack.c.h.s8.bf16 %v1712
    %v2041 = vunpack.c.h.s8.bf16 %v1713
    %v2042 = vunpack.c.h.s8.bf16 %v1714
    %v2043 = vunpack.c.h.s8.bf16 %v1715
    %v2044 = vunpack.c.h.s8.bf16 %v1716
    %v2045 = vunpack.c.l.s8.bf16 %v1717
    %v2046 = vunpack.c.l.s8.bf16 %v1718
    %v2047 = vunpack.c.l.s8.bf16 %v1719
    %v2048 = vunpack.c.l.s8.bf16 %v1720
    %v2049 = vunpack.c.l.s8.bf16 %v1721
    %v2050 = vunpack.c.l.s8.bf16 %v1722
    %v2051 = vunpack.c.l.s8.bf16 %v1723
    %v2052 = vunpack.c.l.s8.bf16 %v1724
    %v2053 = vunpack.c.h.s8.bf16 %v1717
    %v2054 = vunpack.c.h.s8.bf16 %v1718
    %v2055 = vunpack.c.h.s8.bf16 %v1719
    %v2056 = vunpack.c.h.s8.bf16 %v1720
    %v2057 = vunpack.c.h.s8.bf16 %v1721
    %v2058 = vunpack.c.h.s8.bf16 %v1722
    %v2059 = vunpack.c.h.s8.bf16 %v1723
    %v2060 = vunpack.c.h.s8.bf16 %v1724
    %v2061 = vunpack.c.l.s8.bf16 %v1725
    %v2062 = vunpack.c.l.s8.bf16 %v1726
    %v2063 = vunpack.c.l.s8.bf16 %v1727
    %v2064 = vunpack.c.l.s8.bf16 %v1728
    %v2065 = vunpack.c.l.s8.bf16 %v1729
    %v2066 = vunpack.c.l.s8.bf16 %v1730
    %v2067 = vunpack.c.l.s8.bf16 %v1731
    %v2068 = vunpack.c.l.s8.bf16 %v1732
    %v2069 = vunpack.c.h.s8.bf16 %v1725
    %v2070 = vunpack.c.h.s8.bf16 %v1726
    %v2071 = vunpack.c.h.s8.bf16 %v1727
    %v2072 = vunpack.c.h.s8.bf16 %v1728
    %v2073 = vunpack.c.h.s8.bf16 %v1729
    %v2074 = vunpack.c.h.s8.bf16 %v1730
    %v2075 = vunpack.c.h.s8.bf16 %v1731
    %v2076 = vunpack.c.h.s8.bf16 %v1732
    %v2077 = vunpack.c.l.s8.bf16 %v1733
    %v2078 = vunpack.c.l.s8.bf16 %v1734
    %v2079 = vunpack.c.l.s8.bf16 %v1735
    %v2080 = vunpack.c.l.s8.bf16 %v1736
    %v2081 = vunpack.c.l.s8.bf16 %v1737
    %v2082 = vunpack.c.l.s8.bf16 %v1738
    %v2083 = vunpack.c.l.s8.bf16 %v1739
    %v2084 = vunpack.c.l.s8.bf16 %v1740
    %v2085 = vunpack.c.h.s8.bf16 %v1733
    %v2086 = vunpack.c.h.s8.bf16 %v1734
    %v2087 = vunpack.c.h.s8.bf16 %v1735
    %v2088 = vunpack.c.h.s8.bf16 %v1736
    %v2089 = vunpack.c.h.s8.bf16 %v1737
    %v2090 = vunpack.c.h.s8.bf16 %v1738
    %v2091 = vunpack.c.h.s8.bf16 %v1739
    %v2092 = vunpack.c.h.s8.bf16 %v1740
    %v2093 = vunpack.c.l.s8.bf16 %v1741
    %v2094 = vunpack.c.l.s8.bf16 %v1742
    %v2095 = vunpack.c.l.s8.bf16 %v1743
    %v2096 = vunpack.c.l.s8.bf16 %v1744
    %v2097 = vunpack.c.l.s8.bf16 %v1745
    %v2098 = vunpack.c.l.s8.bf16 %v1746
    %v2099 = vunpack.c.l.s8.bf16 %v1747
    %v2100 = vunpack.c.l.s8.bf16 %v1748
    %v2101 = vunpack.c.h.s8.bf16 %v1741
    %v2102 = vunpack.c.h.s8.bf16 %v1742
    %v2103 = vunpack.c.h.s8.bf16 %v1743
    %v2104 = vunpack.c.h.s8.bf16 %v1744
    %v2105 = vunpack.c.h.s8.bf16 %v1745
    %v2106 = vunpack.c.h.s8.bf16 %v1746
    %v2107 = vunpack.c.h.s8.bf16 %v1747
    %v2108 = vunpack.c.h.s8.bf16 %v1748
    %v2109 = vunpack.c.l.s8.bf16 %v1749
    %v2110 = vunpack.c.l.s8.bf16 %v1750
    %v2111 = vunpack.c.l.s8.bf16 %v1751
    %v2112 = vunpack.c.l.s8.bf16 %v1752
    %v2113 = vunpack.c.l.s8.bf16 %v1753
    %v2114 = vunpack.c.l.s8.bf16 %v1754
    %v2115 = vunpack.c.l.s8.bf16 %v1755
    %v2116 = vunpack.c.l.s8.bf16 %v1756
    %v2117 = vunpack.c.h.s8.bf16 %v1749
    %v2118 = vunpack.c.h.s8.bf16 %v1750
    %v2119 = vunpack.c.h.s8.bf16 %v1751
    %v2120 = vunpack.c.h.s8.bf16 %v1752
    %v2121 = vunpack.c.h.s8.bf16 %v1753
    %v2122 = vunpack.c.h.s8.bf16 %v1754
    %v2123 = vunpack.c.h.s8.bf16 %v1755
    %v2124 = vunpack.c.h.s8.bf16 %v1756
    %v2125 = vunpack.c.l.s8.bf16 %v1757
    %v2126 = vunpack.c.l.s8.bf16 %v1758
    %v2127 = vunpack.c.l.s8.bf16 %v1759
    %v2128 = vunpack.c.l.s8.bf16 %v1760
    %v2129 = vunpack.c.l.s8.bf16 %v1761
    %v2130 = vunpack.c.l.s8.bf16 %v1762
    %v2131 = vunpack.c.l.s8.bf16 %v1763
    %v2132 = vunpack.c.l.s8.bf16 %v1764
    %v2133 = vunpack.c.h.s8.bf16 %v1757
    %v2134 = vunpack.c.h.s8.bf16 %v1758
    %v2135 = vunpack.c.h.s8.bf16 %v1759
    %v2136 = vunpack.c.h.s8.bf16 %v1760
    %v2137 = vunpack.c.h.s8.bf16 %v1761
    %v2138 = vunpack.c.h.s8.bf16 %v1762
    %v2139 = vunpack.c.h.s8.bf16 %v1763
    %v2140 = vunpack.c.h.s8.bf16 %v1764
    %v2141 = vunpack.c.l.s8.bf16 %v1765
    %v2142 = vunpack.c.l.s8.bf16 %v1766
    %v2143 = vunpack.c.l.s8.bf16 %v1767
    %v2144 = vunpack.c.l.s8.bf16 %v1768
    %v2145 = vunpack.c.l.s8.bf16 %v1769
    %v2146 = vunpack.c.l.s8.bf16 %v1770
    %v2147 = vunpack.c.l.s8.bf16 %v1771
    %v2148 = vunpack.c.l.s8.bf16 %v1772
    %v2149 = vunpack.c.h.s8.bf16 %v1765
    %v2150 = vunpack.c.h.s8.bf16 %v1766
    %v2151 = vunpack.c.h.s8.bf16 %v1767
    %v2152 = vunpack.c.h.s8.bf16 %v1768
    %v2153 = vunpack.c.h.s8.bf16 %v1769
    %v2154 = vunpack.c.h.s8.bf16 %v1770
    %v2155 = vunpack.c.h.s8.bf16 %v1771
    %v2156 = vunpack.c.h.s8.bf16 %v1772
    %v2157 = vunpack.c.l.s8.bf16 %v1773
    %v2158 = vunpack.c.l.s8.bf16 %v1774
    %v2159 = vunpack.c.l.s8.bf16 %v1775
    %v2160 = vunpack.c.l.s8.bf16 %v1776
    %v2161 = vunpack.c.l.s8.bf16 %v1777
    %v2162 = vunpack.c.l.s8.bf16 %v1778
    %v2163 = vunpack.c.l.s8.bf16 %v1779
    %v2164 = vunpack.c.l.s8.bf16 %v1780
    %v2165 = vunpack.c.h.s8.bf16 %v1773
    %v2166 = vunpack.c.h.s8.bf16 %v1774
    %v2167 = vunpack.c.h.s8.bf16 %v1775
    %v2168 = vunpack.c.h.s8.bf16 %v1776
    %v2169 = vunpack.c.h.s8.bf16 %v1777
    %v2170 = vunpack.c.h.s8.bf16 %v1778
    %v2171 = vunpack.c.h.s8.bf16 %v1779
    %v2172 = vunpack.c.h.s8.bf16 %v1780
    %v2173 = vunpack.c.l.s8.bf16 %v1781
    %v2174 = vunpack.c.l.s8.bf16 %v1782
    %v2175 = vunpack.c.l.s8.bf16 %v1783
    %v2176 = vunpack.c.l.s8.bf16 %v1784
    %v2177 = vunpack.c.l.s8.bf16 %v1785
    %v2178 = vunpack.c.l.s8.bf16 %v1786
    %v2179 = vunpack.c.l.s8.bf16 %v1787
    %v2180 = vunpack.c.l.s8.bf16 %v1788
    %v2181 = vunpack.c.h.s8.bf16 %v1781
    %v2182 = vunpack.c.h.s8.bf16 %v1782
    %v2183 = vunpack.c.h.s8.bf16 %v1783
    %v2184 = vunpack.c.h.s8.bf16 %v1784
    %v2185 = vunpack.c.h.s8.bf16 %v1785
    %v2186 = vunpack.c.h.s8.bf16 %v1786
    %v2187 = vunpack.c.h.s8.bf16 %v1787
    %v2188 = vunpack.c.h.s8.bf16 %v1788
    %v2189 = vunpack.c.l.s8.bf16 %v1789
    %v2190 = vunpack.c.l.s8.bf16 %v1790
    %v2191 = vunpack.c.l.s8.bf16 %v1791
    %v2192 = vunpack.c.l.s8.bf16 %v1792
    %v2193 = vunpack.c.l.s8.bf16 %v1793
    %v2194 = vunpack.c.l.s8.bf16 %v1794
    %v2195 = vunpack.c.l.s8.bf16 %v1795
    %v2196 = vunpack.c.l.s8.bf16 %v1796
    %v2197 = vunpack.c.h.s8.bf16 %v1789
    %v2198 = vunpack.c.h.s8.bf16 %v1790
    %v2199 = vunpack.c.h.s8.bf16 %v1791
    %v2200 = vunpack.c.h.s8.bf16 %v1792
    %v2201 = vunpack.c.h.s8.bf16 %v1793
    %v2202 = vunpack.c.h.s8.bf16 %v1794
    %v2203 = vunpack.c.h.s8.bf16 %v1795
    %v2204 = vunpack.c.h.s8.bf16 %v1796
    %v2205 = vunpack.c.l.s8.bf16 %v1797
    %v2206 = vunpack.c.l.s8.bf16 %v1798
    %v2207 = vunpack.c.l.s8.bf16 %v1799
    %v2208 = vunpack.c.l.s8.bf16 %v1800
    %v2209 = vunpack.c.l.s8.bf16 %v1801
    %v2210 = vunpack.c.l.s8.bf16 %v1802
    %v2211 = vunpack.c.l.s8.bf16 %v1803
    %v2212 = vunpack.c.l.s8.bf16 %v1804
    %v2213 = vunpack.c.h.s8.bf16 %v1797
    %v2214 = vunpack.c.h.s8.bf16 %v1798
    %v2215 = vunpack.c.h.s8.bf16 %v1799
    %v2216 = vunpack.c.h.s8.bf16 %v1800
    %v2217 = vunpack.c.h.s8.bf16 %v1801
    %v2218 = vunpack.c.h.s8.bf16 %v1802
    %v2219 = vunpack.c.h.s8.bf16 %v1803
    %v2220 = vunpack.c.h.s8.bf16 %v1804
    %v2221 = vunpack.c.l.s8.bf16 %v1805
    %v2222 = vunpack.c.l.s8.bf16 %v1806
    %v2223 = vunpack.c.l.s8.bf16 %v1807
    %v2224 = vunpack.c.l.s8.bf16 %v1808
    %v2225 = vunpack.c.l.s8.bf16 %v1809
    %v2226 = vunpack.c.l.s8.bf16 %v1810
    %v2227 = vunpack.c.l.s8.bf16 %v1811
    %v2228 = vunpack.c.l.s8.bf16 %v1812
    %v2229 = vunpack.c.h.s8.bf16 %v1805
    %v2230 = vunpack.c.h.s8.bf16 %v1806
    %v2231 = vunpack.c.h.s8.bf16 %v1807
    %v2232 = vunpack.c.h.s8.bf16 %v1808
    %v2233 = vunpack.c.h.s8.bf16 %v1809
    %v2234 = vunpack.c.h.s8.bf16 %v1810
    %v2235 = vunpack.c.h.s8.bf16 %v1811
    %v2236 = vunpack.c.h.s8.bf16 %v1812
    %v2237 = vunpack.c.l.s8.bf16 %v1813
    %v2238 = vunpack.c.l.s8.bf16 %v1814
    %v2239 = vunpack.c.l.s8.bf16 %v1815
    %v2240 = vunpack.c.l.s8.bf16 %v1816
    %v2241 = vunpack.c.l.s8.bf16 %v1817
    %v2242 = vunpack.c.l.s8.bf16 %v1818
    %v2243 = vunpack.c.l.s8.bf16 %v1819
    %v2244 = vunpack.c.l.s8.bf16 %v1820
    %v2245 = vunpack.c.h.s8.bf16 %v1813
    %v2246 = vunpack.c.h.s8.bf16 %v1814
    %v2247 = vunpack.c.h.s8.bf16 %v1815
    %v2248 = vunpack.c.h.s8.bf16 %v1816
    %v2249 = vunpack.c.h.s8.bf16 %v1817
    %v2250 = vunpack.c.h.s8.bf16 %v1818
    %v2251 = vunpack.c.h.s8.bf16 %v1819
    %v2252 = vunpack.c.h.s8.bf16 %v1820
    %v2253 = vunpack.c.l.s8.bf16 %v1821
    %v2254 = vunpack.c.l.s8.bf16 %v1822
    %v2255 = vunpack.c.l.s8.bf16 %v1823
    %v2256 = vunpack.c.l.s8.bf16 %v1824
    %v2257 = vunpack.c.l.s8.bf16 %v1825
    %v2258 = vunpack.c.l.s8.bf16 %v1826
    %v2259 = vunpack.c.l.s8.bf16 %v1827
    %v2260 = vunpack.c.l.s8.bf16 %v1828
    %v2261 = vunpack.c.h.s8.bf16 %v1821
    %v2262 = vunpack.c.h.s8.bf16 %v1822
    %v2263 = vunpack.c.h.s8.bf16 %v1823
    %v2264 = vunpack.c.h.s8.bf16 %v1824
    %v2265 = vunpack.c.h.s8.bf16 %v1825
    %v2266 = vunpack.c.h.s8.bf16 %v1826
    %v2267 = vunpack.c.h.s8.bf16 %v1827
    %v2268 = vunpack.c.h.s8.bf16 %v1828
    %v2269 = vunpack.c.l.s8.bf16 %v1829
    %v2270 = vunpack.c.l.s8.bf16 %v1830
    %v2271 = vunpack.c.l.s8.bf16 %v1831
    %v2272 = vunpack.c.l.s8.bf16 %v1832
    %v2273 = vunpack.c.l.s8.bf16 %v1833
    %v2274 = vunpack.c.l.s8.bf16 %v1834
    %v2275 = vunpack.c.l.s8.bf16 %v1835
    %v2276 = vunpack.c.l.s8.bf16 %v1836
    %v2277 = vunpack.c.h.s8.bf16 %v1829
    %v2278 = vunpack.c.h.s8.bf16 %v1830
    %v2279 = vunpack.c.h.s8.bf16 %v1831
    %v2280 = vunpack.c.h.s8.bf16 %v1832
    %v2281 = vunpack.c.h.s8.bf16 %v1833
    %v2282 = vunpack.c.h.s8.bf16 %v1834
    %v2283 = vunpack.c.h.s8.bf16 %v1835
    %v2284 = vunpack.c.h.s8.bf16 %v1836
    %v2285 = vunpack.c.l.s8.bf16 %v1837
    %v2286 = vunpack.c.l.s8.bf16 %v1838
    %v2287 = vunpack.c.l.s8.bf16 %v1839
    %v2288 = vunpack.c.l.s8.bf16 %v1840
    %v2289 = vunpack.c.l.s8.bf16 %v1841
    %v2290 = vunpack.c.l.s8.bf16 %v1842
    %v2291 = vunpack.c.l.s8.bf16 %v1843
    %v2292 = vunpack.c.l.s8.bf16 %v1844
    %v2293 = vunpack.c.h.s8.bf16 %v1837
    %v2294 = vunpack.c.h.s8.bf16 %v1838
    %v2295 = vunpack.c.h.s8.bf16 %v1839
    %v2296 = vunpack.c.h.s8.bf16 %v1840
    %v2297 = vunpack.c.h.s8.bf16 %v1841
    %v2298 = vunpack.c.h.s8.bf16 %v1842
    %v2299 = vunpack.c.h.s8.bf16 %v1843
    %v2300 = vunpack.c.h.s8.bf16 %v1844
    %v2301 = vunpack.c.l.s8.bf16 %v1845
    %v2302 = vunpack.c.l.s8.bf16 %v1846
    %v2303 = vunpack.c.l.s8.bf16 %v1847
    %v2304 = vunpack.c.l.s8.bf16 %v1848
    %v2305 = vunpack.c.l.s8.bf16 %v1849
    %v2306 = vunpack.c.l.s8.bf16 %v1850
    %v2307 = vunpack.c.l.s8.bf16 %v1851
    %v2308 = vunpack.c.l.s8.bf16 %v1852
    %v2309 = vunpack.c.h.s8.bf16 %v1845
    %v2310 = vunpack.c.h.s8.bf16 %v1846
    %v2311 = vunpack.c.h.s8.bf16 %v1847
    %v2312 = vunpack.c.h.s8.bf16 %v1848
    %v2313 = vunpack.c.h.s8.bf16 %v1849
    %v2314 = vunpack.c.h.s8.bf16 %v1850
    %v2315 = vunpack.c.h.s8.bf16 %v1851
    %v2316 = vunpack.c.h.s8.bf16 %v1852
    %v2317 = vunpack.c.l.s8.bf16 %v1853
    %v2318 = vunpack.c.l.s8.bf16 %v1854
    %v2319 = vunpack.c.l.s8.bf16 %v1855
    %v2320 = vunpack.c.l.s8.bf16 %v1856
    %v2321 = vunpack.c.l.s8.bf16 %v1857
    %v2322 = vunpack.c.l.s8.bf16 %v1858
    %v2323 = vunpack.c.l.s8.bf16 %v1859
    %v2324 = vunpack.c.l.s8.bf16 %v1860
    %v2325 = vunpack.c.h.s8.bf16 %v1853
    %v2326 = vunpack.c.h.s8.bf16 %v1854
    %v2327 = vunpack.c.h.s8.bf16 %v1855
    %v2328 = vunpack.c.h.s8.bf16 %v1856
    %v2329 = vunpack.c.h.s8.bf16 %v1857
    %v2330 = vunpack.c.h.s8.bf16 %v1858
    %v2331 = vunpack.c.h.s8.bf16 %v1859
    %v2332 = vunpack.c.h.s8.bf16 %v1860
    %v2333 = vunpack.c.l.s8.bf16 %v1861
    %v2334 = vunpack.c.l.s8.bf16 %v1862
    %v2335 = vunpack.c.l.s8.bf16 %v1863
    %v2336 = vunpack.c.l.s8.bf16 %v1864
    %v2337 = vunpack.c.l.s8.bf16 %v1865
    %v2338 = vunpack.c.l.s8.bf16 %v1866
    %v2339 = vunpack.c.l.s8.bf16 %v1867
    %v2340 = vunpack.c.l.s8.bf16 %v1868
    %v2341 = vunpack.c.h.s8.bf16 %v1861
    %v2342 = vunpack.c.h.s8.bf16 %v1862
    %v2343 = vunpack.c.h.s8.bf16 %v1863
    %v2344 = vunpack.c.h.s8.bf16 %v1864
    %v2345 = vunpack.c.h.s8.bf16 %v1865
    %v2346 = vunpack.c.h.s8.bf16 %v1866
    %v2347 = vunpack.c.h.s8.bf16 %v1867
    %v2348 = vunpack.c.h.s8.bf16 %v1868
    %v2349 = vunpack.c.l.s8.bf16 %v1869
    %v2350 = vunpack.c.l.s8.bf16 %v1870
    %v2351 = vunpack.c.l.s8.bf16 %v1871
    %v2352 = vunpack.c.l.s8.bf16 %v1872
    %v2353 = vunpack.c.l.s8.bf16 %v1873
    %v2354 = vunpack.c.l.s8.bf16 %v1874
    %v2355 = vunpack.c.l.s8.bf16 %v1875
    %v2356 = vunpack.c.l.s8.bf16 %v1876
    %v2357 = vunpack.c.h.s8.bf16 %v1869
    %v2358 = vunpack.c.h.s8.bf16 %v1870
    %v2359 = vunpack.c.h.s8.bf16 %v1871
    %v2360 = vunpack.c.h.s8.bf16 %v1872
    %v2361 = vunpack.c.h.s8.bf16 %v1873
    %v2362 = vunpack.c.h.s8.bf16 %v1874
    %v2363 = vunpack.c.h.s8.bf16 %v1875
    %v2364 = vunpack.c.h.s8.bf16 %v1876
    %v2365 = vunpack.c.l.s8.bf16 %v1877
    %v2366 = vunpack.c.l.s8.bf16 %v1878
    %v2367 = vunpack.c.l.s8.bf16 %v1879
    %v2368 = vunpack.c.l.s8.bf16 %v1880
    %v2369 = vunpack.c.l.s8.bf16 %v1881
    %v2370 = vunpack.c.l.s8.bf16 %v1882
    %v2371 = vunpack.c.l.s8.bf16 %v1883
    %v2372 = vunpack.c.l.s8.bf16 %v1884
    %v2373 = vunpack.c.h.s8.bf16 %v1877
    %v2374 = vunpack.c.h.s8.bf16 %v1878
    %v2375 = vunpack.c.h.s8.bf16 %v1879
    %v2376 = vunpack.c.h.s8.bf16 %v1880
    %v2377 = vunpack.c.h.s8.bf16 %v1881
    %v2378 = vunpack.c.h.s8.bf16 %v1882
    %v2379 = vunpack.c.h.s8.bf16 %v1883
    %v2380 = vunpack.c.h.s8.bf16 %v1884
    %v2381 = vunpack.c.l.s8.bf16 %v1885
    %v2382 = vunpack.c.l.s8.bf16 %v1886
    %v2383 = vunpack.c.l.s8.bf16 %v1887
    %v2384 = vunpack.c.l.s8.bf16 %v1888
    %v2385 = vunpack.c.l.s8.bf16 %v1889
    %v2386 = vunpack.c.l.s8.bf16 %v1890
    %v2387 = vunpack.c.l.s8.bf16 %v1891
    %v2388 = vunpack.c.l.s8.bf16 %v1892
    %v2389 = vunpack.c.h.s8.bf16 %v1885
    %v2390 = vunpack.c.h.s8.bf16 %v1886
    %v2391 = vunpack.c.h.s8.bf16 %v1887
    %v2392 = vunpack.c.h.s8.bf16 %v1888
    %v2393 = vunpack.c.h.s8.bf16 %v1889
    %v2394 = vunpack.c.h.s8.bf16 %v1890
    %v2395 = vunpack.c.h.s8.bf16 %v1891
    %v2396 = vunpack.c.h.s8.bf16 %v1892
    %v2397 = vunpack.c.l.s8.bf16 %v1893
    %v2398 = vunpack.c.l.s8.bf16 %v1894
    %v2399 = vunpack.c.l.s8.bf16 %v1895
    %v2400 = vunpack.c.l.s8.bf16 %v1896
    %v2401 = vunpack.c.l.s8.bf16 %v1897
    %v2402 = vunpack.c.l.s8.bf16 %v1898
    %v2403 = vunpack.c.l.s8.bf16 %v1899
    %v2404 = vunpack.c.l.s8.bf16 %v1900
    %v2405 = vunpack.c.h.s8.bf16 %v1893
    %v2406 = vunpack.c.h.s8.bf16 %v1894
    %v2407 = vunpack.c.h.s8.bf16 %v1895
    %v2408 = vunpack.c.h.s8.bf16 %v1896
    %v2409 = vunpack.c.h.s8.bf16 %v1897
    %v2410 = vunpack.c.h.s8.bf16 %v1898
    %v2411 = vunpack.c.h.s8.bf16 %v1899
    %v2412 = vunpack.c.h.s8.bf16 %v1900
    %2413 = vmatprep.subr.bf16.mxu0 %v1958
    %2414 = vmatpush1.bf16.msra.mxu0 %v1957
    %2415 = vmatprep.subr.bf16.mxu0 %v1950
    %2416 = vmatpush1.bf16.msra.mxu0 %v1949
    %2417 = vmatprep.subr.bf16.mxu0 %v1942
    %2418 = vmatpush1.bf16.msra.mxu0 %v1941
    %2419 = vmatprep.subr.bf16.mxu0 %v1934
    %2420 = vmatpush1.bf16.msra.mxu0 %v1933
    %2421 = vmatprep.subr.bf16.mxu0 %v1926
    %2422 = vmatpush1.bf16.msra.mxu0 %v1925
    %2423 = vmatprep.subr.bf16.mxu0 %v1918
    %2424 = vmatpush1.bf16.msra.mxu0 %v1917
    %2425 = vmatprep.subr.bf16.mxu0 %v1910
    %2426 = vmatpush1.bf16.msra.mxu0 %v1909
    %2427 = vmatprep.subr.bf16.mxu0 %v1902
    %2428 = vmatpush1.bf16.msra.mxu0 %v1901
    %2429 = vmatprep.subr.bf16.mxu0 %v2022
    %2430 = vmatpush2.bf16.msra.mxu0 %v2021
    %2431 = vmatprep.subr.bf16.mxu0 %v2014
    %2432 = vmatpush2.bf16.msra.mxu0 %v2013
    %2433 = vmatprep.subr.bf16.mxu0 %v2006
    %2434 = vmatpush2.bf16.msra.mxu0 %v2005
    %2435 = vmatprep.subr.bf16.mxu0 %v1998
    %2436 = vmatpush2.bf16.msra.mxu0 %v1997
    %2437 = vmatprep.subr.bf16.mxu0 %v1990
    %2438 = vmatpush2.bf16.msra.mxu0 %v1989
    %2439 = vmatprep.subr.bf16.mxu0 %v1982
    %2440 = vmatpush2.bf16.msra.mxu0 %v1981
    %2441 = vmatprep.subr.bf16.mxu0 %v1974
    %2442 = vmatpush2.bf16.msra.mxu0 %v1973
    %2443 = vmatprep.subr.bf16.mxu0 %v1966
    %2444 = vmatpush2.bf16.msra.mxu0 %v1965
    %2445 = vmatprep.mubr.bf16.mxu0 %v1637
    %2446 = vmatmul.mubr.bf16.gmra.mxu0 %v1636
    %v2447 = vpop.f32.mrf.mxu0
    %v2448 = vadd.f32 0.0, %v2447
    %v2449 = vpop.f32.mrf.mxu0
    %v2450 = vadd.f32 0.0, %v2449
    %v2451 = vpop.f32.mrf.mxu0
    %v2452 = vpop.f32.mrf.mxu0
    %2453 = vdwg.mxu0
    %2454 = vmatprep.subr.bf16.mxu0 %v2086
    %2455 = vmatpush1.bf16.msra.mxu0 %v2085
    %2456 = vmatprep.subr.bf16.mxu0 %v2078
    %2457 = vmatpush1.bf16.msra.mxu0 %v2077
    %2458 = vmatprep.subr.bf16.mxu0 %v2070
    %2459 = vmatpush1.bf16.msra.mxu0 %v2069
    %2460 = vmatprep.subr.bf16.mxu0 %v2062
    %2461 = vmatpush1.bf16.msra.mxu0 %v2061
    %2462 = vmatprep.subr.bf16.mxu0 %v2054
    %2463 = vmatpush1.bf16.msra.mxu0 %v2053
    %2464 = vmatprep.subr.bf16.mxu0 %v2046
    %2465 = vmatpush1.bf16.msra.mxu0 %v2045
    %2466 = vmatprep.subr.bf16.mxu0 %v2038
    %2467 = vmatpush1.bf16.msra.mxu0 %v2037
    %2468 = vmatprep.subr.bf16.mxu0 %v2030
    %2469 = vmatpush1.bf16.msra.mxu0 %v2029
    %2470 = vmatprep.subr.bf16.mxu0 %v2150
    %2471 = vmatpush2.bf16.msra.mxu0 %v2149
    %2472 = vmatprep.subr.bf16.mxu0 %v2142
    %2473 = vmatpush2.bf16.msra.mxu0 %v2141
    %2474 = vmatprep.subr.bf16.mxu0 %v2134
    %2475 = vmatpush2.bf16.msra.mxu0 %v2133
    %2476 = vmatprep.subr.bf16.mxu0 %v2126
    %2477 = vmatpush2.bf16.msra.mxu0 %v2125
    %2478 = vmatprep.subr.bf16.mxu0 %v2118
    %2479 = vmatpush2.bf16.msra.mxu0 %v2117
    %2480 = vmatprep.subr.bf16.mxu0 %v2110
    %2481 = vmatpush2.bf16.msra.mxu0 %v2109
    %2482 = vmatprep.subr.bf16.mxu0 %v2102
    %2483 = vmatpush2.bf16.msra.mxu0 %v2101
    %2484 = vmatprep.subr.bf16.mxu0 %v2094
    %2485 = vmatpush2.bf16.msra.mxu0 %v2093
    %2486 = vmatprep.mubr.bf16.mxu0 %v1639
    %2487 = vmatmul.mubr.bf16.gmra.mxu0 %v1638
    %v2488 = vpop.f32.mrf.mxu0
    %v2489 = vadd.f32 %v2448, %v2488
    %v2490 = vpop.f32.mrf.mxu0
    %v2491 = vadd.f32 %v2450, %v2490
    %v2492 = vpop.f32.mrf.mxu0
    %v2493 = vpop.f32.mrf.mxu0
    %2494 = vdwg.mxu0
    %2495 = vmatprep.subr.bf16.mxu0 %v2214
    %2496 = vmatpush1.bf16.msra.mxu0 %v2213
    %2497 = vmatprep.subr.bf16.mxu0 %v2206
    %2498 = vmatpush1.bf16.msra.mxu0 %v2205
    %2499 = vmatprep.subr.bf16.mxu0 %v2198
    %2500 = vmatpush1.bf16.msra.mxu0 %v2197
    %2501 = vmatprep.subr.bf16.mxu0 %v2190
    %2502 = vmatpush1.bf16.msra.mxu0 %v2189
    %2503 = vmatprep.subr.bf16.mxu0 %v2182
    %2504 = vmatpush1.bf16.msra.mxu0 %v2181
    %2505 = vmatprep.subr.bf16.mxu0 %v2174
    %2506 = vmatpush1.bf16.msra.mxu0 %v2173
    %2507 = vmatprep.subr.bf16.mxu0 %v2166
    %2508 = vmatpush1.bf16.msra.mxu0 %v2165
    %2509 = vmatprep.subr.bf16.mxu0 %v2158
    %2510 = vmatpush1.bf16.msra.mxu0 %v2157
    %2511 = vmatprep.subr.bf16.mxu0 %v2278
    %2512 = vmatpush2.bf16.msra.mxu0 %v2277
    %2513 = vmatprep.subr.bf16.mxu0 %v2270
    %2514 = vmatpush2.bf16.msra.mxu0 %v2269
    %2515 = vmatprep.subr.bf16.mxu0 %v2262
    %2516 = vmatpush2.bf16.msra.mxu0 %v2261
    %2517 = vmatprep.subr.bf16.mxu0 %v2254
    %2518 = vmatpush2.bf16.msra.mxu0 %v2253
    %2519 = vmatprep.subr.bf16.mxu0 %v2246
    %2520 = vmatpush2.bf16.msra.mxu0 %v2245
    %2521 = vmatprep.subr.bf16.mxu0 %v2238
    %2522 = vmatpush2.bf16.msra.mxu0 %v2237
    %2523 = vmatprep.subr.bf16.mxu0 %v2230
    %2524 = vmatpush2.bf16.msra.mxu0 %v2229
    %2525 = vmatprep.subr.bf16.mxu0 %v2222
    %2526 = vmatpush2.bf16.msra.mxu0 %v2221
    %2527 = vmatprep.mubr.bf16.mxu0 %v1641
    %2528 = vmatmul.mubr.bf16.gmra.mxu0 %v1640
    %v2529 = vpop.f32.mrf.mxu0
    %v2530 = vadd.f32 %v2489, %v2529
    %v2531 = vpop.f32.mrf.mxu0
    %v2532 = vadd.f32 %v2491, %v2531
    %v2533 = vpop.f32.mrf.mxu0
    %v2534 = vpop.f32.mrf.mxu0
    %2535 = vdwg.mxu0
    %2536 = vmatprep.subr.bf16.mxu0 %v2342
    %2537 = vmatpush1.bf16.msra.mxu0 %v2341
    %2538 = vmatprep.subr.bf16.mxu0 %v2334
    %2539 = vmatpush1.bf16.msra.mxu0 %v2333
    %2540 = vmatprep.subr.bf16.mxu0 %v2326
    %2541 = vmatpush1.bf16.msra.mxu0 %v2325
    %2542 = vmatprep.subr.bf16.mxu0 %v2318
    %2543 = vmatpush1.bf16.msra.mxu0 %v2317
    %2544 = vmatprep.subr.bf16.mxu0 %v2310
    %2545 = vmatpush1.bf16.msra.mxu0 %v2309
    %2546 = vmatprep.subr.bf16.mxu0 %v2302
    %2547 = vmatpush1.bf16.msra.mxu0 %v2301
    %2548 = vmatprep.subr.bf16.mxu0 %v2294
    %2549 = vmatpush1.bf16.msra.mxu0 %v2293
    %2550 = vmatprep.subr.bf16.mxu0 %v2286
    %2551 = vmatpush1.bf16.msra.mxu0 %v2285
    %2552 = vmatprep.subr.bf16.mxu0 %v2406
    %2553 = vmatpush2.bf16.msra.mxu0 %v2405
    %2554 = vmatprep.subr.bf16.mxu0 %v2398
    %2555 = vmatpush2.bf16.msra.mxu0 %v2397
    %2556 = vmatprep.subr.bf16.mxu0 %v2390
    %2557 = vmatpush2.bf16.msra.mxu0 %v2389
    %2558 = vmatprep.subr.bf16.mxu0 %v2382
    %2559 = vmatpush2.bf16.msra.mxu0 %v2381
    %2560 = vmatprep.subr.bf16.mxu0 %v2374
    %2561 = vmatpush2.bf16.msra.mxu0 %v2373
    %2562 = vmatprep.subr.bf16.mxu0 %v2366
    %2563 = vmatpush2.bf16.msra.mxu0 %v2365
    %2564 = vmatprep.subr.bf16.mxu0 %v2358
    %2565 = vmatpush2.bf16.msra.mxu0 %v2357
    %2566 = vmatprep.subr.bf16.mxu0 %v2350
    %2567 = vmatpush2.bf16.msra.mxu0 %v2349
    %2568 = vmatprep.mubr.bf16.mxu0 %v1643
    %2569 = vmatmul.mubr.bf16.gmra.mxu0 %v1642
    %v2570 = vpop.f32.mrf.mxu0
    %v2571 = vadd.f32 %v2530, %v2570
    %v2572 = vpop.f32.mrf.mxu0
    %v2573 = vadd.f32 %v2532, %v2572
    %v2574 = vpop.f32.mrf.mxu0
    %v2575 = vpop.f32.mrf.mxu0
    %2576 = vdwg.mxu0
    %2577 = vmatprep.subr.bf16.mxu0 %v1960
    %2578 = vmatpush1.bf16.msra.mxu0 %v1959
    %2579 = vmatprep.subr.bf16.mxu0 %v1952
    %2580 = vmatpush1.bf16.msra.mxu0 %v1951
    %2581 = vmatprep.subr.bf16.mxu0 %v1944
    %2582 = vmatpush1.bf16.msra.mxu0 %v1943
    %2583 = vmatprep.subr.bf16.mxu0 %v1936
    %2584 = vmatpush1.bf16.msra.mxu0 %v1935
    %2585 = vmatprep.subr.bf16.mxu0 %v1928
    %2586 = vmatpush1.bf16.msra.mxu0 %v1927
    %2587 = vmatprep.subr.bf16.mxu0 %v1920
    %2588 = vmatpush1.bf16.msra.mxu0 %v1919
    %2589 = vmatprep.subr.bf16.mxu0 %v1912
    %2590 = vmatpush1.bf16.msra.mxu0 %v1911
    %2591 = vmatprep.subr.bf16.mxu0 %v1904
    %2592 = vmatpush1.bf16.msra.mxu0 %v1903
    %2593 = vmatprep.subr.bf16.mxu0 %v2024
    %2594 = vmatpush2.bf16.msra.mxu0 %v2023
    %2595 = vmatprep.subr.bf16.mxu0 %v2016
    %2596 = vmatpush2.bf16.msra.mxu0 %v2015
    %2597 = vmatprep.subr.bf16.mxu0 %v2008
    %2598 = vmatpush2.bf16.msra.mxu0 %v2007
    %2599 = vmatprep.subr.bf16.mxu0 %v2000
    %2600 = vmatpush2.bf16.msra.mxu0 %v1999
    %2601 = vmatprep.subr.bf16.mxu0 %v1992
    %2602 = vmatpush2.bf16.msra.mxu0 %v1991
    %2603 = vmatprep.subr.bf16.mxu0 %v1984
    %2604 = vmatpush2.bf16.msra.mxu0 %v1983
    %2605 = vmatprep.subr.bf16.mxu0 %v1976
    %2606 = vmatpush2.bf16.msra.mxu0 %v1975
    %2607 = vmatprep.subr.bf16.mxu0 %v1968
    %2608 = vmatpush2.bf16.msra.mxu0 %v1967
    %2609 = vmatprep.mubr.bf16.mxu0 %v1637
    %2610 = vmatmul.mubr.bf16.gmra.mxu0 %v1636
    %v2611 = vpop.f32.mrf.mxu0
    %v2612 = vadd.f32 0.0, %v2611
    %v2613 = vpop.f32.mrf.mxu0
    %v2614 = vadd.f32 0.0, %v2613
    %v2615 = vpop.f32.mrf.mxu0
    %v2616 = vpop.f32.mrf.mxu0
    %2617 = vdwg.mxu0
    %2618 = vmatprep.subr.bf16.mxu0 %v2088
    %2619 = vmatpush1.bf16.msra.mxu0 %v2087
    %2620 = vmatprep.subr.bf16.mxu0 %v2080
    %2621 = vmatpush1.bf16.msra.mxu0 %v2079
    %2622 = vmatprep.subr.bf16.mxu0 %v2072
    %2623 = vmatpush1.bf16.msra.mxu0 %v2071
    %2624 = vmatprep.subr.bf16.mxu0 %v2064
    %2625 = vmatpush1.bf16.msra.mxu0 %v2063
    %2626 = vmatprep.subr.bf16.mxu0 %v2056
    %2627 = vmatpush1.bf16.msra.mxu0 %v2055
    %2628 = vmatprep.subr.bf16.mxu0 %v2048
    %2629 = vmatpush1.bf16.msra.mxu0 %v2047
    %2630 = vmatprep.subr.bf16.mxu0 %v2040
    %2631 = vmatpush1.bf16.msra.mxu0 %v2039
    %2632 = vmatprep.subr.bf16.mxu0 %v2032
    %2633 = vmatpush1.bf16.msra.mxu0 %v2031
    %2634 = vmatprep.subr.bf16.mxu0 %v2152
    %2635 = vmatpush2.bf16.msra.mxu0 %v2151
    %2636 = vmatprep.subr.bf16.mxu0 %v2144
    %2637 = vmatpush2.bf16.msra.mxu0 %v2143
    %2638 = vmatprep.subr.bf16.mxu0 %v2136
    %2639 = vmatpush2.bf16.msra.mxu0 %v2135
    %2640 = vmatprep.subr.bf16.mxu0 %v2128
    %2641 = vmatpush2.bf16.msra.mxu0 %v2127
    %2642 = vmatprep.subr.bf16.mxu0 %v2120
    %2643 = vmatpush2.bf16.msra.mxu0 %v2119
    %2644 = vmatprep.subr.bf16.mxu0 %v2112
    %2645 = vmatpush2.bf16.msra.mxu0 %v2111
    %2646 = vmatprep.subr.bf16.mxu0 %v2104
    %2647 = vmatpush2.bf16.msra.mxu0 %v2103
    %2648 = vmatprep.subr.bf16.mxu0 %v2096
    %2649 = vmatpush2.bf16.msra.mxu0 %v2095
    %2650 = vmatprep.mubr.bf16.mxu0 %v1639
    %2651 = vmatmul.mubr.bf16.gmra.mxu0 %v1638
    %v2652 = vpop.f32.mrf.mxu0
    %v2653 = vadd.f32 %v2612, %v2652
    %v2654 = vpop.f32.mrf.mxu0
    %v2655 = vadd.f32 %v2614, %v2654
    %v2656 = vpop.f32.mrf.mxu0
    %v2657 = vpop.f32.mrf.mxu0
    %2658 = vdwg.mxu0
    %2659 = vmatprep.subr.bf16.mxu0 %v2216
    %2660 = vmatpush1.bf16.msra.mxu0 %v2215
    %2661 = vmatprep.subr.bf16.mxu0 %v2208
    %2662 = vmatpush1.bf16.msra.mxu0 %v2207
    %2663 = vmatprep.subr.bf16.mxu0 %v2200
    %2664 = vmatpush1.bf16.msra.mxu0 %v2199
    %2665 = vmatprep.subr.bf16.mxu0 %v2192
    %2666 = vmatpush1.bf16.msra.mxu0 %v2191
    %2667 = vmatprep.subr.bf16.mxu0 %v2184
    %2668 = vmatpush1.bf16.msra.mxu0 %v2183
    %2669 = vmatprep.subr.bf16.mxu0 %v2176
    %2670 = vmatpush1.bf16.msra.mxu0 %v2175
    %2671 = vmatprep.subr.bf16.mxu0 %v2168
    %2672 = vmatpush1.bf16.msra.mxu0 %v2167
    %2673 = vmatprep.subr.bf16.mxu0 %v2160
    %2674 = vmatpush1.bf16.msra.mxu0 %v2159
    %2675 = vmatprep.subr.bf16.mxu0 %v2280
    %2676 = vmatpush2.bf16.msra.mxu0 %v2279
    %2677 = vmatprep.subr.bf16.mxu0 %v2272
    %2678 = vmatpush2.bf16.msra.mxu0 %v2271
    %2679 = vmatprep.subr.bf16.mxu0 %v2264
    %2680 = vmatpush2.bf16.msra.mxu0 %v2263
    %2681 = vmatprep.subr.bf16.mxu0 %v2256
    %2682 = vmatpush2.bf16.msra.mxu0 %v2255
    %2683 = vmatprep.subr.bf16.mxu0 %v2248
    %2684 = vmatpush2.bf16.msra.mxu0 %v2247
    %2685 = vmatprep.subr.bf16.mxu0 %v2240
    %2686 = vmatpush2.bf16.msra.mxu0 %v2239
    %2687 = vmatprep.subr.bf16.mxu0 %v2232
    %2688 = vmatpush2.bf16.msra.mxu0 %v2231
    %2689 = vmatprep.subr.bf16.mxu0 %v2224
    %2690 = vmatpush2.bf16.msra.mxu0 %v2223
    %2691 = vmatprep.mubr.bf16.mxu0 %v1641
    %2692 = vmatmul.mubr.bf16.gmra.mxu0 %v1640
    %v2693 = vpop.f32.mrf.mxu0
    %v2694 = vadd.f32 %v2653, %v2693
    %v2695 = vpop.f32.mrf.mxu0
    %v2696 = vadd.f32 %v2655, %v2695
    %v2697 = vpop.f32.mrf.mxu0
    %v2698 = vpop.f32.mrf.mxu0
    %2699 = vdwg.mxu0
    %2700 = vmatprep.subr.bf16.mxu0 %v2344
    %2701 = vmatpush1.bf16.msra.mxu0 %v2343
    %2702 = vmatprep.subr.bf16.mxu0 %v2336
    %2703 = vmatpush1.bf16.msra.mxu0 %v2335
    %2704 = vmatprep.subr.bf16.mxu0 %v2328
    %2705 = vmatpush1.bf16.msra.mxu0 %v2327
    %2706 = vmatprep.subr.bf16.mxu0 %v2320
    %2707 = vmatpush1.bf16.msra.mxu0 %v2319
    %2708 = vmatprep.subr.bf16.mxu0 %v2312
    %2709 = vmatpush1.bf16.msra.mxu0 %v2311
    %2710 = vmatprep.subr.bf16.mxu0 %v2304
    %2711 = vmatpush1.bf16.msra.mxu0 %v2303
    %2712 = vmatprep.subr.bf16.mxu0 %v2296
    %2713 = vmatpush1.bf16.msra.mxu0 %v2295
    %2714 = vmatprep.subr.bf16.mxu0 %v2288
    %2715 = vmatpush1.bf16.msra.mxu0 %v2287
    %2716 = vmatprep.subr.bf16.mxu0 %v2408
    %2717 = vmatpush2.bf16.msra.mxu0 %v2407
    %2718 = vmatprep.subr.bf16.mxu0 %v2400
    %2719 = vmatpush2.bf16.msra.mxu0 %v2399
    %2720 = vmatprep.subr.bf16.mxu0 %v2392
    %2721 = vmatpush2.bf16.msra.mxu0 %v2391
    %2722 = vmatprep.subr.bf16.mxu0 %v2384
    %2723 = vmatpush2.bf16.msra.mxu0 %v2383
    %2724 = vmatprep.subr.bf16.mxu0 %v2376
    %2725 = vmatpush2.bf16.msra.mxu0 %v2375
    %2726 = vmatprep.subr.bf16.mxu0 %v2368
    %2727 = vmatpush2.bf16.msra.mxu0 %v2367
    %2728 = vmatprep.subr.bf16.mxu0 %v2360
    %2729 = vmatpush2.bf16.msra.mxu0 %v2359
    %2730 = vmatprep.subr.bf16.mxu0 %v2352
    %2731 = vmatpush2.bf16.msra.mxu0 %v2351
    %2732 = vmatprep.mubr.bf16.mxu0 %v1643
    %2733 = vmatmul.mubr.bf16.gmra.mxu0 %v1642
    %v2734 = vpop.f32.mrf.mxu0
    %v2735 = vadd.f32 %v2694, %v2734
    %v2736 = vpop.f32.mrf.mxu0
    %v2737 = vadd.f32 %v2696, %v2736
    %v2738 = vpop.f32.mrf.mxu0
    %v2739 = vpop.f32.mrf.mxu0
    %2740 = vdwg.mxu0
    %2741 = vmatprep.subr.bf16.mxu0 %v1962
    %2742 = vmatpush1.bf16.msra.mxu0 %v1961
    %2743 = vmatprep.subr.bf16.mxu0 %v1954
    %2744 = vmatpush1.bf16.msra.mxu0 %v1953
    %2745 = vmatprep.subr.bf16.mxu0 %v1946
    %2746 = vmatpush1.bf16.msra.mxu0 %v1945
    %2747 = vmatprep.subr.bf16.mxu0 %v1938
    %2748 = vmatpush1.bf16.msra.mxu0 %v1937
    %2749 = vmatprep.subr.bf16.mxu0 %v1930
    %2750 = vmatpush1.bf16.msra.mxu0 %v1929
    %2751 = vmatprep.subr.bf16.mxu0 %v1922
    %2752 = vmatpush1.bf16.msra.mxu0 %v1921
    %2753 = vmatprep.subr.bf16.mxu0 %v1914
    %2754 = vmatpush1.bf16.msra.mxu0 %v1913
    %2755 = vmatprep.subr.bf16.mxu0 %v1906
    %2756 = vmatpush1.bf16.msra.mxu0 %v1905
    %2757 = vmatprep.subr.bf16.mxu0 %v2026
    %2758 = vmatpush2.bf16.msra.mxu0 %v2025
    %2759 = vmatprep.subr.bf16.mxu0 %v2018
    %2760 = vmatpush2.bf16.msra.mxu0 %v2017
    %2761 = vmatprep.subr.bf16.mxu0 %v2010
    %2762 = vmatpush2.bf16.msra.mxu0 %v2009
    %2763 = vmatprep.subr.bf16.mxu0 %v2002
    %2764 = vmatpush2.bf16.msra.mxu0 %v2001
    %2765 = vmatprep.subr.bf16.mxu0 %v1994
    %2766 = vmatpush2.bf16.msra.mxu0 %v1993
    %2767 = vmatprep.subr.bf16.mxu0 %v1986
    %2768 = vmatpush2.bf16.msra.mxu0 %v1985
    %2769 = vmatprep.subr.bf16.mxu0 %v1978
    %2770 = vmatpush2.bf16.msra.mxu0 %v1977
    %2771 = vmatprep.subr.bf16.mxu0 %v1970
    %2772 = vmatpush2.bf16.msra.mxu0 %v1969
    %2773 = vmatprep.mubr.bf16.mxu0 %v1637
    %2774 = vmatmul.mubr.bf16.gmra.mxu0 %v1636
    %v2775 = vpop.f32.mrf.mxu0
    %v2776 = vadd.f32 0.0, %v2775
    %v2777 = vpop.f32.mrf.mxu0
    %v2778 = vadd.f32 0.0, %v2777
    %v2779 = vpop.f32.mrf.mxu0
    %v2780 = vpop.f32.mrf.mxu0
    %2781 = vdwg.mxu0
    %2782 = vmatprep.subr.bf16.mxu0 %v2090
    %2783 = vmatpush1.bf16.msra.mxu0 %v2089
    %2784 = vmatprep.subr.bf16.mxu0 %v2082
    %2785 = vmatpush1.bf16.msra.mxu0 %v2081
    %2786 = vmatprep.subr.bf16.mxu0 %v2074
    %2787 = vmatpush1.bf16.msra.mxu0 %v2073
    %2788 = vmatprep.subr.bf16.mxu0 %v2066
    %2789 = vmatpush1.bf16.msra.mxu0 %v2065
    %2790 = vmatprep.subr.bf16.mxu0 %v2058
    %2791 = vmatpush1.bf16.msra.mxu0 %v2057
    %2792 = vmatprep.subr.bf16.mxu0 %v2050
    %2793 = vmatpush1.bf16.msra.mxu0 %v2049
    %2794 = vmatprep.subr.bf16.mxu0 %v2042
    %2795 = vmatpush1.bf16.msra.mxu0 %v2041
    %2796 = vmatprep.subr.bf16.mxu0 %v2034
    %2797 = vmatpush1.bf16.msra.mxu0 %v2033
    %2798 = vmatprep.subr.bf16.mxu0 %v2154
    %2799 = vmatpush2.bf16.msra.mxu0 %v2153
    %2800 = vmatprep.subr.bf16.mxu0 %v2146
    %2801 = vmatpush2.bf16.msra.mxu0 %v2145
    %2802 = vmatprep.subr.bf16.mxu0 %v2138
    %2803 = vmatpush2.bf16.msra.mxu0 %v2137
    %2804 = vmatprep.subr.bf16.mxu0 %v2130
    %2805 = vmatpush2.bf16.msra.mxu0 %v2129
    %2806 = vmatprep.subr.bf16.mxu0 %v2122
    %2807 = vmatpush2.bf16.msra.mxu0 %v2121
    %2808 = vmatprep.subr.bf16.mxu0 %v2114
    %2809 = vmatpush2.bf16.msra.mxu0 %v2113
    %2810 = vmatprep.subr.bf16.mxu0 %v2106
    %2811 = vmatpush2.bf16.msra.mxu0 %v2105
    %2812 = vmatprep.subr.bf16.mxu0 %v2098
    %2813 = vmatpush2.bf16.msra.mxu0 %v2097
    %2814 = vmatprep.mubr.bf16.mxu0 %v1639
    %2815 = vmatmul.mubr.bf16.gmra.mxu0 %v1638
    %v2816 = vpop.f32.mrf.mxu0
    %v2817 = vadd.f32 %v2776, %v2816
    %v2818 = vpop.f32.mrf.mxu0
    %v2819 = vadd.f32 %v2778, %v2818
    %v2820 = vpop.f32.mrf.mxu0
    %v2821 = vpop.f32.mrf.mxu0
    %2822 = vdwg.mxu0
    %2823 = vmatprep.subr.bf16.mxu0 %v2218
    %2824 = vmatpush1.bf16.msra.mxu0 %v2217
    %2825 = vmatprep.subr.bf16.mxu0 %v2210
    %2826 = vmatpush1.bf16.msra.mxu0 %v2209
    %2827 = vmatprep.subr.bf16.mxu0 %v2202
    %2828 = vmatpush1.bf16.msra.mxu0 %v2201
    %2829 = vmatprep.subr.bf16.mxu0 %v2194
    %2830 = vmatpush1.bf16.msra.mxu0 %v2193
    %2831 = vmatprep.subr.bf16.mxu0 %v2186
    %2832 = vmatpush1.bf16.msra.mxu0 %v2185
    %2833 = vmatprep.subr.bf16.mxu0 %v2178
    %2834 = vmatpush1.bf16.msra.mxu0 %v2177
    %2835 = vmatprep.subr.bf16.mxu0 %v2170
    %2836 = vmatpush1.bf16.msra.mxu0 %v2169
    %2837 = vmatprep.subr.bf16.mxu0 %v2162
    %2838 = vmatpush1.bf16.msra.mxu0 %v2161
    %2839 = vmatprep.subr.bf16.mxu0 %v2282
    %2840 = vmatpush2.bf16.msra.mxu0 %v2281
    %2841 = vmatprep.subr.bf16.mxu0 %v2274
    %2842 = vmatpush2.bf16.msra.mxu0 %v2273
    %2843 = vmatprep.subr.bf16.mxu0 %v2266
    %2844 = vmatpush2.bf16.msra.mxu0 %v2265
    %2845 = vmatprep.subr.bf16.mxu0 %v2258
    %2846 = vmatpush2.bf16.msra.mxu0 %v2257
    %2847 = vmatprep.subr.bf16.mxu0 %v2250
    %2848 = vmatpush2.bf16.msra.mxu0 %v2249
    %2849 = vmatprep.subr.bf16.mxu0 %v2242
    %2850 = vmatpush2.bf16.msra.mxu0 %v2241
    %2851 = vmatprep.subr.bf16.mxu0 %v2234
    %2852 = vmatpush2.bf16.msra.mxu0 %v2233
    %2853 = vmatprep.subr.bf16.mxu0 %v2226
    %2854 = vmatpush2.bf16.msra.mxu0 %v2225
    %2855 = vmatprep.mubr.bf16.mxu0 %v1641
    %2856 = vmatmul.mubr.bf16.gmra.mxu0 %v1640
    %v2857 = vpop.f32.mrf.mxu0
    %v2858 = vadd.f32 %v2817, %v2857
    %v2859 = vpop.f32.mrf.mxu0
    %v2860 = vadd.f32 %v2819, %v2859
    %v2861 = vpop.f32.mrf.mxu0
    %v2862 = vpop.f32.mrf.mxu0
    %2863 = vdwg.mxu0
    %2864 = vmatprep.subr.bf16.mxu0 %v2346
    %2865 = vmatpush1.bf16.msra.mxu0 %v2345
    %2866 = vmatprep.subr.bf16.mxu0 %v2338
    %2867 = vmatpush1.bf16.msra.mxu0 %v2337
    %2868 = vmatprep.subr.bf16.mxu0 %v2330
    %2869 = vmatpush1.bf16.msra.mxu0 %v2329
    %2870 = vmatprep.subr.bf16.mxu0 %v2322
    %2871 = vmatpush1.bf16.msra.mxu0 %v2321
    %2872 = vmatprep.subr.bf16.mxu0 %v2314
    %2873 = vmatpush1.bf16.msra.mxu0 %v2313
    %2874 = vmatprep.subr.bf16.mxu0 %v2306
    %2875 = vmatpush1.bf16.msra.mxu0 %v2305
    %2876 = vmatprep.subr.bf16.mxu0 %v2298
    %2877 = vmatpush1.bf16.msra.mxu0 %v2297
    %2878 = vmatprep.subr.bf16.mxu0 %v2290
    %2879 = vmatpush1.bf16.msra.mxu0 %v2289
    %2880 = vmatprep.subr.bf16.mxu0 %v2410
    %2881 = vmatpush2.bf16.msra.mxu0 %v2409
    %2882 = vmatprep.subr.bf16.mxu0 %v2402
    %2883 = vmatpush2.bf16.msra.mxu0 %v2401
    %2884 = vmatprep.subr.bf16.mxu0 %v2394
    %2885 = vmatpush2.bf16.msra.mxu0 %v2393
    %2886 = vmatprep.subr.bf16.mxu0 %v2386
    %2887 = vmatpush2.bf16.msra.mxu0 %v2385
    %2888 = vmatprep.subr.bf16.mxu0 %v2378
    %2889 = vmatpush2.bf16.msra.mxu0 %v2377
    %2890 = vmatprep.subr.bf16.mxu0 %v2370
    %2891 = vmatpush2.bf16.msra.mxu0 %v2369
    %2892 = vmatprep.subr.bf16.mxu0 %v2362
    %2893 = vmatpush2.bf16.msra.mxu0 %v2361
    %2894 = vmatprep.subr.bf16.mxu0 %v2354
    %2895 = vmatpush2.bf16.msra.mxu0 %v2353
    %2896 = vmatprep.mubr.bf16.mxu0 %v1643
    %2897 = vmatmul.mubr.bf16.gmra.mxu0 %v1642
    %v2898 = vpop.f32.mrf.mxu0
    %v2899 = vadd.f32 %v2858, %v2898
    %v2900 = vpop.f32.mrf.mxu0
    %v2901 = vadd.f32 %v2860, %v2900
    %v2902 = vpop.f32.mrf.mxu0
    %v2903 = vpop.f32.mrf.mxu0
    %2904 = vdwg.mxu0
    %2905 = vmatprep.subr.bf16.mxu0 %v1964
    %2906 = vmatpush1.bf16.msra.mxu0 %v1963
    %2907 = vmatprep.subr.bf16.mxu0 %v1956
    %2908 = vmatpush1.bf16.msra.mxu0 %v1955
    %2909 = vmatprep.subr.bf16.mxu0 %v1948
    %2910 = vmatpush1.bf16.msra.mxu0 %v1947
    %2911 = vmatprep.subr.bf16.mxu0 %v1940
    %2912 = vmatpush1.bf16.msra.mxu0 %v1939
    %2913 = vmatprep.subr.bf16.mxu0 %v1932
    %2914 = vmatpush1.bf16.msra.mxu0 %v1931
    %2915 = vmatprep.subr.bf16.mxu0 %v1924
    %2916 = vmatpush1.bf16.msra.mxu0 %v1923
    %2917 = vmatprep.subr.bf16.mxu0 %v1916
    %2918 = vmatpush1.bf16.msra.mxu0 %v1915
    %2919 = vmatprep.subr.bf16.mxu0 %v1908
    %2920 = vmatpush1.bf16.msra.mxu0 %v1907
    %2921 = vmatprep.subr.bf16.mxu0 %v2028
    %2922 = vmatpush2.bf16.msra.mxu0 %v2027
    %2923 = vmatprep.subr.bf16.mxu0 %v2020
    %2924 = vmatpush2.bf16.msra.mxu0 %v2019
    %2925 = vmatprep.subr.bf16.mxu0 %v2012
    %2926 = vmatpush2.bf16.msra.mxu0 %v2011
    %2927 = vmatprep.subr.bf16.mxu0 %v2004
    %2928 = vmatpush2.bf16.msra.mxu0 %v2003
    %2929 = vmatprep.subr.bf16.mxu0 %v1996
    %2930 = vmatpush2.bf16.msra.mxu0 %v1995
    %2931 = vmatprep.subr.bf16.mxu0 %v1988
    %2932 = vmatpush2.bf16.msra.mxu0 %v1987
    %2933 = vmatprep.subr.bf16.mxu0 %v1980
    %2934 = vmatpush2.bf16.msra.mxu0 %v1979
    %2935 = vmatprep.subr.bf16.mxu0 %v1972
    %2936 = vmatpush2.bf16.msra.mxu0 %v1971
    %2937 = vmatprep.mubr.bf16.mxu0 %v1637
    %2938 = vmatmul.mubr.bf16.gmra.mxu0 %v1636
    %v2939 = vpop.f32.mrf.mxu0
    %v2940 = vadd.f32 0.0, %v2939
    %v2941 = vpop.f32.mrf.mxu0
    %v2942 = vadd.f32 0.0, %v2941
    %v2943 = vpop.f32.mrf.mxu0
    %v2944 = vpop.f32.mrf.mxu0
    %2945 = vdwg.mxu0
    %2946 = vmatprep.subr.bf16.mxu0 %v2092
    %2947 = vmatpush1.bf16.msra.mxu0 %v2091
    %2948 = vmatprep.subr.bf16.mxu0 %v2084
    %2949 = vmatpush1.bf16.msra.mxu0 %v2083
    %2950 = vmatprep.subr.bf16.mxu0 %v2076
    %2951 = vmatpush1.bf16.msra.mxu0 %v2075
    %2952 = vmatprep.subr.bf16.mxu0 %v2068
    %2953 = vmatpush1.bf16.msra.mxu0 %v2067
    %2954 = vmatprep.subr.bf16.mxu0 %v2060
    %2955 = vmatpush1.bf16.msra.mxu0 %v2059
    %2956 = vmatprep.subr.bf16.mxu0 %v2052
    %2957 = vmatpush1.bf16.msra.mxu0 %v2051
    %2958 = vmatprep.subr.bf16.mxu0 %v2044
    %2959 = vmatpush1.bf16.msra.mxu0 %v2043
    %2960 = vmatprep.subr.bf16.mxu0 %v2036
    %2961 = vmatpush1.bf16.msra.mxu0 %v2035
    %2962 = vmatprep.subr.bf16.mxu0 %v2156
    %2963 = vmatpush2.bf16.msra.mxu0 %v2155
    %2964 = vmatprep.subr.bf16.mxu0 %v2148
    %2965 = vmatpush2.bf16.msra.mxu0 %v2147
    %2966 = vmatprep.subr.bf16.mxu0 %v2140
    %2967 = vmatpush2.bf16.msra.mxu0 %v2139
    %2968 = vmatprep.subr.bf16.mxu0 %v2132
    %2969 = vmatpush2.bf16.msra.mxu0 %v2131
    %2970 = vmatprep.subr.bf16.mxu0 %v2124
    %2971 = vmatpush2.bf16.msra.mxu0 %v2123
    %2972 = vmatprep.subr.bf16.mxu0 %v2116
    %2973 = vmatpush2.bf16.msra.mxu0 %v2115
    %2974 = vmatprep.subr.bf16.mxu0 %v2108
    %2975 = vmatpush2.bf16.msra.mxu0 %v2107
    %2976 = vmatprep.subr.bf16.mxu0 %v2100
    %2977 = vmatpush2.bf16.msra.mxu0 %v2099
    %2978 = vmatprep.mubr.bf16.mxu0 %v1639
    %2979 = vmatmul.mubr.bf16.gmra.mxu0 %v1638
    %v2980 = vpop.f32.mrf.mxu0
    %v2981 = vadd.f32 %v2940, %v2980
    %v2982 = vpop.f32.mrf.mxu0
    %v2983 = vadd.f32 %v2942, %v2982
    %v2984 = vpop.f32.mrf.mxu0
    %v2985 = vpop.f32.mrf.mxu0
    %2986 = vdwg.mxu0
    %2987 = vmatprep.subr.bf16.mxu0 %v2220
    %2988 = vmatpush1.bf16.msra.mxu0 %v2219
    %2989 = vmatprep.subr.bf16.mxu0 %v2212
    %2990 = vmatpush1.bf16.msra.mxu0 %v2211
    %2991 = vmatprep.subr.bf16.mxu0 %v2204
    %2992 = vmatpush1.bf16.msra.mxu0 %v2203
    %2993 = vmatprep.subr.bf16.mxu0 %v2196
    %2994 = vmatpush1.bf16.msra.mxu0 %v2195
    %2995 = vmatprep.subr.bf16.mxu0 %v2188
    %2996 = vmatpush1.bf16.msra.mxu0 %v2187
    %2997 = vmatprep.subr.bf16.mxu0 %v2180
    %2998 = vmatpush1.bf16.msra.mxu0 %v2179
    %2999 = vmatprep.subr.bf16.mxu0 %v2172
    %3000 = vmatpush1.bf16.msra.mxu0 %v2171
    %3001 = vmatprep.subr.bf16.mxu0 %v2164
    %3002 = vmatpush1.bf16.msra.mxu0 %v2163
    %3003 = vmatprep.subr.bf16.mxu0 %v2284
    %3004 = vmatpush2.bf16.msra.mxu0 %v2283
    %3005 = vmatprep.subr.bf16.mxu0 %v2276
    %3006 = vmatpush2.bf16.msra.mxu0 %v2275
    %3007 = vmatprep.subr.bf16.mxu0 %v2268
    %3008 = vmatpush2.bf16.msra.mxu0 %v2267
    %3009 = vmatprep.subr.bf16.mxu0 %v2260
    %3010 = vmatpush2.bf16.msra.mxu0 %v2259
    %3011 = vmatprep.subr.bf16.mxu0 %v2252
    %3012 = vmatpush2.bf16.msra.mxu0 %v2251
    %3013 = vmatprep.subr.bf16.mxu0 %v2244
    %3014 = vmatpush2.bf16.msra.mxu0 %v2243
    %3015 = vmatprep.subr.bf16.mxu0 %v2236
    %3016 = vmatpush2.bf16.msra.mxu0 %v2235
    %3017 = vmatprep.subr.bf16.mxu0 %v2228
    %3018 = vmatpush2.bf16.msra.mxu0 %v2227
    %3019 = vmatprep.mubr.bf16.mxu0 %v1641
    %3020 = vmatmul.mubr.bf16.gmra.mxu0 %v1640
    %v3021 = vpop.f32.mrf.mxu0
    %v3022 = vadd.f32 %v2981, %v3021
    %v3023 = vpop.f32.mrf.mxu0
    %v3024 = vadd.f32 %v2983, %v3023
    %v3025 = vpop.f32.mrf.mxu0
    %v3026 = vpop.f32.mrf.mxu0
    %3027 = vdwg.mxu0
    %3028 = vmatprep.subr.bf16.mxu0 %v2348
    %3029 = vmatpush1.bf16.msra.mxu0 %v2347
    %3030 = vmatprep.subr.bf16.mxu0 %v2340
    %3031 = vmatpush1.bf16.msra.mxu0 %v2339
    %3032 = vmatprep.subr.bf16.mxu0 %v2332
    %3033 = vmatpush1.bf16.msra.mxu0 %v2331
    %3034 = vmatprep.subr.bf16.mxu0 %v2324
    %3035 = vmatpush1.bf16.msra.mxu0 %v2323
    %3036 = vmatprep.subr.bf16.mxu0 %v2316
    %3037 = vmatpush1.bf16.msra.mxu0 %v2315
    %3038 = vmatprep.subr.bf16.mxu0 %v2308
    %3039 = vmatpush1.bf16.msra.mxu0 %v2307
    %3040 = vmatprep.subr.bf16.mxu0 %v2300
    %3041 = vmatpush1.bf16.msra.mxu0 %v2299
    %3042 = vmatprep.subr.bf16.mxu0 %v2292
    %3043 = vmatpush1.bf16.msra.mxu0 %v2291
    %3044 = vmatprep.subr.bf16.mxu0 %v2412
    %3045 = vmatpush2.bf16.msra.mxu0 %v2411
    %3046 = vmatprep.subr.bf16.mxu0 %v2404
    %3047 = vmatpush2.bf16.msra.mxu0 %v2403
    %3048 = vmatprep.subr.bf16.mxu0 %v2396
    %3049 = vmatpush2.bf16.msra.mxu0 %v2395
    %3050 = vmatprep.subr.bf16.mxu0 %v2388
    %3051 = vmatpush2.bf16.msra.mxu0 %v2387
    %3052 = vmatprep.subr.bf16.mxu0 %v2380
    %3053 = vmatpush2.bf16.msra.mxu0 %v2379
    %3054 = vmatprep.subr.bf16.mxu0 %v2372
    %3055 = vmatpush2.bf16.msra.mxu0 %v2371
    %3056 = vmatprep.subr.bf16.mxu0 %v2364
    %3057 = vmatpush2.bf16.msra.mxu0 %v2363
    %3058 = vmatprep.subr.bf16.mxu0 %v2356
    %3059 = vmatpush2.bf16.msra.mxu0 %v2355
    %3060 = vmatprep.mubr.bf16.mxu0 %v1643
    %3061 = vmatmul.mubr.bf16.gmra.mxu0 %v1642
    %v3062 = vpop.f32.mrf.mxu0
    %v3063 = vadd.f32 %v3022, %v3062
    %v3064 = vpop.f32.mrf.mxu0
    %v3065 = vadd.f32 %v3024, %v3064
    %v3066 = vpop.f32.mrf.mxu0
    %v3067 = vpop.f32.mrf.mxu0
    %3068 = vdwg.mxu0
    %s3069 = scalar_lea.vmem [#allocation6], 1
    %v3070 = vld [vmem:[%s3069] ss:$4 sm:$0xff]
    %v3072 = vlaneseq
    %v3073 = vshrl.u32 %v3072, 7
    %v3074 = vsub.s32 0, %v3073
    %v3075 = vrot.slane %v3070, %v3074
    %v3076 = vlaneseq
    %v3077 = vshrl.u32 %v3076, 7
    %v3078 = vsub.s32 1, %v3077
    %v3079 = vrot.slane %v3070, %v3078
    %v3080 = vlaneseq
    %v3081 = vshrl.u32 %v3080, 7
    %v3082 = vsub.s32 2, %v3081
    %v3083 = vrot.slane %v3070, %v3082
    %v3084 = vlaneseq
    %v3085 = vshrl.u32 %v3084, 7
    %v3086 = vsub.s32 3, %v3085
    %v3087 = vrot.slane %v3070, %v3086
    %v3088 = vlaneseq
    %v3089 = vshrl.u32 %v3088, 7
    %v3090 = vsub.s32 4, %v3089
    %v3091 = vrot.slane %v3070, %v3090
    %v3092 = vlaneseq
    %v3093 = vshrl.u32 %v3092, 7
    %v3094 = vsub.s32 5, %v3093
    %v3095 = vrot.slane %v3070, %v3094
    %v3096 = vlaneseq
    %v3097 = vshrl.u32 %v3096, 7
    %v3098 = vsub.s32 6, %v3097
    %v3099 = vrot.slane %v3070, %v3098
    %v3100 = vlaneseq
    %v3101 = vshrl.u32 %v3100, 7
    %v3102 = vsub.s32 7, %v3101
    %v3103 = vrot.slane %v3070, %v3102
    %v3112 = vmul.f32 %v2571, %v3075
    %v3113 = vmul.f32 %v2573, %v3079
    %v3114 = vmul.f32 %v2735, %v3083
    %v3115 = vmul.f32 %v2737, %v3087
    %v3116 = vmul.f32 %v2899, %v3091
    %v3117 = vmul.f32 %v2901, %v3095
    %v3118 = vmul.f32 %v3063, %v3099
    %v3119 = vmul.f32 %v3065, %v3103
    %s3120 = scalar_lea.vmem [#allocation7], 1
    %v3121 = vld [vmem:[%s3120] ss:$4 sm:$0xff]
    %v3123 = vlaneseq
    %v3124 = vshrl.u32 %v3123, 7
    %v3125 = vsub.s32 0, %v3124
    %v3126 = vrot.slane %v3121, %v3125
    %v3127 = vlaneseq
    %v3128 = vshrl.u32 %v3127, 7
    %v3129 = vsub.s32 1, %v3128
    %v3130 = vrot.slane %v3121, %v3129
    %v3131 = vlaneseq
    %v3132 = vshrl.u32 %v3131, 7
    %v3133 = vsub.s32 2, %v3132
    %v3134 = vrot.slane %v3121, %v3133
    %v3135 = vlaneseq
    %v3136 = vshrl.u32 %v3135, 7
    %v3137 = vsub.s32 3, %v3136
    %v3138 = vrot.slane %v3121, %v3137
    %v3139 = vlaneseq
    %v3140 = vshrl.u32 %v3139, 7
    %v3141 = vsub.s32 4, %v3140
    %v3142 = vrot.slane %v3121, %v3141
    %v3143 = vlaneseq
    %v3144 = vshrl.u32 %v3143, 7
    %v3145 = vsub.s32 5, %v3144
    %v3146 = vrot.slane %v3121, %v3145
    %v3147 = vlaneseq
    %v3148 = vshrl.u32 %v3147, 7
    %v3149 = vsub.s32 6, %v3148
    %v3150 = vrot.slane %v3121, %v3149
    %v3151 = vlaneseq
    %v3152 = vshrl.u32 %v3151, 7
    %v3153 = vsub.s32 7, %v3152
    %v3154 = vrot.slane %v3121, %v3153
    %v3163 = vadd.f32 %v3112, %v3126
    %v3164 = vadd.f32 %v3113, %v3130
    %v3165 = vadd.f32 %v3114, %v3134
    %v3166 = vadd.f32 %v3115, %v3138
    %v3167 = vadd.f32 %v3116, %v3142
    %v3168 = vadd.f32 %v3117, %v3146
    %v3169 = vadd.f32 %v3118, %v3150
    %v3170 = vadd.f32 %v3119, %v3154
    %v3171 = vtanh.pop %v3163
    %v3172 = vtanh.pop %v3164
    %v3173 = vtanh.pop %v3165
    %v3174 = vtanh.pop %v3166
    %v3175 = vtanh.pop %v3167
    %v3176 = vtanh.pop %v3168
    %v3177 = vtanh.pop %v3169
    %v3178 = vtanh.pop %v3170
    %v3179 = vpack.c.bf16 %v3171, %v3171
    %v3180 = vpack.c.bf16 %v3172, %v3172
    %v3181 = vpack.c.bf16 %v3173, %v3173
    %v3182 = vpack.c.bf16 %v3174, %v3174
    %v3183 = vpack.c.bf16 %v3175, %v3175
    %v3184 = vpack.c.bf16 %v3176, %v3176
    %v3185 = vpack.c.bf16 %v3177, %v3177
    %v3186 = vpack.c.bf16 %v3178, %v3178
    %s3187 = scalar_lea.vmem [#allocation2], 4096
    %v3188 = vld [vmem:[%s3187] sm:$0xff]
    %v3189 = vld [vmem:[%s3187 + $0x8] sm:$0xff]
    %v3190 = vld [vmem:[%s3187 + $0x10] sm:$0xff]
    %v3191 = vld [vmem:[%s3187 + $0x18] sm:$0xff]
    %v3192 = vld [vmem:[%s3187 + $0x20] sm:$0xff]
    %v3193 = vld [vmem:[%s3187 + $0x28] sm:$0xff]
    %v3194 = vld [vmem:[%s3187 + $0x30] sm:$0xff]
    %v3195 = vld [vmem:[%s3187 + $0x38] sm:$0xff]
    %v3196 = vld [vmem:[%s3187 + $0x40] sm:$0xff]
    %v3197 = vld [vmem:[%s3187 + $0x48] sm:$0xff]
    %v3198 = vld [vmem:[%s3187 + $0x50] sm:$0xff]
    %v3199 = vld [vmem:[%s3187 + $0x58] sm:$0xff]
    %v3200 = vld [vmem:[%s3187 + $0x60] sm:$0xff]
    %v3201 = vld [vmem:[%s3187 + $0x68] sm:$0xff]
    %v3202 = vld [vmem:[%s3187 + $0x70] sm:$0xff]
    %v3203 = vld [vmem:[%s3187 + $0x78] sm:$0xff]
    %v3204 = vld [vmem:[%s3187 + $0x80] sm:$0xff]
    %v3205 = vld [vmem:[%s3187 + $0x88] sm:$0xff]
    %v3206 = vld [vmem:[%s3187 + $0x90] sm:$0xff]
    %v3207 = vld [vmem:[%s3187 + $0x98] sm:$0xff]
    %v3208 = vld [vmem:[%s3187 + $0xa0] sm:$0xff]
    %v3209 = vld [vmem:[%s3187 + $0xa8] sm:$0xff]
    %v3210 = vld [vmem:[%s3187 + $0xb0] sm:$0xff]
    %v3211 = vld [vmem:[%s3187 + $0xb8] sm:$0xff]
    %v3212 = vld [vmem:[%s3187 + $0xc0] sm:$0xff]
    %v3213 = vld [vmem:[%s3187 + $0xc8] sm:$0xff]
    %v3214 = vld [vmem:[%s3187 + $0xd0] sm:$0xff]
    %v3215 = vld [vmem:[%s3187 + $0xd8] sm:$0xff]
    %v3216 = vld [vmem:[%s3187 + $0xe0] sm:$0xff]
    %v3217 = vld [vmem:[%s3187 + $0xe8] sm:$0xff]
    %v3218 = vld [vmem:[%s3187 + $0xf0] sm:$0xff]
    %v3219 = vld [vmem:[%s3187 + $0xf8] sm:$0xff]
    %v3220 = vld [vmem:[%s3187 + $0x100] sm:$0xff]
    %v3221 = vld [vmem:[%s3187 + $0x108] sm:$0xff]
    %v3222 = vld [vmem:[%s3187 + $0x110] sm:$0xff]
    %v3223 = vld [vmem:[%s3187 + $0x118] sm:$0xff]
    %v3224 = vld [vmem:[%s3187 + $0x120] sm:$0xff]
    %v3225 = vld [vmem:[%s3187 + $0x128] sm:$0xff]
    %v3226 = vld [vmem:[%s3187 + $0x130] sm:$0xff]
    %v3227 = vld [vmem:[%s3187 + $0x138] sm:$0xff]
    %v3228 = vld [vmem:[%s3187 + $0x140] sm:$0xff]
    %v3229 = vld [vmem:[%s3187 + $0x148] sm:$0xff]
    %v3230 = vld [vmem:[%s3187 + $0x150] sm:$0xff]
    %v3231 = vld [vmem:[%s3187 + $0x158] sm:$0xff]
    %v3232 = vld [vmem:[%s3187 + $0x160] sm:$0xff]
    %v3233 = vld [vmem:[%s3187 + $0x168] sm:$0xff]
    %v3234 = vld [vmem:[%s3187 + $0x170] sm:$0xff]
    %v3235 = vld [vmem:[%s3187 + $0x178] sm:$0xff]
    %v3236 = vld [vmem:[%s3187 + $0x180] sm:$0xff]
    %v3237 = vld [vmem:[%s3187 + $0x188] sm:$0xff]
    %v3238 = vld [vmem:[%s3187 + $0x190] sm:$0xff]
    %v3239 = vld [vmem:[%s3187 + $0x198] sm:$0xff]
    %v3240 = vld [vmem:[%s3187 + $0x1a0] sm:$0xff]
    %v3241 = vld [vmem:[%s3187 + $0x1a8] sm:$0xff]
    %v3242 = vld [vmem:[%s3187 + $0x1b0] sm:$0xff]
    %v3243 = vld [vmem:[%s3187 + $0x1b8] sm:$0xff]
    %v3244 = vld [vmem:[%s3187 + $0x1c0] sm:$0xff]
    %v3245 = vld [vmem:[%s3187 + $0x1c8] sm:$0xff]
    %v3246 = vld [vmem:[%s3187 + $0x1d0] sm:$0xff]
    %v3247 = vld [vmem:[%s3187 + $0x1d8] sm:$0xff]
    %v3248 = vld [vmem:[%s3187 + $0x1e0] sm:$0xff]
    %v3249 = vld [vmem:[%s3187 + $0x1e8] sm:$0xff]
    %v3250 = vld [vmem:[%s3187 + $0x1f0] sm:$0xff]
    %v3251 = vld [vmem:[%s3187 + $0x1f8] sm:$0xff]
    %v3252 = vld [vmem:[%s3187 + $0x200] sm:$0xff]
    %v3253 = vld [vmem:[%s3187 + $0x208] sm:$0xff]
    %v3254 = vld [vmem:[%s3187 + $0x210] sm:$0xff]
    %v3255 = vld [vmem:[%s3187 + $0x218] sm:$0xff]
    %v3256 = vld [vmem:[%s3187 + $0x220] sm:$0xff]
    %v3257 = vld [vmem:[%s3187 + $0x228] sm:$0xff]
    %v3258 = vld [vmem:[%s3187 + $0x230] sm:$0xff]
    %v3259 = vld [vmem:[%s3187 + $0x238] sm:$0xff]
    %v3260 = vld [vmem:[%s3187 + $0x240] sm:$0xff]
    %v3261 = vld [vmem:[%s3187 + $0x248] sm:$0xff]
    %v3262 = vld [vmem:[%s3187 + $0x250] sm:$0xff]
    %v3263 = vld [vmem:[%s3187 + $0x258] sm:$0xff]
    %v3264 = vld [vmem:[%s3187 + $0x260] sm:$0xff]
    %v3265 = vld [vmem:[%s3187 + $0x268] sm:$0xff]
    %v3266 = vld [vmem:[%s3187 + $0x270] sm:$0xff]
    %v3267 = vld [vmem:[%s3187 + $0x278] sm:$0xff]
    %v3268 = vld [vmem:[%s3187 + $0x280] sm:$0xff]
    %v3269 = vld [vmem:[%s3187 + $0x288] sm:$0xff]
    %v3270 = vld [vmem:[%s3187 + $0x290] sm:$0xff]
    %v3271 = vld [vmem:[%s3187 + $0x298] sm:$0xff]
    %v3272 = vld [vmem:[%s3187 + $0x2a0] sm:$0xff]
    %v3273 = vld [vmem:[%s3187 + $0x2a8] sm:$0xff]
    %v3274 = vld [vmem:[%s3187 + $0x2b0] sm:$0xff]
    %v3275 = vld [vmem:[%s3187 + $0x2b8] sm:$0xff]
    %v3276 = vld [vmem:[%s3187 + $0x2c0] sm:$0xff]
    %v3277 = vld [vmem:[%s3187 + $0x2c8] sm:$0xff]
    %v3278 = vld [vmem:[%s3187 + $0x2d0] sm:$0xff]
    %v3279 = vld [vmem:[%s3187 + $0x2d8] sm:$0xff]
    %v3280 = vld [vmem:[%s3187 + $0x2e0] sm:$0xff]
    %v3281 = vld [vmem:[%s3187 + $0x2e8] sm:$0xff]
    %v3282 = vld [vmem:[%s3187 + $0x2f0] sm:$0xff]
    %v3283 = vld [vmem:[%s3187 + $0x2f8] sm:$0xff]
    %v3284 = vld [vmem:[%s3187 + $0x300] sm:$0xff]
    %v3285 = vld [vmem:[%s3187 + $0x308] sm:$0xff]
    %v3286 = vld [vmem:[%s3187 + $0x310] sm:$0xff]
    %v3287 = vld [vmem:[%s3187 + $0x318] sm:$0xff]
    %v3288 = vld [vmem:[%s3187 + $0x320] sm:$0xff]
    %v3289 = vld [vmem:[%s3187 + $0x328] sm:$0xff]
    %v3290 = vld [vmem:[%s3187 + $0x330] sm:$0xff]
    %v3291 = vld [vmem:[%s3187 + $0x338] sm:$0xff]
    %v3292 = vld [vmem:[%s3187 + $0x340] sm:$0xff]
    %v3293 = vld [vmem:[%s3187 + $0x348] sm:$0xff]
    %v3294 = vld [vmem:[%s3187 + $0x350] sm:$0xff]
    %v3295 = vld [vmem:[%s3187 + $0x358] sm:$0xff]
    %v3296 = vld [vmem:[%s3187 + $0x360] sm:$0xff]
    %v3297 = vld [vmem:[%s3187 + $0x368] sm:$0xff]
    %v3298 = vld [vmem:[%s3187 + $0x370] sm:$0xff]
    %v3299 = vld [vmem:[%s3187 + $0x378] sm:$0xff]
    %v3300 = vld [vmem:[%s3187 + $0x380] sm:$0xff]
    %v3301 = vld [vmem:[%s3187 + $0x388] sm:$0xff]
    %v3302 = vld [vmem:[%s3187 + $0x390] sm:$0xff]
    %v3303 = vld [vmem:[%s3187 + $0x398] sm:$0xff]
    %v3304 = vld [vmem:[%s3187 + $0x3a0] sm:$0xff]
    %v3305 = vld [vmem:[%s3187 + $0x3a8] sm:$0xff]
    %v3306 = vld [vmem:[%s3187 + $0x3b0] sm:$0xff]
    %v3307 = vld [vmem:[%s3187 + $0x3b8] sm:$0xff]
    %v3308 = vld [vmem:[%s3187 + $0x3c0] sm:$0xff]
    %v3309 = vld [vmem:[%s3187 + $0x3c8] sm:$0xff]
    %v3310 = vld [vmem:[%s3187 + $0x3d0] sm:$0xff]
    %v3311 = vld [vmem:[%s3187 + $0x3d8] sm:$0xff]
    %v3312 = vld [vmem:[%s3187 + $0x3e0] sm:$0xff]
    %v3313 = vld [vmem:[%s3187 + $0x3e8] sm:$0xff]
    %v3314 = vld [vmem:[%s3187 + $0x3f0] sm:$0xff]
    %v3315 = vld [vmem:[%s3187 + $0x3f8] sm:$0xff]
    %v3316 = vld [vmem:[%s3187 + $0x400] sm:$0xff]
    %v3317 = vld [vmem:[%s3187 + $0x408] sm:$0xff]
    %v3318 = vld [vmem:[%s3187 + $0x410] sm:$0xff]
    %v3319 = vld [vmem:[%s3187 + $0x418] sm:$0xff]
    %v3320 = vld [vmem:[%s3187 + $0x420] sm:$0xff]
    %v3321 = vld [vmem:[%s3187 + $0x428] sm:$0xff]
    %v3322 = vld [vmem:[%s3187 + $0x430] sm:$0xff]
    %v3323 = vld [vmem:[%s3187 + $0x438] sm:$0xff]
    %v3324 = vld [vmem:[%s3187 + $0x440] sm:$0xff]
    %v3325 = vld [vmem:[%s3187 + $0x448] sm:$0xff]
    %v3326 = vld [vmem:[%s3187 + $0x450] sm:$0xff]
    %v3327 = vld [vmem:[%s3187 + $0x458] sm:$0xff]
    %v3328 = vld [vmem:[%s3187 + $0x460] sm:$0xff]
    %v3329 = vld [vmem:[%s3187 + $0x468] sm:$0xff]
    %v3330 = vld [vmem:[%s3187 + $0x470] sm:$0xff]
    %v3331 = vld [vmem:[%s3187 + $0x478] sm:$0xff]
    %v3332 = vld [vmem:[%s3187 + $0x480] sm:$0xff]
    %v3333 = vld [vmem:[%s3187 + $0x488] sm:$0xff]
    %v3334 = vld [vmem:[%s3187 + $0x490] sm:$0xff]
    %v3335 = vld [vmem:[%s3187 + $0x498] sm:$0xff]
    %v3336 = vld [vmem:[%s3187 + $0x4a0] sm:$0xff]
    %v3337 = vld [vmem:[%s3187 + $0x4a8] sm:$0xff]
    %v3338 = vld [vmem:[%s3187 + $0x4b0] sm:$0xff]
    %v3339 = vld [vmem:[%s3187 + $0x4b8] sm:$0xff]
    %v3340 = vld [vmem:[%s3187 + $0x4c0] sm:$0xff]
    %v3341 = vld [vmem:[%s3187 + $0x4c8] sm:$0xff]
    %v3342 = vld [vmem:[%s3187 + $0x4d0] sm:$0xff]
    %v3343 = vld [vmem:[%s3187 + $0x4d8] sm:$0xff]
    %v3344 = vld [vmem:[%s3187 + $0x4e0] sm:$0xff]
    %v3345 = vld [vmem:[%s3187 + $0x4e8] sm:$0xff]
    %v3346 = vld [vmem:[%s3187 + $0x4f0] sm:$0xff]
    %v3347 = vld [vmem:[%s3187 + $0x4f8] sm:$0xff]
    %v3348 = vld [vmem:[%s3187 + $0x500] sm:$0xff]
    %v3349 = vld [vmem:[%s3187 + $0x508] sm:$0xff]
    %v3350 = vld [vmem:[%s3187 + $0x510] sm:$0xff]
    %v3351 = vld [vmem:[%s3187 + $0x518] sm:$0xff]
    %v3352 = vld [vmem:[%s3187 + $0x520] sm:$0xff]
    %v3353 = vld [vmem:[%s3187 + $0x528] sm:$0xff]
    %v3354 = vld [vmem:[%s3187 + $0x530] sm:$0xff]
    %v3355 = vld [vmem:[%s3187 + $0x538] sm:$0xff]
    %v3356 = vld [vmem:[%s3187 + $0x540] sm:$0xff]
    %v3357 = vld [vmem:[%s3187 + $0x548] sm:$0xff]
    %v3358 = vld [vmem:[%s3187 + $0x550] sm:$0xff]
    %v3359 = vld [vmem:[%s3187 + $0x558] sm:$0xff]
    %v3360 = vld [vmem:[%s3187 + $0x560] sm:$0xff]
    %v3361 = vld [vmem:[%s3187 + $0x568] sm:$0xff]
    %v3362 = vld [vmem:[%s3187 + $0x570] sm:$0xff]
    %v3363 = vld [vmem:[%s3187 + $0x578] sm:$0xff]
    %v3364 = vld [vmem:[%s3187 + $0x580] sm:$0xff]
    %v3365 = vld [vmem:[%s3187 + $0x588] sm:$0xff]
    %v3366 = vld [vmem:[%s3187 + $0x590] sm:$0xff]
    %v3367 = vld [vmem:[%s3187 + $0x598] sm:$0xff]
    %v3368 = vld [vmem:[%s3187 + $0x5a0] sm:$0xff]
    %v3369 = vld [vmem:[%s3187 + $0x5a8] sm:$0xff]
    %v3370 = vld [vmem:[%s3187 + $0x5b0] sm:$0xff]
    %v3371 = vld [vmem:[%s3187 + $0x5b8] sm:$0xff]
    %v3372 = vld [vmem:[%s3187 + $0x5c0] sm:$0xff]
    %v3373 = vld [vmem:[%s3187 + $0x5c8] sm:$0xff]
    %v3374 = vld [vmem:[%s3187 + $0x5d0] sm:$0xff]
    %v3375 = vld [vmem:[%s3187 + $0x5d8] sm:$0xff]
    %v3376 = vld [vmem:[%s3187 + $0x5e0] sm:$0xff]
    %v3377 = vld [vmem:[%s3187 + $0x5e8] sm:$0xff]
    %v3378 = vld [vmem:[%s3187 + $0x5f0] sm:$0xff]
    %v3379 = vld [vmem:[%s3187 + $0x5f8] sm:$0xff]
    %v3380 = vld [vmem:[%s3187 + $0x600] sm:$0xff]
    %v3381 = vld [vmem:[%s3187 + $0x608] sm:$0xff]
    %v3382 = vld [vmem:[%s3187 + $0x610] sm:$0xff]
    %v3383 = vld [vmem:[%s3187 + $0x618] sm:$0xff]
    %v3384 = vld [vmem:[%s3187 + $0x620] sm:$0xff]
    %v3385 = vld [vmem:[%s3187 + $0x628] sm:$0xff]
    %v3386 = vld [vmem:[%s3187 + $0x630] sm:$0xff]
    %v3387 = vld [vmem:[%s3187 + $0x638] sm:$0xff]
    %v3388 = vld [vmem:[%s3187 + $0x640] sm:$0xff]
    %v3389 = vld [vmem:[%s3187 + $0x648] sm:$0xff]
    %v3390 = vld [vmem:[%s3187 + $0x650] sm:$0xff]
    %v3391 = vld [vmem:[%s3187 + $0x658] sm:$0xff]
    %v3392 = vld [vmem:[%s3187 + $0x660] sm:$0xff]
    %v3393 = vld [vmem:[%s3187 + $0x668] sm:$0xff]
    %v3394 = vld [vmem:[%s3187 + $0x670] sm:$0xff]
    %v3395 = vld [vmem:[%s3187 + $0x678] sm:$0xff]
    %v3396 = vld [vmem:[%s3187 + $0x680] sm:$0xff]
    %v3397 = vld [vmem:[%s3187 + $0x688] sm:$0xff]
    %v3398 = vld [vmem:[%s3187 + $0x690] sm:$0xff]
    %v3399 = vld [vmem:[%s3187 + $0x698] sm:$0xff]
    %v3400 = vld [vmem:[%s3187 + $0x6a0] sm:$0xff]
    %v3401 = vld [vmem:[%s3187 + $0x6a8] sm:$0xff]
    %v3402 = vld [vmem:[%s3187 + $0x6b0] sm:$0xff]
    %v3403 = vld [vmem:[%s3187 + $0x6b8] sm:$0xff]
    %v3404 = vld [vmem:[%s3187 + $0x6c0] sm:$0xff]
    %v3405 = vld [vmem:[%s3187 + $0x6c8] sm:$0xff]
    %v3406 = vld [vmem:[%s3187 + $0x6d0] sm:$0xff]
    %v3407 = vld [vmem:[%s3187 + $0x6d8] sm:$0xff]
    %v3408 = vld [vmem:[%s3187 + $0x6e0] sm:$0xff]
    %v3409 = vld [vmem:[%s3187 + $0x6e8] sm:$0xff]
    %v3410 = vld [vmem:[%s3187 + $0x6f0] sm:$0xff]
    %v3411 = vld [vmem:[%s3187 + $0x6f8] sm:$0xff]
    %v3412 = vld [vmem:[%s3187 + $0x700] sm:$0xff]
    %v3413 = vld [vmem:[%s3187 + $0x708] sm:$0xff]
    %v3414 = vld [vmem:[%s3187 + $0x710] sm:$0xff]
    %v3415 = vld [vmem:[%s3187 + $0x718] sm:$0xff]
    %v3416 = vld [vmem:[%s3187 + $0x720] sm:$0xff]
    %v3417 = vld [vmem:[%s3187 + $0x728] sm:$0xff]
    %v3418 = vld [vmem:[%s3187 + $0x730] sm:$0xff]
    %v3419 = vld [vmem:[%s3187 + $0x738] sm:$0xff]
    %v3420 = vld [vmem:[%s3187 + $0x740] sm:$0xff]
    %v3421 = vld [vmem:[%s3187 + $0x748] sm:$0xff]
    %v3422 = vld [vmem:[%s3187 + $0x750] sm:$0xff]
    %v3423 = vld [vmem:[%s3187 + $0x758] sm:$0xff]
    %v3424 = vld [vmem:[%s3187 + $0x760] sm:$0xff]
    %v3425 = vld [vmem:[%s3187 + $0x768] sm:$0xff]
    %v3426 = vld [vmem:[%s3187 + $0x770] sm:$0xff]
    %v3427 = vld [vmem:[%s3187 + $0x778] sm:$0xff]
    %v3428 = vld [vmem:[%s3187 + $0x780] sm:$0xff]
    %v3429 = vld [vmem:[%s3187 + $0x788] sm:$0xff]
    %v3430 = vld [vmem:[%s3187 + $0x790] sm:$0xff]
    %v3431 = vld [vmem:[%s3187 + $0x798] sm:$0xff]
    %v3432 = vld [vmem:[%s3187 + $0x7a0] sm:$0xff]
    %v3433 = vld [vmem:[%s3187 + $0x7a8] sm:$0xff]
    %v3434 = vld [vmem:[%s3187 + $0x7b0] sm:$0xff]
    %v3435 = vld [vmem:[%s3187 + $0x7b8] sm:$0xff]
    %v3436 = vld [vmem:[%s3187 + $0x7c0] sm:$0xff]
    %v3437 = vld [vmem:[%s3187 + $0x7c8] sm:$0xff]
    %v3438 = vld [vmem:[%s3187 + $0x7d0] sm:$0xff]
    %v3439 = vld [vmem:[%s3187 + $0x7d8] sm:$0xff]
    %v3440 = vld [vmem:[%s3187 + $0x7e0] sm:$0xff]
    %v3441 = vld [vmem:[%s3187 + $0x7e8] sm:$0xff]
    %v3442 = vld [vmem:[%s3187 + $0x7f0] sm:$0xff]
    %v3443 = vld [vmem:[%s3187 + $0x7f8] sm:$0xff]
    %v3444 = vunpack.c.l.s8.bf16 %v3188
    %v3445 = vunpack.c.l.s8.bf16 %v3189
    %v3446 = vunpack.c.l.s8.bf16 %v3190
    %v3447 = vunpack.c.l.s8.bf16 %v3191
    %v3448 = vunpack.c.l.s8.bf16 %v3192
    %v3449 = vunpack.c.l.s8.bf16 %v3193
    %v3450 = vunpack.c.l.s8.bf16 %v3194
    %v3451 = vunpack.c.l.s8.bf16 %v3195
    %v3452 = vunpack.c.h.s8.bf16 %v3188
    %v3453 = vunpack.c.h.s8.bf16 %v3189
    %v3454 = vunpack.c.h.s8.bf16 %v3190
    %v3455 = vunpack.c.h.s8.bf16 %v3191
    %v3456 = vunpack.c.h.s8.bf16 %v3192
    %v3457 = vunpack.c.h.s8.bf16 %v3193
    %v3458 = vunpack.c.h.s8.bf16 %v3194
    %v3459 = vunpack.c.h.s8.bf16 %v3195
    %v3460 = vunpack.c.l.s8.bf16 %v3196
    %v3461 = vunpack.c.l.s8.bf16 %v3197
    %v3462 = vunpack.c.l.s8.bf16 %v3198
    %v3463 = vunpack.c.l.s8.bf16 %v3199
    %v3464 = vunpack.c.l.s8.bf16 %v3200
    %v3465 = vunpack.c.l.s8.bf16 %v3201
    %v3466 = vunpack.c.l.s8.bf16 %v3202
    %v3467 = vunpack.c.l.s8.bf16 %v3203
    %v3468 = vunpack.c.h.s8.bf16 %v3196
    %v3469 = vunpack.c.h.s8.bf16 %v3197
    %v3470 = vunpack.c.h.s8.bf16 %v3198
    %v3471 = vunpack.c.h.s8.bf16 %v3199
    %v3472 = vunpack.c.h.s8.bf16 %v3200
    %v3473 = vunpack.c.h.s8.bf16 %v3201
    %v3474 = vunpack.c.h.s8.bf16 %v3202
    %v3475 = vunpack.c.h.s8.bf16 %v3203
    %v3476 = vunpack.c.l.s8.bf16 %v3204
    %v3477 = vunpack.c.l.s8.bf16 %v3205
    %v3478 = vunpack.c.l.s8.bf16 %v3206
    %v3479 = vunpack.c.l.s8.bf16 %v3207
    %v3480 = vunpack.c.l.s8.bf16 %v3208
    %v3481 = vunpack.c.l.s8.bf16 %v3209
    %v3482 = vunpack.c.l.s8.bf16 %v3210
    %v3483 = vunpack.c.l.s8.bf16 %v3211
    %v3484 = vunpack.c.h.s8.bf16 %v3204
    %v3485 = vunpack.c.h.s8.bf16 %v3205
    %v3486 = vunpack.c.h.s8.bf16 %v3206
    %v3487 = vunpack.c.h.s8.bf16 %v3207
    %v3488 = vunpack.c.h.s8.bf16 %v3208
    %v3489 = vunpack.c.h.s8.bf16 %v3209
    %v3490 = vunpack.c.h.s8.bf16 %v3210
    %v3491 = vunpack.c.h.s8.bf16 %v3211
    %v3492 = vunpack.c.l.s8.bf16 %v3212
    %v3493 = vunpack.c.l.s8.bf16 %v3213
    %v3494 = vunpack.c.l.s8.bf16 %v3214
    %v3495 = vunpack.c.l.s8.bf16 %v3215
    %v3496 = vunpack.c.l.s8.bf16 %v3216
    %v3497 = vunpack.c.l.s8.bf16 %v3217
    %v3498 = vunpack.c.l.s8.bf16 %v3218
    %v3499 = vunpack.c.l.s8.bf16 %v3219
    %v3500 = vunpack.c.h.s8.bf16 %v3212
    %v3501 = vunpack.c.h.s8.bf16 %v3213
    %v3502 = vunpack.c.h.s8.bf16 %v3214
    %v3503 = vunpack.c.h.s8.bf16 %v3215
    %v3504 = vunpack.c.h.s8.bf16 %v3216
    %v3505 = vunpack.c.h.s8.bf16 %v3217
    %v3506 = vunpack.c.h.s8.bf16 %v3218
    %v3507 = vunpack.c.h.s8.bf16 %v3219
    %v3508 = vunpack.c.l.s8.bf16 %v3220
    %v3509 = vunpack.c.l.s8.bf16 %v3221
    %v3510 = vunpack.c.l.s8.bf16 %v3222
    %v3511 = vunpack.c.l.s8.bf16 %v3223
    %v3512 = vunpack.c.l.s8.bf16 %v3224
    %v3513 = vunpack.c.l.s8.bf16 %v3225
    %v3514 = vunpack.c.l.s8.bf16 %v3226
    %v3515 = vunpack.c.l.s8.bf16 %v3227
    %v3516 = vunpack.c.h.s8.bf16 %v3220
    %v3517 = vunpack.c.h.s8.bf16 %v3221
    %v3518 = vunpack.c.h.s8.bf16 %v3222
    %v3519 = vunpack.c.h.s8.bf16 %v3223
    %v3520 = vunpack.c.h.s8.bf16 %v3224
    %v3521 = vunpack.c.h.s8.bf16 %v3225
    %v3522 = vunpack.c.h.s8.bf16 %v3226
    %v3523 = vunpack.c.h.s8.bf16 %v3227
    %v3524 = vunpack.c.l.s8.bf16 %v3228
    %v3525 = vunpack.c.l.s8.bf16 %v3229
    %v3526 = vunpack.c.l.s8.bf16 %v3230
    %v3527 = vunpack.c.l.s8.bf16 %v3231
    %v3528 = vunpack.c.l.s8.bf16 %v3232
    %v3529 = vunpack.c.l.s8.bf16 %v3233
    %v3530 = vunpack.c.l.s8.bf16 %v3234
    %v3531 = vunpack.c.l.s8.bf16 %v3235
    %v3532 = vunpack.c.h.s8.bf16 %v3228
    %v3533 = vunpack.c.h.s8.bf16 %v3229
    %v3534 = vunpack.c.h.s8.bf16 %v3230
    %v3535 = vunpack.c.h.s8.bf16 %v3231
    %v3536 = vunpack.c.h.s8.bf16 %v3232
    %v3537 = vunpack.c.h.s8.bf16 %v3233
    %v3538 = vunpack.c.h.s8.bf16 %v3234
    %v3539 = vunpack.c.h.s8.bf16 %v3235
    %v3540 = vunpack.c.l.s8.bf16 %v3236
    %v3541 = vunpack.c.l.s8.bf16 %v3237
    %v3542 = vunpack.c.l.s8.bf16 %v3238
    %v3543 = vunpack.c.l.s8.bf16 %v3239
    %v3544 = vunpack.c.l.s8.bf16 %v3240
    %v3545 = vunpack.c.l.s8.bf16 %v3241
    %v3546 = vunpack.c.l.s8.bf16 %v3242
    %v3547 = vunpack.c.l.s8.bf16 %v3243
    %v3548 = vunpack.c.h.s8.bf16 %v3236
    %v3549 = vunpack.c.h.s8.bf16 %v3237
    %v3550 = vunpack.c.h.s8.bf16 %v3238
    %v3551 = vunpack.c.h.s8.bf16 %v3239
    %v3552 = vunpack.c.h.s8.bf16 %v3240
    %v3553 = vunpack.c.h.s8.bf16 %v3241
    %v3554 = vunpack.c.h.s8.bf16 %v3242
    %v3555 = vunpack.c.h.s8.bf16 %v3243
    %v3556 = vunpack.c.l.s8.bf16 %v3244
    %v3557 = vunpack.c.l.s8.bf16 %v3245
    %v3558 = vunpack.c.l.s8.bf16 %v3246
    %v3559 = vunpack.c.l.s8.bf16 %v3247
    %v3560 = vunpack.c.l.s8.bf16 %v3248
    %v3561 = vunpack.c.l.s8.bf16 %v3249
    %v3562 = vunpack.c.l.s8.bf16 %v3250
    %v3563 = vunpack.c.l.s8.bf16 %v3251
    %v3564 = vunpack.c.h.s8.bf16 %v3244
    %v3565 = vunpack.c.h.s8.bf16 %v3245
    %v3566 = vunpack.c.h.s8.bf16 %v3246
    %v3567 = vunpack.c.h.s8.bf16 %v3247
    %v3568 = vunpack.c.h.s8.bf16 %v3248
    %v3569 = vunpack.c.h.s8.bf16 %v3249
    %v3570 = vunpack.c.h.s8.bf16 %v3250
    %v3571 = vunpack.c.h.s8.bf16 %v3251
    %v3572 = vunpack.c.l.s8.bf16 %v3252
    %v3573 = vunpack.c.l.s8.bf16 %v3253
    %v3574 = vunpack.c.l.s8.bf16 %v3254
    %v3575 = vunpack.c.l.s8.bf16 %v3255
    %v3576 = vunpack.c.l.s8.bf16 %v3256
    %v3577 = vunpack.c.l.s8.bf16 %v3257
    %v3578 = vunpack.c.l.s8.bf16 %v3258
    %v3579 = vunpack.c.l.s8.bf16 %v3259
    %v3580 = vunpack.c.h.s8.bf16 %v3252
    %v3581 = vunpack.c.h.s8.bf16 %v3253
    %v3582 = vunpack.c.h.s8.bf16 %v3254
    %v3583 = vunpack.c.h.s8.bf16 %v3255
    %v3584 = vunpack.c.h.s8.bf16 %v3256
    %v3585 = vunpack.c.h.s8.bf16 %v3257
    %v3586 = vunpack.c.h.s8.bf16 %v3258
    %v3587 = vunpack.c.h.s8.bf16 %v3259
    %v3588 = vunpack.c.l.s8.bf16 %v3260
    %v3589 = vunpack.c.l.s8.bf16 %v3261
    %v3590 = vunpack.c.l.s8.bf16 %v3262
    %v3591 = vunpack.c.l.s8.bf16 %v3263
    %v3592 = vunpack.c.l.s8.bf16 %v3264
    %v3593 = vunpack.c.l.s8.bf16 %v3265
    %v3594 = vunpack.c.l.s8.bf16 %v3266
    %v3595 = vunpack.c.l.s8.bf16 %v3267
    %v3596 = vunpack.c.h.s8.bf16 %v3260
    %v3597 = vunpack.c.h.s8.bf16 %v3261
    %v3598 = vunpack.c.h.s8.bf16 %v3262
    %v3599 = vunpack.c.h.s8.bf16 %v3263
    %v3600 = vunpack.c.h.s8.bf16 %v3264
    %v3601 = vunpack.c.h.s8.bf16 %v3265
    %v3602 = vunpack.c.h.s8.bf16 %v3266
    %v3603 = vunpack.c.h.s8.bf16 %v3267
    %v3604 = vunpack.c.l.s8.bf16 %v3268
    %v3605 = vunpack.c.l.s8.bf16 %v3269
    %v3606 = vunpack.c.l.s8.bf16 %v3270
    %v3607 = vunpack.c.l.s8.bf16 %v3271
    %v3608 = vunpack.c.l.s8.bf16 %v3272
    %v3609 = vunpack.c.l.s8.bf16 %v3273
    %v3610 = vunpack.c.l.s8.bf16 %v3274
    %v3611 = vunpack.c.l.s8.bf16 %v3275
    %v3612 = vunpack.c.h.s8.bf16 %v3268
    %v3613 = vunpack.c.h.s8.bf16 %v3269
    %v3614 = vunpack.c.h.s8.bf16 %v3270
    %v3615 = vunpack.c.h.s8.bf16 %v3271
    %v3616 = vunpack.c.h.s8.bf16 %v3272
    %v3617 = vunpack.c.h.s8.bf16 %v3273
    %v3618 = vunpack.c.h.s8.bf16 %v3274
    %v3619 = vunpack.c.h.s8.bf16 %v3275
    %v3620 = vunpack.c.l.s8.bf16 %v3276
    %v3621 = vunpack.c.l.s8.bf16 %v3277
    %v3622 = vunpack.c.l.s8.bf16 %v3278
    %v3623 = vunpack.c.l.s8.bf16 %v3279
    %v3624 = vunpack.c.l.s8.bf16 %v3280
    %v3625 = vunpack.c.l.s8.bf16 %v3281
    %v3626 = vunpack.c.l.s8.bf16 %v3282
    %v3627 = vunpack.c.l.s8.bf16 %v3283
    %v3628 = vunpack.c.h.s8.bf16 %v3276
    %v3629 = vunpack.c.h.s8.bf16 %v3277
    %v3630 = vunpack.c.h.s8.bf16 %v3278
    %v3631 = vunpack.c.h.s8.bf16 %v3279
    %v3632 = vunpack.c.h.s8.bf16 %v3280
    %v3633 = vunpack.c.h.s8.bf16 %v3281
    %v3634 = vunpack.c.h.s8.bf16 %v3282
    %v3635 = vunpack.c.h.s8.bf16 %v3283
    %v3636 = vunpack.c.l.s8.bf16 %v3284
    %v3637 = vunpack.c.l.s8.bf16 %v3285
    %v3638 = vunpack.c.l.s8.bf16 %v3286
    %v3639 = vunpack.c.l.s8.bf16 %v3287
    %v3640 = vunpack.c.l.s8.bf16 %v3288
    %v3641 = vunpack.c.l.s8.bf16 %v3289
    %v3642 = vunpack.c.l.s8.bf16 %v3290
    %v3643 = vunpack.c.l.s8.bf16 %v3291
    %v3644 = vunpack.c.h.s8.bf16 %v3284
    %v3645 = vunpack.c.h.s8.bf16 %v3285
    %v3646 = vunpack.c.h.s8.bf16 %v3286
    %v3647 = vunpack.c.h.s8.bf16 %v3287
    %v3648 = vunpack.c.h.s8.bf16 %v3288
    %v3649 = vunpack.c.h.s8.bf16 %v3289
    %v3650 = vunpack.c.h.s8.bf16 %v3290
    %v3651 = vunpack.c.h.s8.bf16 %v3291
    %v3652 = vunpack.c.l.s8.bf16 %v3292
    %v3653 = vunpack.c.l.s8.bf16 %v3293
    %v3654 = vunpack.c.l.s8.bf16 %v3294
    %v3655 = vunpack.c.l.s8.bf16 %v3295
    %v3656 = vunpack.c.l.s8.bf16 %v3296
    %v3657 = vunpack.c.l.s8.bf16 %v3297
    %v3658 = vunpack.c.l.s8.bf16 %v3298
    %v3659 = vunpack.c.l.s8.bf16 %v3299
    %v3660 = vunpack.c.h.s8.bf16 %v3292
    %v3661 = vunpack.c.h.s8.bf16 %v3293
    %v3662 = vunpack.c.h.s8.bf16 %v3294
    %v3663 = vunpack.c.h.s8.bf16 %v3295
    %v3664 = vunpack.c.h.s8.bf16 %v3296
    %v3665 = vunpack.c.h.s8.bf16 %v3297
    %v3666 = vunpack.c.h.s8.bf16 %v3298
    %v3667 = vunpack.c.h.s8.bf16 %v3299
    %v3668 = vunpack.c.l.s8.bf16 %v3300
    %v3669 = vunpack.c.l.s8.bf16 %v3301
    %v3670 = vunpack.c.l.s8.bf16 %v3302
    %v3671 = vunpack.c.l.s8.bf16 %v3303
    %v3672 = vunpack.c.l.s8.bf16 %v3304
    %v3673 = vunpack.c.l.s8.bf16 %v3305
    %v3674 = vunpack.c.l.s8.bf16 %v3306
    %v3675 = vunpack.c.l.s8.bf16 %v3307
    %v3676 = vunpack.c.h.s8.bf16 %v3300
    %v3677 = vunpack.c.h.s8.bf16 %v3301
    %v3678 = vunpack.c.h.s8.bf16 %v3302
    %v3679 = vunpack.c.h.s8.bf16 %v3303
    %v3680 = vunpack.c.h.s8.bf16 %v3304
    %v3681 = vunpack.c.h.s8.bf16 %v3305
    %v3682 = vunpack.c.h.s8.bf16 %v3306
    %v3683 = vunpack.c.h.s8.bf16 %v3307
    %v3684 = vunpack.c.l.s8.bf16 %v3308
    %v3685 = vunpack.c.l.s8.bf16 %v3309
    %v3686 = vunpack.c.l.s8.bf16 %v3310
    %v3687 = vunpack.c.l.s8.bf16 %v3311
    %v3688 = vunpack.c.l.s8.bf16 %v3312
    %v3689 = vunpack.c.l.s8.bf16 %v3313
    %v3690 = vunpack.c.l.s8.bf16 %v3314
    %v3691 = vunpack.c.l.s8.bf16 %v3315
    %v3692 = vunpack.c.h.s8.bf16 %v3308
    %v3693 = vunpack.c.h.s8.bf16 %v3309
    %v3694 = vunpack.c.h.s8.bf16 %v3310
    %v3695 = vunpack.c.h.s8.bf16 %v3311
    %v3696 = vunpack.c.h.s8.bf16 %v3312
    %v3697 = vunpack.c.h.s8.bf16 %v3313
    %v3698 = vunpack.c.h.s8.bf16 %v3314
    %v3699 = vunpack.c.h.s8.bf16 %v3315
    %v3700 = vunpack.c.l.s8.bf16 %v3316
    %v3701 = vunpack.c.l.s8.bf16 %v3317
    %v3702 = vunpack.c.l.s8.bf16 %v3318
    %v3703 = vunpack.c.l.s8.bf16 %v3319
    %v3704 = vunpack.c.l.s8.bf16 %v3320
    %v3705 = vunpack.c.l.s8.bf16 %v3321
    %v3706 = vunpack.c.l.s8.bf16 %v3322
    %v3707 = vunpack.c.l.s8.bf16 %v3323
    %v3708 = vunpack.c.h.s8.bf16 %v3316
    %v3709 = vunpack.c.h.s8.bf16 %v3317
    %v3710 = vunpack.c.h.s8.bf16 %v3318
    %v3711 = vunpack.c.h.s8.bf16 %v3319
    %v3712 = vunpack.c.h.s8.bf16 %v3320
    %v3713 = vunpack.c.h.s8.bf16 %v3321
    %v3714 = vunpack.c.h.s8.bf16 %v3322
    %v3715 = vunpack.c.h.s8.bf16 %v3323
    %v3716 = vunpack.c.l.s8.bf16 %v3324
    %v3717 = vunpack.c.l.s8.bf16 %v3325
    %v3718 = vunpack.c.l.s8.bf16 %v3326
    %v3719 = vunpack.c.l.s8.bf16 %v3327
    %v3720 = vunpack.c.l.s8.bf16 %v3328
    %v3721 = vunpack.c.l.s8.bf16 %v3329
    %v3722 = vunpack.c.l.s8.bf16 %v3330
    %v3723 = vunpack.c.l.s8.bf16 %v3331
    %v3724 = vunpack.c.h.s8.bf16 %v3324
    %v3725 = vunpack.c.h.s8.bf16 %v3325
    %v3726 = vunpack.c.h.s8.bf16 %v3326
    %v3727 = vunpack.c.h.s8.bf16 %v3327
    %v3728 = vunpack.c.h.s8.bf16 %v3328
    %v3729 = vunpack.c.h.s8.bf16 %v3329
    %v3730 = vunpack.c.h.s8.bf16 %v3330
    %v3731 = vunpack.c.h.s8.bf16 %v3331
    %v3732 = vunpack.c.l.s8.bf16 %v3332
    %v3733 = vunpack.c.l.s8.bf16 %v3333
    %v3734 = vunpack.c.l.s8.bf16 %v3334
    %v3735 = vunpack.c.l.s8.bf16 %v3335
    %v3736 = vunpack.c.l.s8.bf16 %v3336
    %v3737 = vunpack.c.l.s8.bf16 %v3337
    %v3738 = vunpack.c.l.s8.bf16 %v3338
    %v3739 = vunpack.c.l.s8.bf16 %v3339
    %v3740 = vunpack.c.h.s8.bf16 %v3332
    %v3741 = vunpack.c.h.s8.bf16 %v3333
    %v3742 = vunpack.c.h.s8.bf16 %v3334
    %v3743 = vunpack.c.h.s8.bf16 %v3335
    %v3744 = vunpack.c.h.s8.bf16 %v3336
    %v3745 = vunpack.c.h.s8.bf16 %v3337
    %v3746 = vunpack.c.h.s8.bf16 %v3338
    %v3747 = vunpack.c.h.s8.bf16 %v3339
    %v3748 = vunpack.c.l.s8.bf16 %v3340
    %v3749 = vunpack.c.l.s8.bf16 %v3341
    %v3750 = vunpack.c.l.s8.bf16 %v3342
    %v3751 = vunpack.c.l.s8.bf16 %v3343
    %v3752 = vunpack.c.l.s8.bf16 %v3344
    %v3753 = vunpack.c.l.s8.bf16 %v3345
    %v3754 = vunpack.c.l.s8.bf16 %v3346
    %v3755 = vunpack.c.l.s8.bf16 %v3347
    %v3756 = vunpack.c.h.s8.bf16 %v3340
    %v3757 = vunpack.c.h.s8.bf16 %v3341
    %v3758 = vunpack.c.h.s8.bf16 %v3342
    %v3759 = vunpack.c.h.s8.bf16 %v3343
    %v3760 = vunpack.c.h.s8.bf16 %v3344
    %v3761 = vunpack.c.h.s8.bf16 %v3345
    %v3762 = vunpack.c.h.s8.bf16 %v3346
    %v3763 = vunpack.c.h.s8.bf16 %v3347
    %v3764 = vunpack.c.l.s8.bf16 %v3348
    %v3765 = vunpack.c.l.s8.bf16 %v3349
    %v3766 = vunpack.c.l.s8.bf16 %v3350
    %v3767 = vunpack.c.l.s8.bf16 %v3351
    %v3768 = vunpack.c.l.s8.bf16 %v3352
    %v3769 = vunpack.c.l.s8.bf16 %v3353
    %v3770 = vunpack.c.l.s8.bf16 %v3354
    %v3771 = vunpack.c.l.s8.bf16 %v3355
    %v3772 = vunpack.c.h.s8.bf16 %v3348
    %v3773 = vunpack.c.h.s8.bf16 %v3349
    %v3774 = vunpack.c.h.s8.bf16 %v3350
    %v3775 = vunpack.c.h.s8.bf16 %v3351
    %v3776 = vunpack.c.h.s8.bf16 %v3352
    %v3777 = vunpack.c.h.s8.bf16 %v3353
    %v3778 = vunpack.c.h.s8.bf16 %v3354
    %v3779 = vunpack.c.h.s8.bf16 %v3355
    %v3780 = vunpack.c.l.s8.bf16 %v3356
    %v3781 = vunpack.c.l.s8.bf16 %v3357
    %v3782 = vunpack.c.l.s8.bf16 %v3358
    %v3783 = vunpack.c.l.s8.bf16 %v3359
    %v3784 = vunpack.c.l.s8.bf16 %v3360
    %v3785 = vunpack.c.l.s8.bf16 %v3361
    %v3786 = vunpack.c.l.s8.bf16 %v3362
    %v3787 = vunpack.c.l.s8.bf16 %v3363
    %v3788 = vunpack.c.h.s8.bf16 %v3356
    %v3789 = vunpack.c.h.s8.bf16 %v3357
    %v3790 = vunpack.c.h.s8.bf16 %v3358
    %v3791 = vunpack.c.h.s8.bf16 %v3359
    %v3792 = vunpack.c.h.s8.bf16 %v3360
    %v3793 = vunpack.c.h.s8.bf16 %v3361
    %v3794 = vunpack.c.h.s8.bf16 %v3362
    %v3795 = vunpack.c.h.s8.bf16 %v3363
    %v3796 = vunpack.c.l.s8.bf16 %v3364
    %v3797 = vunpack.c.l.s8.bf16 %v3365
    %v3798 = vunpack.c.l.s8.bf16 %v3366
    %v3799 = vunpack.c.l.s8.bf16 %v3367
    %v3800 = vunpack.c.l.s8.bf16 %v3368
    %v3801 = vunpack.c.l.s8.bf16 %v3369
    %v3802 = vunpack.c.l.s8.bf16 %v3370
    %v3803 = vunpack.c.l.s8.bf16 %v3371
    %v3804 = vunpack.c.h.s8.bf16 %v3364
    %v3805 = vunpack.c.h.s8.bf16 %v3365
    %v3806 = vunpack.c.h.s8.bf16 %v3366
    %v3807 = vunpack.c.h.s8.bf16 %v3367
    %v3808 = vunpack.c.h.s8.bf16 %v3368
    %v3809 = vunpack.c.h.s8.bf16 %v3369
    %v3810 = vunpack.c.h.s8.bf16 %v3370
    %v3811 = vunpack.c.h.s8.bf16 %v3371
    %v3812 = vunpack.c.l.s8.bf16 %v3372
    %v3813 = vunpack.c.l.s8.bf16 %v3373
    %v3814 = vunpack.c.l.s8.bf16 %v3374
    %v3815 = vunpack.c.l.s8.bf16 %v3375
    %v3816 = vunpack.c.l.s8.bf16 %v3376
    %v3817 = vunpack.c.l.s8.bf16 %v3377
    %v3818 = vunpack.c.l.s8.bf16 %v3378
    %v3819 = vunpack.c.l.s8.bf16 %v3379
    %v3820 = vunpack.c.h.s8.bf16 %v3372
    %v3821 = vunpack.c.h.s8.bf16 %v3373
    %v3822 = vunpack.c.h.s8.bf16 %v3374
    %v3823 = vunpack.c.h.s8.bf16 %v3375
    %v3824 = vunpack.c.h.s8.bf16 %v3376
    %v3825 = vunpack.c.h.s8.bf16 %v3377
    %v3826 = vunpack.c.h.s8.bf16 %v3378
    %v3827 = vunpack.c.h.s8.bf16 %v3379
    %v3828 = vunpack.c.l.s8.bf16 %v3380
    %v3829 = vunpack.c.l.s8.bf16 %v3381
    %v3830 = vunpack.c.l.s8.bf16 %v3382
    %v3831 = vunpack.c.l.s8.bf16 %v3383
    %v3832 = vunpack.c.l.s8.bf16 %v3384
    %v3833 = vunpack.c.l.s8.bf16 %v3385
    %v3834 = vunpack.c.l.s8.bf16 %v3386
    %v3835 = vunpack.c.l.s8.bf16 %v3387
    %v3836 = vunpack.c.h.s8.bf16 %v3380
    %v3837 = vunpack.c.h.s8.bf16 %v3381
    %v3838 = vunpack.c.h.s8.bf16 %v3382
    %v3839 = vunpack.c.h.s8.bf16 %v3383
    %v3840 = vunpack.c.h.s8.bf16 %v3384
    %v3841 = vunpack.c.h.s8.bf16 %v3385
    %v3842 = vunpack.c.h.s8.bf16 %v3386
    %v3843 = vunpack.c.h.s8.bf16 %v3387
    %v3844 = vunpack.c.l.s8.bf16 %v3388
    %v3845 = vunpack.c.l.s8.bf16 %v3389
    %v3846 = vunpack.c.l.s8.bf16 %v3390
    %v3847 = vunpack.c.l.s8.bf16 %v3391
    %v3848 = vunpack.c.l.s8.bf16 %v3392
    %v3849 = vunpack.c.l.s8.bf16 %v3393
    %v3850 = vunpack.c.l.s8.bf16 %v3394
    %v3851 = vunpack.c.l.s8.bf16 %v3395
    %v3852 = vunpack.c.h.s8.bf16 %v3388
    %v3853 = vunpack.c.h.s8.bf16 %v3389
    %v3854 = vunpack.c.h.s8.bf16 %v3390
    %v3855 = vunpack.c.h.s8.bf16 %v3391
    %v3856 = vunpack.c.h.s8.bf16 %v3392
    %v3857 = vunpack.c.h.s8.bf16 %v3393
    %v3858 = vunpack.c.h.s8.bf16 %v3394
    %v3859 = vunpack.c.h.s8.bf16 %v3395
    %v3860 = vunpack.c.l.s8.bf16 %v3396
    %v3861 = vunpack.c.l.s8.bf16 %v3397
    %v3862 = vunpack.c.l.s8.bf16 %v3398
    %v3863 = vunpack.c.l.s8.bf16 %v3399
    %v3864 = vunpack.c.l.s8.bf16 %v3400
    %v3865 = vunpack.c.l.s8.bf16 %v3401
    %v3866 = vunpack.c.l.s8.bf16 %v3402
    %v3867 = vunpack.c.l.s8.bf16 %v3403
    %v3868 = vunpack.c.h.s8.bf16 %v3396
    %v3869 = vunpack.c.h.s8.bf16 %v3397
    %v3870 = vunpack.c.h.s8.bf16 %v3398
    %v3871 = vunpack.c.h.s8.bf16 %v3399
    %v3872 = vunpack.c.h.s8.bf16 %v3400
    %v3873 = vunpack.c.h.s8.bf16 %v3401
    %v3874 = vunpack.c.h.s8.bf16 %v3402
    %v3875 = vunpack.c.h.s8.bf16 %v3403
    %v3876 = vunpack.c.l.s8.bf16 %v3404
    %v3877 = vunpack.c.l.s8.bf16 %v3405
    %v3878 = vunpack.c.l.s8.bf16 %v3406
    %v3879 = vunpack.c.l.s8.bf16 %v3407
    %v3880 = vunpack.c.l.s8.bf16 %v3408
    %v3881 = vunpack.c.l.s8.bf16 %v3409
    %v3882 = vunpack.c.l.s8.bf16 %v3410
    %v3883 = vunpack.c.l.s8.bf16 %v3411
    %v3884 = vunpack.c.h.s8.bf16 %v3404
    %v3885 = vunpack.c.h.s8.bf16 %v3405
    %v3886 = vunpack.c.h.s8.bf16 %v3406
    %v3887 = vunpack.c.h.s8.bf16 %v3407
    %v3888 = vunpack.c.h.s8.bf16 %v3408
    %v3889 = vunpack.c.h.s8.bf16 %v3409
    %v3890 = vunpack.c.h.s8.bf16 %v3410
    %v3891 = vunpack.c.h.s8.bf16 %v3411
    %v3892 = vunpack.c.l.s8.bf16 %v3412
    %v3893 = vunpack.c.l.s8.bf16 %v3413
    %v3894 = vunpack.c.l.s8.bf16 %v3414
    %v3895 = vunpack.c.l.s8.bf16 %v3415
    %v3896 = vunpack.c.l.s8.bf16 %v3416
    %v3897 = vunpack.c.l.s8.bf16 %v3417
    %v3898 = vunpack.c.l.s8.bf16 %v3418
    %v3899 = vunpack.c.l.s8.bf16 %v3419
    %v3900 = vunpack.c.h.s8.bf16 %v3412
    %v3901 = vunpack.c.h.s8.bf16 %v3413
    %v3902 = vunpack.c.h.s8.bf16 %v3414
    %v3903 = vunpack.c.h.s8.bf16 %v3415
    %v3904 = vunpack.c.h.s8.bf16 %v3416
    %v3905 = vunpack.c.h.s8.bf16 %v3417
    %v3906 = vunpack.c.h.s8.bf16 %v3418
    %v3907 = vunpack.c.h.s8.bf16 %v3419
    %v3908 = vunpack.c.l.s8.bf16 %v3420
    %v3909 = vunpack.c.l.s8.bf16 %v3421
    %v3910 = vunpack.c.l.s8.bf16 %v3422
    %v3911 = vunpack.c.l.s8.bf16 %v3423
    %v3912 = vunpack.c.l.s8.bf16 %v3424
    %v3913 = vunpack.c.l.s8.bf16 %v3425
    %v3914 = vunpack.c.l.s8.bf16 %v3426
    %v3915 = vunpack.c.l.s8.bf16 %v3427
    %v3916 = vunpack.c.h.s8.bf16 %v3420
    %v3917 = vunpack.c.h.s8.bf16 %v3421
    %v3918 = vunpack.c.h.s8.bf16 %v3422
    %v3919 = vunpack.c.h.s8.bf16 %v3423
    %v3920 = vunpack.c.h.s8.bf16 %v3424
    %v3921 = vunpack.c.h.s8.bf16 %v3425
    %v3922 = vunpack.c.h.s8.bf16 %v3426
    %v3923 = vunpack.c.h.s8.bf16 %v3427
    %v3924 = vunpack.c.l.s8.bf16 %v3428
    %v3925 = vunpack.c.l.s8.bf16 %v3429
    %v3926 = vunpack.c.l.s8.bf16 %v3430
    %v3927 = vunpack.c.l.s8.bf16 %v3431
    %v3928 = vunpack.c.l.s8.bf16 %v3432
    %v3929 = vunpack.c.l.s8.bf16 %v3433
    %v3930 = vunpack.c.l.s8.bf16 %v3434
    %v3931 = vunpack.c.l.s8.bf16 %v3435
    %v3932 = vunpack.c.h.s8.bf16 %v3428
    %v3933 = vunpack.c.h.s8.bf16 %v3429
    %v3934 = vunpack.c.h.s8.bf16 %v3430
    %v3935 = vunpack.c.h.s8.bf16 %v3431
    %v3936 = vunpack.c.h.s8.bf16 %v3432
    %v3937 = vunpack.c.h.s8.bf16 %v3433
    %v3938 = vunpack.c.h.s8.bf16 %v3434
    %v3939 = vunpack.c.h.s8.bf16 %v3435
    %v3940 = vunpack.c.l.s8.bf16 %v3436
    %v3941 = vunpack.c.l.s8.bf16 %v3437
    %v3942 = vunpack.c.l.s8.bf16 %v3438
    %v3943 = vunpack.c.l.s8.bf16 %v3439
    %v3944 = vunpack.c.l.s8.bf16 %v3440
    %v3945 = vunpack.c.l.s8.bf16 %v3441
    %v3946 = vunpack.c.l.s8.bf16 %v3442
    %v3947 = vunpack.c.l.s8.bf16 %v3443
    %v3948 = vunpack.c.h.s8.bf16 %v3436
    %v3949 = vunpack.c.h.s8.bf16 %v3437
    %v3950 = vunpack.c.h.s8.bf16 %v3438
    %v3951 = vunpack.c.h.s8.bf16 %v3439
    %v3952 = vunpack.c.h.s8.bf16 %v3440
    %v3953 = vunpack.c.h.s8.bf16 %v3441
    %v3954 = vunpack.c.h.s8.bf16 %v3442
    %v3955 = vunpack.c.h.s8.bf16 %v3443
    %3956 = vmatprep.subr.bf16.mxu0 %v3501
    %3957 = vmatpush1.bf16.msra.mxu0 %v3500
    %3958 = vmatprep.subr.bf16.mxu0 %v3493
    %3959 = vmatpush1.bf16.msra.mxu0 %v3492
    %3960 = vmatprep.subr.bf16.mxu0 %v3485
    %3961 = vmatpush1.bf16.msra.mxu0 %v3484
    %3962 = vmatprep.subr.bf16.mxu0 %v3477
    %3963 = vmatpush1.bf16.msra.mxu0 %v3476
    %3964 = vmatprep.subr.bf16.mxu0 %v3469
    %3965 = vmatpush1.bf16.msra.mxu0 %v3468
    %3966 = vmatprep.subr.bf16.mxu0 %v3461
    %3967 = vmatpush1.bf16.msra.mxu0 %v3460
    %3968 = vmatprep.subr.bf16.mxu0 %v3453
    %3969 = vmatpush1.bf16.msra.mxu0 %v3452
    %3970 = vmatprep.subr.bf16.mxu0 %v3445
    %3971 = vmatpush1.bf16.msra.mxu0 %v3444
    %3972 = vmatprep.subr.bf16.mxu0 %v3565
    %3973 = vmatpush2.bf16.msra.mxu0 %v3564
    %3974 = vmatprep.subr.bf16.mxu0 %v3557
    %3975 = vmatpush2.bf16.msra.mxu0 %v3556
    %3976 = vmatprep.subr.bf16.mxu0 %v3549
    %3977 = vmatpush2.bf16.msra.mxu0 %v3548
    %3978 = vmatprep.subr.bf16.mxu0 %v3541
    %3979 = vmatpush2.bf16.msra.mxu0 %v3540
    %3980 = vmatprep.subr.bf16.mxu0 %v3533
    %3981 = vmatpush2.bf16.msra.mxu0 %v3532
    %3982 = vmatprep.subr.bf16.mxu0 %v3525
    %3983 = vmatpush2.bf16.msra.mxu0 %v3524
    %3984 = vmatprep.subr.bf16.mxu0 %v3517
    %3985 = vmatpush2.bf16.msra.mxu0 %v3516
    %3986 = vmatprep.subr.bf16.mxu0 %v3509
    %3987 = vmatpush2.bf16.msra.mxu0 %v3508
    %3988 = vmatprep.mubr.bf16.mxu0 %v3180
    %3989 = vmatmul.mubr.bf16.gmra.mxu0 %v3179
    %v3990 = vpop.f32.mrf.mxu0
    %v3991 = vadd.f32 0.0, %v3990
    %v3992 = vpop.f32.mrf.mxu0
    %v3993 = vadd.f32 0.0, %v3992
    %v3994 = vpop.f32.mrf.mxu0
    %v3995 = vpop.f32.mrf.mxu0
    %3996 = vdwg.mxu0
    %3997 = vmatprep.subr.bf16.mxu0 %v3629
    %3998 = vmatpush1.bf16.msra.mxu0 %v3628
    %3999 = vmatprep.subr.bf16.mxu0 %v3621
    %4000 = vmatpush1.bf16.msra.mxu0 %v3620
    %4001 = vmatprep.subr.bf16.mxu0 %v3613
    %4002 = vmatpush1.bf16.msra.mxu0 %v3612
    %4003 = vmatprep.subr.bf16.mxu0 %v3605
    %4004 = vmatpush1.bf16.msra.mxu0 %v3604
    %4005 = vmatprep.subr.bf16.mxu0 %v3597
    %4006 = vmatpush1.bf16.msra.mxu0 %v3596
    %4007 = vmatprep.subr.bf16.mxu0 %v3589
    %4008 = vmatpush1.bf16.msra.mxu0 %v3588
    %4009 = vmatprep.subr.bf16.mxu0 %v3581
    %4010 = vmatpush1.bf16.msra.mxu0 %v3580
    %4011 = vmatprep.subr.bf16.mxu0 %v3573
    %4012 = vmatpush1.bf16.msra.mxu0 %v3572
    %4013 = vmatprep.subr.bf16.mxu0 %v3693
    %4014 = vmatpush2.bf16.msra.mxu0 %v3692
    %4015 = vmatprep.subr.bf16.mxu0 %v3685
    %4016 = vmatpush2.bf16.msra.mxu0 %v3684
    %4017 = vmatprep.subr.bf16.mxu0 %v3677
    %4018 = vmatpush2.bf16.msra.mxu0 %v3676
    %4019 = vmatprep.subr.bf16.mxu0 %v3669
    %4020 = vmatpush2.bf16.msra.mxu0 %v3668
    %4021 = vmatprep.subr.bf16.mxu0 %v3661
    %4022 = vmatpush2.bf16.msra.mxu0 %v3660
    %4023 = vmatprep.subr.bf16.mxu0 %v3653
    %4024 = vmatpush2.bf16.msra.mxu0 %v3652
    %4025 = vmatprep.subr.bf16.mxu0 %v3645
    %4026 = vmatpush2.bf16.msra.mxu0 %v3644
    %4027 = vmatprep.subr.bf16.mxu0 %v3637
    %4028 = vmatpush2.bf16.msra.mxu0 %v3636
    %4029 = vmatprep.mubr.bf16.mxu0 %v3182
    %4030 = vmatmul.mubr.bf16.gmra.mxu0 %v3181
    %v4031 = vpop.f32.mrf.mxu0
    %v4032 = vadd.f32 %v3991, %v4031
    %v4033 = vpop.f32.mrf.mxu0
    %v4034 = vadd.f32 %v3993, %v4033
    %v4035 = vpop.f32.mrf.mxu0
    %v4036 = vpop.f32.mrf.mxu0
    %4037 = vdwg.mxu0
    %4038 = vmatprep.subr.bf16.mxu0 %v3757
    %4039 = vmatpush1.bf16.msra.mxu0 %v3756
    %4040 = vmatprep.subr.bf16.mxu0 %v3749
    %4041 = vmatpush1.bf16.msra.mxu0 %v3748
    %4042 = vmatprep.subr.bf16.mxu0 %v3741
    %4043 = vmatpush1.bf16.msra.mxu0 %v3740
    %4044 = vmatprep.subr.bf16.mxu0 %v3733
    %4045 = vmatpush1.bf16.msra.mxu0 %v3732
    %4046 = vmatprep.subr.bf16.mxu0 %v3725
    %4047 = vmatpush1.bf16.msra.mxu0 %v3724
    %4048 = vmatprep.subr.bf16.mxu0 %v3717
    %4049 = vmatpush1.bf16.msra.mxu0 %v3716
    %4050 = vmatprep.subr.bf16.mxu0 %v3709
    %4051 = vmatpush1.bf16.msra.mxu0 %v3708
    %4052 = vmatprep.subr.bf16.mxu0 %v3701
    %4053 = vmatpush1.bf16.msra.mxu0 %v3700
    %4054 = vmatprep.subr.bf16.mxu0 %v3821
    %4055 = vmatpush2.bf16.msra.mxu0 %v3820
    %4056 = vmatprep.subr.bf16.mxu0 %v3813
    %4057 = vmatpush2.bf16.msra.mxu0 %v3812
    %4058 = vmatprep.subr.bf16.mxu0 %v3805
    %4059 = vmatpush2.bf16.msra.mxu0 %v3804
    %4060 = vmatprep.subr.bf16.mxu0 %v3797
    %4061 = vmatpush2.bf16.msra.mxu0 %v3796
    %4062 = vmatprep.subr.bf16.mxu0 %v3789
    %4063 = vmatpush2.bf16.msra.mxu0 %v3788
    %4064 = vmatprep.subr.bf16.mxu0 %v3781
    %4065 = vmatpush2.bf16.msra.mxu0 %v3780
    %4066 = vmatprep.subr.bf16.mxu0 %v3773
    %4067 = vmatpush2.bf16.msra.mxu0 %v3772
    %4068 = vmatprep.subr.bf16.mxu0 %v3765
    %4069 = vmatpush2.bf16.msra.mxu0 %v3764
    %4070 = vmatprep.mubr.bf16.mxu0 %v3184
    %4071 = vmatmul.mubr.bf16.gmra.mxu0 %v3183
    %v4072 = vpop.f32.mrf.mxu0
    %v4073 = vadd.f32 %v4032, %v4072
    %v4074 = vpop.f32.mrf.mxu0
    %v4075 = vadd.f32 %v4034, %v4074
    %v4076 = vpop.f32.mrf.mxu0
    %v4077 = vpop.f32.mrf.mxu0
    %4078 = vdwg.mxu0
    %4079 = vmatprep.subr.bf16.mxu0 %v3885
    %4080 = vmatpush1.bf16.msra.mxu0 %v3884
    %4081 = vmatprep.subr.bf16.mxu0 %v3877
    %4082 = vmatpush1.bf16.msra.mxu0 %v3876
    %4083 = vmatprep.subr.bf16.mxu0 %v3869
    %4084 = vmatpush1.bf16.msra.mxu0 %v3868
    %4085 = vmatprep.subr.bf16.mxu0 %v3861
    %4086 = vmatpush1.bf16.msra.mxu0 %v3860
    %4087 = vmatprep.subr.bf16.mxu0 %v3853
    %4088 = vmatpush1.bf16.msra.mxu0 %v3852
    %4089 = vmatprep.subr.bf16.mxu0 %v3845
    %4090 = vmatpush1.bf16.msra.mxu0 %v3844
    %4091 = vmatprep.subr.bf16.mxu0 %v3837
    %4092 = vmatpush1.bf16.msra.mxu0 %v3836
    %4093 = vmatprep.subr.bf16.mxu0 %v3829
    %4094 = vmatpush1.bf16.msra.mxu0 %v3828
    %4095 = vmatprep.subr.bf16.mxu0 %v3949
    %4096 = vmatpush2.bf16.msra.mxu0 %v3948
    %4097 = vmatprep.subr.bf16.mxu0 %v3941
    %4098 = vmatpush2.bf16.msra.mxu0 %v3940
    %4099 = vmatprep.subr.bf16.mxu0 %v3933
    %4100 = vmatpush2.bf16.msra.mxu0 %v3932
    %4101 = vmatprep.subr.bf16.mxu0 %v3925
    %4102 = vmatpush2.bf16.msra.mxu0 %v3924
    %4103 = vmatprep.subr.bf16.mxu0 %v3917
    %4104 = vmatpush2.bf16.msra.mxu0 %v3916
    %4105 = vmatprep.subr.bf16.mxu0 %v3909
    %4106 = vmatpush2.bf16.msra.mxu0 %v3908
    %4107 = vmatprep.subr.bf16.mxu0 %v3901
    %4108 = vmatpush2.bf16.msra.mxu0 %v3900
    %4109 = vmatprep.subr.bf16.mxu0 %v3893
    %4110 = vmatpush2.bf16.msra.mxu0 %v3892
    %4111 = vmatprep.mubr.bf16.mxu0 %v3186
    %4112 = vmatmul.mubr.bf16.gmra.mxu0 %v3185
    %v4113 = vpop.f32.mrf.mxu0
    %v4114 = vadd.f32 %v4073, %v4113
    %v4115 = vpop.f32.mrf.mxu0
    %v4116 = vadd.f32 %v4075, %v4115
    %v4117 = vpop.f32.mrf.mxu0
    %v4118 = vpop.f32.mrf.mxu0
    %4119 = vdwg.mxu0
    %4120 = vmatprep.subr.bf16.mxu0 %v3503
    %4121 = vmatpush1.bf16.msra.mxu0 %v3502
    %4122 = vmatprep.subr.bf16.mxu0 %v3495
    %4123 = vmatpush1.bf16.msra.mxu0 %v3494
    %4124 = vmatprep.subr.bf16.mxu0 %v3487
    %4125 = vmatpush1.bf16.msra.mxu0 %v3486
    %4126 = vmatprep.subr.bf16.mxu0 %v3479
    %4127 = vmatpush1.bf16.msra.mxu0 %v3478
    %4128 = vmatprep.subr.bf16.mxu0 %v3471
    %4129 = vmatpush1.bf16.msra.mxu0 %v3470
    %4130 = vmatprep.subr.bf16.mxu0 %v3463
    %4131 = vmatpush1.bf16.msra.mxu0 %v3462
    %4132 = vmatprep.subr.bf16.mxu0 %v3455
    %4133 = vmatpush1.bf16.msra.mxu0 %v3454
    %4134 = vmatprep.subr.bf16.mxu0 %v3447
    %4135 = vmatpush1.bf16.msra.mxu0 %v3446
    %4136 = vmatprep.subr.bf16.mxu0 %v3567
    %4137 = vmatpush2.bf16.msra.mxu0 %v3566
    %4138 = vmatprep.subr.bf16.mxu0 %v3559
    %4139 = vmatpush2.bf16.msra.mxu0 %v3558
    %4140 = vmatprep.subr.bf16.mxu0 %v3551
    %4141 = vmatpush2.bf16.msra.mxu0 %v3550
    %4142 = vmatprep.subr.bf16.mxu0 %v3543
    %4143 = vmatpush2.bf16.msra.mxu0 %v3542
    %4144 = vmatprep.subr.bf16.mxu0 %v3535
    %4145 = vmatpush2.bf16.msra.mxu0 %v3534
    %4146 = vmatprep.subr.bf16.mxu0 %v3527
    %4147 = vmatpush2.bf16.msra.mxu0 %v3526
    %4148 = vmatprep.subr.bf16.mxu0 %v3519
    %4149 = vmatpush2.bf16.msra.mxu0 %v3518
    %4150 = vmatprep.subr.bf16.mxu0 %v3511
    %4151 = vmatpush2.bf16.msra.mxu0 %v3510
    %4152 = vmatprep.mubr.bf16.mxu0 %v3180
    %4153 = vmatmul.mubr.bf16.gmra.mxu0 %v3179
    %v4154 = vpop.f32.mrf.mxu0
    %v4155 = vadd.f32 0.0, %v4154
    %v4156 = vpop.f32.mrf.mxu0
    %v4157 = vadd.f32 0.0, %v4156
    %v4158 = vpop.f32.mrf.mxu0
    %v4159 = vpop.f32.mrf.mxu0
    %4160 = vdwg.mxu0
    %4161 = vmatprep.subr.bf16.mxu0 %v3631
    %4162 = vmatpush1.bf16.msra.mxu0 %v3630
    %4163 = vmatprep.subr.bf16.mxu0 %v3623
    %4164 = vmatpush1.bf16.msra.mxu0 %v3622
    %4165 = vmatprep.subr.bf16.mxu0 %v3615
    %4166 = vmatpush1.bf16.msra.mxu0 %v3614
    %4167 = vmatprep.subr.bf16.mxu0 %v3607
    %4168 = vmatpush1.bf16.msra.mxu0 %v3606
    %4169 = vmatprep.subr.bf16.mxu0 %v3599
    %4170 = vmatpush1.bf16.msra.mxu0 %v3598
    %4171 = vmatprep.subr.bf16.mxu0 %v3591
    %4172 = vmatpush1.bf16.msra.mxu0 %v3590
    %4173 = vmatprep.subr.bf16.mxu0 %v3583
    %4174 = vmatpush1.bf16.msra.mxu0 %v3582
    %4175 = vmatprep.subr.bf16.mxu0 %v3575
    %4176 = vmatpush1.bf16.msra.mxu0 %v3574
    %4177 = vmatprep.subr.bf16.mxu0 %v3695
    %4178 = vmatpush2.bf16.msra.mxu0 %v3694
    %4179 = vmatprep.subr.bf16.mxu0 %v3687
    %4180 = vmatpush2.bf16.msra.mxu0 %v3686
    %4181 = vmatprep.subr.bf16.mxu0 %v3679
    %4182 = vmatpush2.bf16.msra.mxu0 %v3678
    %4183 = vmatprep.subr.bf16.mxu0 %v3671
    %4184 = vmatpush2.bf16.msra.mxu0 %v3670
    %4185 = vmatprep.subr.bf16.mxu0 %v3663
    %4186 = vmatpush2.bf16.msra.mxu0 %v3662
    %4187 = vmatprep.subr.bf16.mxu0 %v3655
    %4188 = vmatpush2.bf16.msra.mxu0 %v3654
    %4189 = vmatprep.subr.bf16.mxu0 %v3647
    %4190 = vmatpush2.bf16.msra.mxu0 %v3646
    %4191 = vmatprep.subr.bf16.mxu0 %v3639
    %4192 = vmatpush2.bf16.msra.mxu0 %v3638
    %4193 = vmatprep.mubr.bf16.mxu0 %v3182
    %4194 = vmatmul.mubr.bf16.gmra.mxu0 %v3181
    %v4195 = vpop.f32.mrf.mxu0
    %v4196 = vadd.f32 %v4155, %v4195
    %v4197 = vpop.f32.mrf.mxu0
    %v4198 = vadd.f32 %v4157, %v4197
    %v4199 = vpop.f32.mrf.mxu0
    %v4200 = vpop.f32.mrf.mxu0
    %4201 = vdwg.mxu0
    %4202 = vmatprep.subr.bf16.mxu0 %v3759
    %4203 = vmatpush1.bf16.msra.mxu0 %v3758
    %4204 = vmatprep.subr.bf16.mxu0 %v3751
    %4205 = vmatpush1.bf16.msra.mxu0 %v3750
    %4206 = vmatprep.subr.bf16.mxu0 %v3743
    %4207 = vmatpush1.bf16.msra.mxu0 %v3742
    %4208 = vmatprep.subr.bf16.mxu0 %v3735
    %4209 = vmatpush1.bf16.msra.mxu0 %v3734
    %4210 = vmatprep.subr.bf16.mxu0 %v3727
    %4211 = vmatpush1.bf16.msra.mxu0 %v3726
    %4212 = vmatprep.subr.bf16.mxu0 %v3719
    %4213 = vmatpush1.bf16.msra.mxu0 %v3718
    %4214 = vmatprep.subr.bf16.mxu0 %v3711
    %4215 = vmatpush1.bf16.msra.mxu0 %v3710
    %4216 = vmatprep.subr.bf16.mxu0 %v3703
    %4217 = vmatpush1.bf16.msra.mxu0 %v3702
    %4218 = vmatprep.subr.bf16.mxu0 %v3823
    %4219 = vmatpush2.bf16.msra.mxu0 %v3822
    %4220 = vmatprep.subr.bf16.mxu0 %v3815
    %4221 = vmatpush2.bf16.msra.mxu0 %v3814
    %4222 = vmatprep.subr.bf16.mxu0 %v3807
    %4223 = vmatpush2.bf16.msra.mxu0 %v3806
    %4224 = vmatprep.subr.bf16.mxu0 %v3799
    %4225 = vmatpush2.bf16.msra.mxu0 %v3798
    %4226 = vmatprep.subr.bf16.mxu0 %v3791
    %4227 = vmatpush2.bf16.msra.mxu0 %v3790
    %4228 = vmatprep.subr.bf16.mxu0 %v3783
    %4229 = vmatpush2.bf16.msra.mxu0 %v3782
    %4230 = vmatprep.subr.bf16.mxu0 %v3775
    %4231 = vmatpush2.bf16.msra.mxu0 %v3774
    %4232 = vmatprep.subr.bf16.mxu0 %v3767
    %4233 = vmatpush2.bf16.msra.mxu0 %v3766
    %4234 = vmatprep.mubr.bf16.mxu0 %v3184
    %4235 = vmatmul.mubr.bf16.gmra.mxu0 %v3183
    %v4236 = vpop.f32.mrf.mxu0
    %v4237 = vadd.f32 %v4196, %v4236
    %v4238 = vpop.f32.mrf.mxu0
    %v4239 = vadd.f32 %v4198, %v4238
    %v4240 = vpop.f32.mrf.mxu0
    %v4241 = vpop.f32.mrf.mxu0
    %4242 = vdwg.mxu0
    %4243 = vmatprep.subr.bf16.mxu0 %v3887
    %4244 = vmatpush1.bf16.msra.mxu0 %v3886
    %4245 = vmatprep.subr.bf16.mxu0 %v3879
    %4246 = vmatpush1.bf16.msra.mxu0 %v3878
    %4247 = vmatprep.subr.bf16.mxu0 %v3871
    %4248 = vmatpush1.bf16.msra.mxu0 %v3870
    %4249 = vmatprep.subr.bf16.mxu0 %v3863
    %4250 = vmatpush1.bf16.msra.mxu0 %v3862
    %4251 = vmatprep.subr.bf16.mxu0 %v3855
    %4252 = vmatpush1.bf16.msra.mxu0 %v3854
    %4253 = vmatprep.subr.bf16.mxu0 %v3847
    %4254 = vmatpush1.bf16.msra.mxu0 %v3846
    %4255 = vmatprep.subr.bf16.mxu0 %v3839
    %4256 = vmatpush1.bf16.msra.mxu0 %v3838
    %4257 = vmatprep.subr.bf16.mxu0 %v3831
    %4258 = vmatpush1.bf16.msra.mxu0 %v3830
    %4259 = vmatprep.subr.bf16.mxu0 %v3951
    %4260 = vmatpush2.bf16.msra.mxu0 %v3950
    %4261 = vmatprep.subr.bf16.mxu0 %v3943
    %4262 = vmatpush2.bf16.msra.mxu0 %v3942
    %4263 = vmatprep.subr.bf16.mxu0 %v3935
    %4264 = vmatpush2.bf16.msra.mxu0 %v3934
    %4265 = vmatprep.subr.bf16.mxu0 %v3927
    %4266 = vmatpush2.bf16.msra.mxu0 %v3926
    %4267 = vmatprep.subr.bf16.mxu0 %v3919
    %4268 = vmatpush2.bf16.msra.mxu0 %v3918
    %4269 = vmatprep.subr.bf16.mxu0 %v3911
    %4270 = vmatpush2.bf16.msra.mxu0 %v3910
    %4271 = vmatprep.subr.bf16.mxu0 %v3903
    %4272 = vmatpush2.bf16.msra.mxu0 %v3902
    %4273 = vmatprep.subr.bf16.mxu0 %v3895
    %4274 = vmatpush2.bf16.msra.mxu0 %v3894
    %4275 = vmatprep.mubr.bf16.mxu0 %v3186
    %4276 = vmatmul.mubr.bf16.gmra.mxu0 %v3185
    %v4277 = vpop.f32.mrf.mxu0
    %v4278 = vadd.f32 %v4237, %v4277
    %v4279 = vpop.f32.mrf.mxu0
    %v4280 = vadd.f32 %v4239, %v4279
    %v4281 = vpop.f32.mrf.mxu0
    %v4282 = vpop.f32.mrf.mxu0
    %4283 = vdwg.mxu0
    %4284 = vmatprep.subr.bf16.mxu0 %v3505
    %4285 = vmatpush1.bf16.msra.mxu0 %v3504
    %4286 = vmatprep.subr.bf16.mxu0 %v3497
    %4287 = vmatpush1.bf16.msra.mxu0 %v3496
    %4288 = vmatprep.subr.bf16.mxu0 %v3489
    %4289 = vmatpush1.bf16.msra.mxu0 %v3488
    %4290 = vmatprep.subr.bf16.mxu0 %v3481
    %4291 = vmatpush1.bf16.msra.mxu0 %v3480
    %4292 = vmatprep.subr.bf16.mxu0 %v3473
    %4293 = vmatpush1.bf16.msra.mxu0 %v3472
    %4294 = vmatprep.subr.bf16.mxu0 %v3465
    %4295 = vmatpush1.bf16.msra.mxu0 %v3464
    %4296 = vmatprep.subr.bf16.mxu0 %v3457
    %4297 = vmatpush1.bf16.msra.mxu0 %v3456
    %4298 = vmatprep.subr.bf16.mxu0 %v3449
    %4299 = vmatpush1.bf16.msra.mxu0 %v3448
    %4300 = vmatprep.subr.bf16.mxu0 %v3569
    %4301 = vmatpush2.bf16.msra.mxu0 %v3568
    %4302 = vmatprep.subr.bf16.mxu0 %v3561
    %4303 = vmatpush2.bf16.msra.mxu0 %v3560
    %4304 = vmatprep.subr.bf16.mxu0 %v3553
    %4305 = vmatpush2.bf16.msra.mxu0 %v3552
    %4306 = vmatprep.subr.bf16.mxu0 %v3545
    %4307 = vmatpush2.bf16.msra.mxu0 %v3544
    %4308 = vmatprep.subr.bf16.mxu0 %v3537
    %4309 = vmatpush2.bf16.msra.mxu0 %v3536
    %4310 = vmatprep.subr.bf16.mxu0 %v3529
    %4311 = vmatpush2.bf16.msra.mxu0 %v3528
    %4312 = vmatprep.subr.bf16.mxu0 %v3521
    %4313 = vmatpush2.bf16.msra.mxu0 %v3520
    %4314 = vmatprep.subr.bf16.mxu0 %v3513
    %4315 = vmatpush2.bf16.msra.mxu0 %v3512
    %4316 = vmatprep.mubr.bf16.mxu0 %v3180
    %4317 = vmatmul.mubr.bf16.gmra.mxu0 %v3179
    %v4318 = vpop.f32.mrf.mxu0
    %v4319 = vadd.f32 0.0, %v4318
    %v4320 = vpop.f32.mrf.mxu0
    %v4321 = vadd.f32 0.0, %v4320
    %v4322 = vpop.f32.mrf.mxu0
    %v4323 = vpop.f32.mrf.mxu0
    %4324 = vdwg.mxu0
    %4325 = vmatprep.subr.bf16.mxu0 %v3633
    %4326 = vmatpush1.bf16.msra.mxu0 %v3632
    %4327 = vmatprep.subr.bf16.mxu0 %v3625
    %4328 = vmatpush1.bf16.msra.mxu0 %v3624
    %4329 = vmatprep.subr.bf16.mxu0 %v3617
    %4330 = vmatpush1.bf16.msra.mxu0 %v3616
    %4331 = vmatprep.subr.bf16.mxu0 %v3609
    %4332 = vmatpush1.bf16.msra.mxu0 %v3608
    %4333 = vmatprep.subr.bf16.mxu0 %v3601
    %4334 = vmatpush1.bf16.msra.mxu0 %v3600
    %4335 = vmatprep.subr.bf16.mxu0 %v3593
    %4336 = vmatpush1.bf16.msra.mxu0 %v3592
    %4337 = vmatprep.subr.bf16.mxu0 %v3585
    %4338 = vmatpush1.bf16.msra.mxu0 %v3584
    %4339 = vmatprep.subr.bf16.mxu0 %v3577
    %4340 = vmatpush1.bf16.msra.mxu0 %v3576
    %4341 = vmatprep.subr.bf16.mxu0 %v3697
    %4342 = vmatpush2.bf16.msra.mxu0 %v3696
    %4343 = vmatprep.subr.bf16.mxu0 %v3689
    %4344 = vmatpush2.bf16.msra.mxu0 %v3688
    %4345 = vmatprep.subr.bf16.mxu0 %v3681
    %4346 = vmatpush2.bf16.msra.mxu0 %v3680
    %4347 = vmatprep.subr.bf16.mxu0 %v3673
    %4348 = vmatpush2.bf16.msra.mxu0 %v3672
    %4349 = vmatprep.subr.bf16.mxu0 %v3665
    %4350 = vmatpush2.bf16.msra.mxu0 %v3664
    %4351 = vmatprep.subr.bf16.mxu0 %v3657
    %4352 = vmatpush2.bf16.msra.mxu0 %v3656
    %4353 = vmatprep.subr.bf16.mxu0 %v3649
    %4354 = vmatpush2.bf16.msra.mxu0 %v3648
    %4355 = vmatprep.subr.bf16.mxu0 %v3641
    %4356 = vmatpush2.bf16.msra.mxu0 %v3640
    %4357 = vmatprep.mubr.bf16.mxu0 %v3182
    %4358 = vmatmul.mubr.bf16.gmra.mxu0 %v3181
    %v4359 = vpop.f32.mrf.mxu0
    %v4360 = vadd.f32 %v4319, %v4359
    %v4361 = vpop.f32.mrf.mxu0
    %v4362 = vadd.f32 %v4321, %v4361
    %v4363 = vpop.f32.mrf.mxu0
    %v4364 = vpop.f32.mrf.mxu0
    %4365 = vdwg.mxu0
    %4366 = vmatprep.subr.bf16.mxu0 %v3761
    %4367 = vmatpush1.bf16.msra.mxu0 %v3760
    %4368 = vmatprep.subr.bf16.mxu0 %v3753
    %4369 = vmatpush1.bf16.msra.mxu0 %v3752
    %4370 = vmatprep.subr.bf16.mxu0 %v3745
    %4371 = vmatpush1.bf16.msra.mxu0 %v3744
    %4372 = vmatprep.subr.bf16.mxu0 %v3737
    %4373 = vmatpush1.bf16.msra.mxu0 %v3736
    %4374 = vmatprep.subr.bf16.mxu0 %v3729
    %4375 = vmatpush1.bf16.msra.mxu0 %v3728
    %4376 = vmatprep.subr.bf16.mxu0 %v3721
    %4377 = vmatpush1.bf16.msra.mxu0 %v3720
    %4378 = vmatprep.subr.bf16.mxu0 %v3713
    %4379 = vmatpush1.bf16.msra.mxu0 %v3712
    %4380 = vmatprep.subr.bf16.mxu0 %v3705
    %4381 = vmatpush1.bf16.msra.mxu0 %v3704
    %4382 = vmatprep.subr.bf16.mxu0 %v3825
    %4383 = vmatpush2.bf16.msra.mxu0 %v3824
    %4384 = vmatprep.subr.bf16.mxu0 %v3817
    %4385 = vmatpush2.bf16.msra.mxu0 %v3816
    %4386 = vmatprep.subr.bf16.mxu0 %v3809
    %4387 = vmatpush2.bf16.msra.mxu0 %v3808
    %4388 = vmatprep.subr.bf16.mxu0 %v3801
    %4389 = vmatpush2.bf16.msra.mxu0 %v3800
    %4390 = vmatprep.subr.bf16.mxu0 %v3793
    %4391 = vmatpush2.bf16.msra.mxu0 %v3792
    %4392 = vmatprep.subr.bf16.mxu0 %v3785
    %4393 = vmatpush2.bf16.msra.mxu0 %v3784
    %4394 = vmatprep.subr.bf16.mxu0 %v3777
    %4395 = vmatpush2.bf16.msra.mxu0 %v3776
    %4396 = vmatprep.subr.bf16.mxu0 %v3769
    %4397 = vmatpush2.bf16.msra.mxu0 %v3768
    %4398 = vmatprep.mubr.bf16.mxu0 %v3184
    %4399 = vmatmul.mubr.bf16.gmra.mxu0 %v3183
    %v4400 = vpop.f32.mrf.mxu0
    %v4401 = vadd.f32 %v4360, %v4400
    %v4402 = vpop.f32.mrf.mxu0
    %v4403 = vadd.f32 %v4362, %v4402
    %v4404 = vpop.f32.mrf.mxu0
    %v4405 = vpop.f32.mrf.mxu0
    %4406 = vdwg.mxu0
    %4407 = vmatprep.subr.bf16.mxu0 %v3889
    %4408 = vmatpush1.bf16.msra.mxu0 %v3888
    %4409 = vmatprep.subr.bf16.mxu0 %v3881
    %4410 = vmatpush1.bf16.msra.mxu0 %v3880
    %4411 = vmatprep.subr.bf16.mxu0 %v3873
    %4412 = vmatpush1.bf16.msra.mxu0 %v3872
    %4413 = vmatprep.subr.bf16.mxu0 %v3865
    %4414 = vmatpush1.bf16.msra.mxu0 %v3864
    %4415 = vmatprep.subr.bf16.mxu0 %v3857
    %4416 = vmatpush1.bf16.msra.mxu0 %v3856
    %4417 = vmatprep.subr.bf16.mxu0 %v3849
    %4418 = vmatpush1.bf16.msra.mxu0 %v3848
    %4419 = vmatprep.subr.bf16.mxu0 %v3841
    %4420 = vmatpush1.bf16.msra.mxu0 %v3840
    %4421 = vmatprep.subr.bf16.mxu0 %v3833
    %4422 = vmatpush1.bf16.msra.mxu0 %v3832
    %4423 = vmatprep.subr.bf16.mxu0 %v3953
    %4424 = vmatpush2.bf16.msra.mxu0 %v3952
    %4425 = vmatprep.subr.bf16.mxu0 %v3945
    %4426 = vmatpush2.bf16.msra.mxu0 %v3944
    %4427 = vmatprep.subr.bf16.mxu0 %v3937
    %4428 = vmatpush2.bf16.msra.mxu0 %v3936
    %4429 = vmatprep.subr.bf16.mxu0 %v3929
    %4430 = vmatpush2.bf16.msra.mxu0 %v3928
    %4431 = vmatprep.subr.bf16.mxu0 %v3921
    %4432 = vmatpush2.bf16.msra.mxu0 %v3920
    %4433 = vmatprep.subr.bf16.mxu0 %v3913
    %4434 = vmatpush2.bf16.msra.mxu0 %v3912
    %4435 = vmatprep.subr.bf16.mxu0 %v3905
    %4436 = vmatpush2.bf16.msra.mxu0 %v3904
    %4437 = vmatprep.subr.bf16.mxu0 %v3897
    %4438 = vmatpush2.bf16.msra.mxu0 %v3896
    %4439 = vmatprep.mubr.bf16.mxu0 %v3186
    %4440 = vmatmul.mubr.bf16.gmra.mxu0 %v3185
    %v4441 = vpop.f32.mrf.mxu0
    %v4442 = vadd.f32 %v4401, %v4441
    %v4443 = vpop.f32.mrf.mxu0
    %v4444 = vadd.f32 %v4403, %v4443
    %v4445 = vpop.f32.mrf.mxu0
    %v4446 = vpop.f32.mrf.mxu0
    %4447 = vdwg.mxu0
    %4448 = vmatprep.subr.bf16.mxu0 %v3507
    %4449 = vmatpush1.bf16.msra.mxu0 %v3506
    %4450 = vmatprep.subr.bf16.mxu0 %v3499
    %4451 = vmatpush1.bf16.msra.mxu0 %v3498
    %4452 = vmatprep.subr.bf16.mxu0 %v3491
    %4453 = vmatpush1.bf16.msra.mxu0 %v3490
    %4454 = vmatprep.subr.bf16.mxu0 %v3483
    %4455 = vmatpush1.bf16.msra.mxu0 %v3482
    %4456 = vmatprep.subr.bf16.mxu0 %v3475
    %4457 = vmatpush1.bf16.msra.mxu0 %v3474
    %4458 = vmatprep.subr.bf16.mxu0 %v3467
    %4459 = vmatpush1.bf16.msra.mxu0 %v3466
    %4460 = vmatprep.subr.bf16.mxu0 %v3459
    %4461 = vmatpush1.bf16.msra.mxu0 %v3458
    %4462 = vmatprep.subr.bf16.mxu0 %v3451
    %4463 = vmatpush1.bf16.msra.mxu0 %v3450
    %4464 = vmatprep.subr.bf16.mxu0 %v3571
    %4465 = vmatpush2.bf16.msra.mxu0 %v3570
    %4466 = vmatprep.subr.bf16.mxu0 %v3563
    %4467 = vmatpush2.bf16.msra.mxu0 %v3562
    %4468 = vmatprep.subr.bf16.mxu0 %v3555
    %4469 = vmatpush2.bf16.msra.mxu0 %v3554
    %4470 = vmatprep.subr.bf16.mxu0 %v3547
    %4471 = vmatpush2.bf16.msra.mxu0 %v3546
    %4472 = vmatprep.subr.bf16.mxu0 %v3539
    %4473 = vmatpush2.bf16.msra.mxu0 %v3538
    %4474 = vmatprep.subr.bf16.mxu0 %v3531
    %4475 = vmatpush2.bf16.msra.mxu0 %v3530
    %4476 = vmatprep.subr.bf16.mxu0 %v3523
    %4477 = vmatpush2.bf16.msra.mxu0 %v3522
    %4478 = vmatprep.subr.bf16.mxu0 %v3515
    %4479 = vmatpush2.bf16.msra.mxu0 %v3514
    %4480 = vmatprep.mubr.bf16.mxu0 %v3180
    %4481 = vmatmul.mubr.bf16.gmra.mxu0 %v3179
    %v4482 = vpop.f32.mrf.mxu0
    %v4483 = vadd.f32 0.0, %v4482
    %v4484 = vpop.f32.mrf.mxu0
    %v4485 = vadd.f32 0.0, %v4484
    %v4486 = vpop.f32.mrf.mxu0
    %v4487 = vpop.f32.mrf.mxu0
    %4488 = vdwg.mxu0
    %4489 = vmatprep.subr.bf16.mxu0 %v3635
    %4490 = vmatpush1.bf16.msra.mxu0 %v3634
    %4491 = vmatprep.subr.bf16.mxu0 %v3627
    %4492 = vmatpush1.bf16.msra.mxu0 %v3626
    %4493 = vmatprep.subr.bf16.mxu0 %v3619
    %4494 = vmatpush1.bf16.msra.mxu0 %v3618
    %4495 = vmatprep.subr.bf16.mxu0 %v3611
    %4496 = vmatpush1.bf16.msra.mxu0 %v3610
    %4497 = vmatprep.subr.bf16.mxu0 %v3603
    %4498 = vmatpush1.bf16.msra.mxu0 %v3602
    %4499 = vmatprep.subr.bf16.mxu0 %v3595
    %4500 = vmatpush1.bf16.msra.mxu0 %v3594
    %4501 = vmatprep.subr.bf16.mxu0 %v3587
    %4502 = vmatpush1.bf16.msra.mxu0 %v3586
    %4503 = vmatprep.subr.bf16.mxu0 %v3579
    %4504 = vmatpush1.bf16.msra.mxu0 %v3578
    %4505 = vmatprep.subr.bf16.mxu0 %v3699
    %4506 = vmatpush2.bf16.msra.mxu0 %v3698
    %4507 = vmatprep.subr.bf16.mxu0 %v3691
    %4508 = vmatpush2.bf16.msra.mxu0 %v3690
    %4509 = vmatprep.subr.bf16.mxu0 %v3683
    %4510 = vmatpush2.bf16.msra.mxu0 %v3682
    %4511 = vmatprep.subr.bf16.mxu0 %v3675
    %4512 = vmatpush2.bf16.msra.mxu0 %v3674
    %4513 = vmatprep.subr.bf16.mxu0 %v3667
    %4514 = vmatpush2.bf16.msra.mxu0 %v3666
    %4515 = vmatprep.subr.bf16.mxu0 %v3659
    %4516 = vmatpush2.bf16.msra.mxu0 %v3658
    %4517 = vmatprep.subr.bf16.mxu0 %v3651
    %4518 = vmatpush2.bf16.msra.mxu0 %v3650
    %4519 = vmatprep.subr.bf16.mxu0 %v3643
    %4520 = vmatpush2.bf16.msra.mxu0 %v3642
    %4521 = vmatprep.mubr.bf16.mxu0 %v3182
    %4522 = vmatmul.mubr.bf16.gmra.mxu0 %v3181
    %v4523 = vpop.f32.mrf.mxu0
    %v4524 = vadd.f32 %v4483, %v4523
    %v4525 = vpop.f32.mrf.mxu0
    %v4526 = vadd.f32 %v4485, %v4525
    %v4527 = vpop.f32.mrf.mxu0
    %v4528 = vpop.f32.mrf.mxu0
    %4529 = vdwg.mxu0
    %4530 = vmatprep.subr.bf16.mxu0 %v3763
    %4531 = vmatpush1.bf16.msra.mxu0 %v3762
    %4532 = vmatprep.subr.bf16.mxu0 %v3755
    %4533 = vmatpush1.bf16.msra.mxu0 %v3754
    %4534 = vmatprep.subr.bf16.mxu0 %v3747
    %4535 = vmatpush1.bf16.msra.mxu0 %v3746
    %4536 = vmatprep.subr.bf16.mxu0 %v3739
    %4537 = vmatpush1.bf16.msra.mxu0 %v3738
    %4538 = vmatprep.subr.bf16.mxu0 %v3731
    %4539 = vmatpush1.bf16.msra.mxu0 %v3730
    %4540 = vmatprep.subr.bf16.mxu0 %v3723
    %4541 = vmatpush1.bf16.msra.mxu0 %v3722
    %4542 = vmatprep.subr.bf16.mxu0 %v3715
    %4543 = vmatpush1.bf16.msra.mxu0 %v3714
    %4544 = vmatprep.subr.bf16.mxu0 %v3707
    %4545 = vmatpush1.bf16.msra.mxu0 %v3706
    %4546 = vmatprep.subr.bf16.mxu0 %v3827
    %4547 = vmatpush2.bf16.msra.mxu0 %v3826
    %4548 = vmatprep.subr.bf16.mxu0 %v3819
    %4549 = vmatpush2.bf16.msra.mxu0 %v3818
    %4550 = vmatprep.subr.bf16.mxu0 %v3811
    %4551 = vmatpush2.bf16.msra.mxu0 %v3810
    %4552 = vmatprep.subr.bf16.mxu0 %v3803
    %4553 = vmatpush2.bf16.msra.mxu0 %v3802
    %4554 = vmatprep.subr.bf16.mxu0 %v3795
    %4555 = vmatpush2.bf16.msra.mxu0 %v3794
    %4556 = vmatprep.subr.bf16.mxu0 %v3787
    %4557 = vmatpush2.bf16.msra.mxu0 %v3786
    %4558 = vmatprep.subr.bf16.mxu0 %v3779
    %4559 = vmatpush2.bf16.msra.mxu0 %v3778
    %4560 = vmatprep.subr.bf16.mxu0 %v3771
    %4561 = vmatpush2.bf16.msra.mxu0 %v3770
    %4562 = vmatprep.mubr.bf16.mxu0 %v3184
    %4563 = vmatmul.mubr.bf16.gmra.mxu0 %v3183
    %v4564 = vpop.f32.mrf.mxu0
    %v4565 = vadd.f32 %v4524, %v4564
    %v4566 = vpop.f32.mrf.mxu0
    %v4567 = vadd.f32 %v4526, %v4566
    %v4568 = vpop.f32.mrf.mxu0
    %v4569 = vpop.f32.mrf.mxu0
    %4570 = vdwg.mxu0
    %4571 = vmatprep.subr.bf16.mxu0 %v3891
    %4572 = vmatpush1.bf16.msra.mxu0 %v3890
    %4573 = vmatprep.subr.bf16.mxu0 %v3883
    %4574 = vmatpush1.bf16.msra.mxu0 %v3882
    %4575 = vmatprep.subr.bf16.mxu0 %v3875
    %4576 = vmatpush1.bf16.msra.mxu0 %v3874
    %4577 = vmatprep.subr.bf16.mxu0 %v3867
    %4578 = vmatpush1.bf16.msra.mxu0 %v3866
    %4579 = vmatprep.subr.bf16.mxu0 %v3859
    %4580 = vmatpush1.bf16.msra.mxu0 %v3858
    %4581 = vmatprep.subr.bf16.mxu0 %v3851
    %4582 = vmatpush1.bf16.msra.mxu0 %v3850
    %4583 = vmatprep.subr.bf16.mxu0 %v3843
    %4584 = vmatpush1.bf16.msra.mxu0 %v3842
    %4585 = vmatprep.subr.bf16.mxu0 %v3835
    %4586 = vmatpush1.bf16.msra.mxu0 %v3834
    %4587 = vmatprep.subr.bf16.mxu0 %v3955
    %4588 = vmatpush2.bf16.msra.mxu0 %v3954
    %4589 = vmatprep.subr.bf16.mxu0 %v3947
    %4590 = vmatpush2.bf16.msra.mxu0 %v3946
    %4591 = vmatprep.subr.bf16.mxu0 %v3939
    %4592 = vmatpush2.bf16.msra.mxu0 %v3938
    %4593 = vmatprep.subr.bf16.mxu0 %v3931
    %4594 = vmatpush2.bf16.msra.mxu0 %v3930
    %4595 = vmatprep.subr.bf16.mxu0 %v3923
    %4596 = vmatpush2.bf16.msra.mxu0 %v3922
    %4597 = vmatprep.subr.bf16.mxu0 %v3915
    %4598 = vmatpush2.bf16.msra.mxu0 %v3914
    %4599 = vmatprep.subr.bf16.mxu0 %v3907
    %4600 = vmatpush2.bf16.msra.mxu0 %v3906
    %4601 = vmatprep.subr.bf16.mxu0 %v3899
    %4602 = vmatpush2.bf16.msra.mxu0 %v3898
    %4603 = vmatprep.mubr.bf16.mxu0 %v3186
    %4604 = vmatmul.mubr.bf16.gmra.mxu0 %v3185
    %v4605 = vpop.f32.mrf.mxu0
    %v4606 = vadd.f32 %v4565, %v4605
    %v4607 = vpop.f32.mrf.mxu0
    %v4608 = vadd.f32 %v4567, %v4607
    %v4609 = vpop.f32.mrf.mxu0
    %v4610 = vpop.f32.mrf.mxu0
    %4611 = vdwg.mxu0
    %s4612 = scalar_lea.vmem [#allocation6], 2
    %v4613 = vld [vmem:[%s4612] ss:$4 sm:$0xff]
    %v4615 = vlaneseq
    %v4616 = vshrl.u32 %v4615, 7
    %v4617 = vsub.s32 0, %v4616
    %v4618 = vrot.slane %v4613, %v4617
    %v4619 = vlaneseq
    %v4620 = vshrl.u32 %v4619, 7
    %v4621 = vsub.s32 1, %v4620
    %v4622 = vrot.slane %v4613, %v4621
    %v4623 = vlaneseq
    %v4624 = vshrl.u32 %v4623, 7
    %v4625 = vsub.s32 2, %v4624
    %v4626 = vrot.slane %v4613, %v4625
    %v4627 = vlaneseq
    %v4628 = vshrl.u32 %v4627, 7
    %v4629 = vsub.s32 3, %v4628
    %v4630 = vrot.slane %v4613, %v4629
    %v4631 = vlaneseq
    %v4632 = vshrl.u32 %v4631, 7
    %v4633 = vsub.s32 4, %v4632
    %v4634 = vrot.slane %v4613, %v4633
    %v4635 = vlaneseq
    %v4636 = vshrl.u32 %v4635, 7
    %v4637 = vsub.s32 5, %v4636
    %v4638 = vrot.slane %v4613, %v4637
    %v4639 = vlaneseq
    %v4640 = vshrl.u32 %v4639, 7
    %v4641 = vsub.s32 6, %v4640
    %v4642 = vrot.slane %v4613, %v4641
    %v4643 = vlaneseq
    %v4644 = vshrl.u32 %v4643, 7
    %v4645 = vsub.s32 7, %v4644
    %v4646 = vrot.slane %v4613, %v4645
    %v4655 = vmul.f32 %v4114, %v4618
    %v4656 = vmul.f32 %v4116, %v4622
    %v4657 = vmul.f32 %v4278, %v4626
    %v4658 = vmul.f32 %v4280, %v4630
    %v4659 = vmul.f32 %v4442, %v4634
    %v4660 = vmul.f32 %v4444, %v4638
    %v4661 = vmul.f32 %v4606, %v4642
    %v4662 = vmul.f32 %v4608, %v4646
    %s4663 = scalar_lea.vmem [#allocation7], 2
    %v4664 = vld [vmem:[%s4663] ss:$4 sm:$0xff]
    %v4666 = vlaneseq
    %v4667 = vshrl.u32 %v4666, 7
    %v4668 = vsub.s32 0, %v4667
    %v4669 = vrot.slane %v4664, %v4668
    %v4670 = vlaneseq
    %v4671 = vshrl.u32 %v4670, 7
    %v4672 = vsub.s32 1, %v4671
    %v4673 = vrot.slane %v4664, %v4672
    %v4674 = vlaneseq
    %v4675 = vshrl.u32 %v4674, 7
    %v4676 = vsub.s32 2, %v4675
    %v4677 = vrot.slane %v4664, %v4676
    %v4678 = vlaneseq
    %v4679 = vshrl.u32 %v4678, 7
    %v4680 = vsub.s32 3, %v4679
    %v4681 = vrot.slane %v4664, %v4680
    %v4682 = vlaneseq
    %v4683 = vshrl.u32 %v4682, 7
    %v4684 = vsub.s32 4, %v4683
    %v4685 = vrot.slane %v4664, %v4684
    %v4686 = vlaneseq
    %v4687 = vshrl.u32 %v4686, 7
    %v4688 = vsub.s32 5, %v4687
    %v4689 = vrot.slane %v4664, %v4688
    %v4690 = vlaneseq
    %v4691 = vshrl.u32 %v4690, 7
    %v4692 = vsub.s32 6, %v4691
    %v4693 = vrot.slane %v4664, %v4692
    %v4694 = vlaneseq
    %v4695 = vshrl.u32 %v4694, 7
    %v4696 = vsub.s32 7, %v4695
    %v4697 = vrot.slane %v4664, %v4696
    %v4706 = vadd.f32 %v4655, %v4669
    %v4707 = vadd.f32 %v4656, %v4673
    %v4708 = vadd.f32 %v4657, %v4677
    %v4709 = vadd.f32 %v4658, %v4681
    %v4710 = vadd.f32 %v4659, %v4685
    %v4711 = vadd.f32 %v4660, %v4689
    %v4712 = vadd.f32 %v4661, %v4693
    %v4713 = vadd.f32 %v4662, %v4697
    %v4714 = vtanh.pop %v4706
    %v4715 = vtanh.pop %v4707
    %v4716 = vtanh.pop %v4708
    %v4717 = vtanh.pop %v4709
    %v4718 = vtanh.pop %v4710
    %v4719 = vtanh.pop %v4711
    %v4720 = vtanh.pop %v4712
    %v4721 = vtanh.pop %v4713
    %v4722 = vpack.c.bf16 %v4714, %v4714
    %v4723 = vpack.c.bf16 %v4715, %v4715
    %v4724 = vpack.c.bf16 %v4716, %v4716
    %v4725 = vpack.c.bf16 %v4717, %v4717
    %v4726 = vpack.c.bf16 %v4718, %v4718
    %v4727 = vpack.c.bf16 %v4719, %v4719
    %v4728 = vpack.c.bf16 %v4720, %v4720
    %v4729 = vpack.c.bf16 %v4721, %v4721
    %v4730 = vld [vmem:[#allocation4] sm:$0xff]
    %v4731 = vld [vmem:[#allocation4 + $0x8] sm:$0xff]
    %v4732 = vld [vmem:[#allocation4 + $0x10] sm:$0xff]
    %v4733 = vld [vmem:[#allocation4 + $0x18] sm:$0xff]
    %v4734 = vld [vmem:[#allocation4 + $0x20] sm:$0xff]
    %v4735 = vld [vmem:[#allocation4 + $0x28] sm:$0xff]
    %v4736 = vld [vmem:[#allocation4 + $0x30] sm:$0xff]
    %v4737 = vld [vmem:[#allocation4 + $0x38] sm:$0xff]
    %v4738 = vld [vmem:[#allocation4 + $0x40] sm:$0xff]
    %v4739 = vld [vmem:[#allocation4 + $0x48] sm:$0xff]
    %v4740 = vld [vmem:[#allocation4 + $0x50] sm:$0xff]
    %v4741 = vld [vmem:[#allocation4 + $0x58] sm:$0xff]
    %v4742 = vld [vmem:[#allocation4 + $0x60] sm:$0xff]
    %v4743 = vld [vmem:[#allocation4 + $0x68] sm:$0xff]
    %v4744 = vld [vmem:[#allocation4 + $0x70] sm:$0xff]
    %v4745 = vld [vmem:[#allocation4 + $0x78] sm:$0xff]
    %v4746 = vld [vmem:[#allocation4 + $0x80] sm:$0xff]
    %v4747 = vld [vmem:[#allocation4 + $0x88] sm:$0xff]
    %v4748 = vld [vmem:[#allocation4 + $0x90] sm:$0xff]
    %v4749 = vld [vmem:[#allocation4 + $0x98] sm:$0xff]
    %v4750 = vld [vmem:[#allocation4 + $0xa0] sm:$0xff]
    %v4751 = vld [vmem:[#allocation4 + $0xa8] sm:$0xff]
    %v4752 = vld [vmem:[#allocation4 + $0xb0] sm:$0xff]
    %v4753 = vld [vmem:[#allocation4 + $0xb8] sm:$0xff]
    %v4754 = vld [vmem:[#allocation4 + $0xc0] sm:$0xff]
    %v4755 = vld [vmem:[#allocation4 + $0xc8] sm:$0xff]
    %v4756 = vld [vmem:[#allocation4 + $0xd0] sm:$0xff]
    %v4757 = vld [vmem:[#allocation4 + $0xd8] sm:$0xff]
    %v4758 = vld [vmem:[#allocation4 + $0xe0] sm:$0xff]
    %v4759 = vld [vmem:[#allocation4 + $0xe8] sm:$0xff]
    %v4760 = vld [vmem:[#allocation4 + $0xf0] sm:$0xff]
    %v4761 = vld [vmem:[#allocation4 + $0xf8] sm:$0xff]
    %v4762 = vunpack.c.l.s8.bf16 %v4730
    %v4763 = vunpack.c.h.s8.bf16 %v4730
    %v4764 = vunpack.c.l.s8.bf16 %v4731
    %v4765 = vunpack.c.h.s8.bf16 %v4731
    %v4766 = vunpack.c.l.s8.bf16 %v4732
    %v4767 = vunpack.c.h.s8.bf16 %v4732
    %v4768 = vunpack.c.l.s8.bf16 %v4733
    %v4769 = vunpack.c.h.s8.bf16 %v4733
    %v4770 = vunpack.c.l.s8.bf16 %v4734
    %v4771 = vunpack.c.h.s8.bf16 %v4734
    %v4772 = vunpack.c.l.s8.bf16 %v4735
    %v4773 = vunpack.c.h.s8.bf16 %v4735
    %v4774 = vunpack.c.l.s8.bf16 %v4736
    %v4775 = vunpack.c.h.s8.bf16 %v4736
    %v4776 = vunpack.c.l.s8.bf16 %v4737
    %v4777 = vunpack.c.h.s8.bf16 %v4737
    %v4778 = vunpack.c.l.s8.bf16 %v4738
    %v4779 = vunpack.c.h.s8.bf16 %v4738
    %v4780 = vunpack.c.l.s8.bf16 %v4739
    %v4781 = vunpack.c.h.s8.bf16 %v4739
    %v4782 = vunpack.c.l.s8.bf16 %v4740
    %v4783 = vunpack.c.h.s8.bf16 %v4740
    %v4784 = vunpack.c.l.s8.bf16 %v4741
    %v4785 = vunpack.c.h.s8.bf16 %v4741
    %v4786 = vunpack.c.l.s8.bf16 %v4742
    %v4787 = vunpack.c.h.s8.bf16 %v4742
    %v4788 = vunpack.c.l.s8.bf16 %v4743
    %v4789 = vunpack.c.h.s8.bf16 %v4743
    %v4790 = vunpack.c.l.s8.bf16 %v4744
    %v4791 = vunpack.c.h.s8.bf16 %v4744
    %v4792 = vunpack.c.l.s8.bf16 %v4745
    %v4793 = vunpack.c.h.s8.bf16 %v4745
    %v4794 = vunpack.c.l.s8.bf16 %v4746
    %v4795 = vunpack.c.h.s8.bf16 %v4746
    %v4796 = vunpack.c.l.s8.bf16 %v4747
    %v4797 = vunpack.c.h.s8.bf16 %v4747
    %v4798 = vunpack.c.l.s8.bf16 %v4748
    %v4799 = vunpack.c.h.s8.bf16 %v4748
    %v4800 = vunpack.c.l.s8.bf16 %v4749
    %v4801 = vunpack.c.h.s8.bf16 %v4749
    %v4802 = vunpack.c.l.s8.bf16 %v4750
    %v4803 = vunpack.c.h.s8.bf16 %v4750
    %v4804 = vunpack.c.l.s8.bf16 %v4751
    %v4805 = vunpack.c.h.s8.bf16 %v4751
    %v4806 = vunpack.c.l.s8.bf16 %v4752
    %v4807 = vunpack.c.h.s8.bf16 %v4752
    %v4808 = vunpack.c.l.s8.bf16 %v4753
    %v4809 = vunpack.c.h.s8.bf16 %v4753
    %v4810 = vunpack.c.l.s8.bf16 %v4754
    %v4811 = vunpack.c.h.s8.bf16 %v4754
    %v4812 = vunpack.c.l.s8.bf16 %v4755
    %v4813 = vunpack.c.h.s8.bf16 %v4755
    %v4814 = vunpack.c.l.s8.bf16 %v4756
    %v4815 = vunpack.c.h.s8.bf16 %v4756
    %v4816 = vunpack.c.l.s8.bf16 %v4757
    %v4817 = vunpack.c.h.s8.bf16 %v4757
    %v4818 = vunpack.c.l.s8.bf16 %v4758
    %v4819 = vunpack.c.h.s8.bf16 %v4758
    %v4820 = vunpack.c.l.s8.bf16 %v4759
    %v4821 = vunpack.c.h.s8.bf16 %v4759
    %v4822 = vunpack.c.l.s8.bf16 %v4760
    %v4823 = vunpack.c.h.s8.bf16 %v4760
    %v4824 = vunpack.c.l.s8.bf16 %v4761
    %v4825 = vunpack.c.h.s8.bf16 %v4761
    %4826 = vmatprep.subr.bf16.mxu0 0
    %4827 = vmatpush1.bf16.msra.mxu0 %v4769
    %4828 = vmatprep.subr.bf16.mxu0 0
    %4829 = vmatpush1.bf16.msra.mxu0 %v4768
    %4830 = vmatprep.subr.bf16.mxu0 0
    %4831 = vmatpush1.bf16.msra.mxu0 %v4767
    %4832 = vmatprep.subr.bf16.mxu0 0
    %4833 = vmatpush1.bf16.msra.mxu0 %v4766
    %4834 = vmatprep.subr.bf16.mxu0 0
    %4835 = vmatpush1.bf16.msra.mxu0 %v4765
    %4836 = vmatprep.subr.bf16.mxu0 0
    %4837 = vmatpush1.bf16.msra.mxu0 %v4764
    %4838 = vmatprep.subr.bf16.mxu0 0
    %4839 = vmatpush1.bf16.msra.mxu0 %v4763
    %4840 = vmatprep.subr.bf16.mxu0 0
    %4841 = vmatpush1.bf16.msra.mxu0 %v4762
    %4842 = vmatprep.subr.bf16.mxu0 0
    %4843 = vmatpush2.bf16.msra.mxu0 %v4777
    %4844 = vmatprep.subr.bf16.mxu0 0
    %4845 = vmatpush2.bf16.msra.mxu0 %v4776
    %4846 = vmatprep.subr.bf16.mxu0 0
    %4847 = vmatpush2.bf16.msra.mxu0 %v4775
    %4848 = vmatprep.subr.bf16.mxu0 0
    %4849 = vmatpush2.bf16.msra.mxu0 %v4774
    %4850 = vmatprep.subr.bf16.mxu0 0
    %4851 = vmatpush2.bf16.msra.mxu0 %v4773
    %4852 = vmatprep.subr.bf16.mxu0 0
    %4853 = vmatpush2.bf16.msra.mxu0 %v4772
    %4854 = vmatprep.subr.bf16.mxu0 0
    %4855 = vmatpush2.bf16.msra.mxu0 %v4771
    %4856 = vmatprep.subr.bf16.mxu0 0
    %4857 = vmatpush2.bf16.msra.mxu0 %v4770
    %4858 = vmatprep.mubr.bf16.mxu0 %v4723
    %4859 = vmatmul.mubr.bf16.gmra.mxu0 %v4722
    %v4860 = vpop.f32.mrf.mxu0
    %v4861 = vadd.f32 0.0, %v4860
    %v4862 = vpop.f32.mrf.mxu0
    %v4863 = vpop.f32.mrf.mxu0
    %v4864 = vpop.f32.mrf.mxu0
    %4865 = vdwg.mxu0
    %4866 = vmatprep.subr.bf16.mxu0 0
    %4867 = vmatpush1.bf16.msra.mxu0 %v4785
    %4868 = vmatprep.subr.bf16.mxu0 0
    %4869 = vmatpush1.bf16.msra.mxu0 %v4784
    %4870 = vmatprep.subr.bf16.mxu0 0
    %4871 = vmatpush1.bf16.msra.mxu0 %v4783
    %4872 = vmatprep.subr.bf16.mxu0 0
    %4873 = vmatpush1.bf16.msra.mxu0 %v4782
    %4874 = vmatprep.subr.bf16.mxu0 0
    %4875 = vmatpush1.bf16.msra.mxu0 %v4781
    %4876 = vmatprep.subr.bf16.mxu0 0
    %4877 = vmatpush1.bf16.msra.mxu0 %v4780
    %4878 = vmatprep.subr.bf16.mxu0 0
    %4879 = vmatpush1.bf16.msra.mxu0 %v4779
    %4880 = vmatprep.subr.bf16.mxu0 0
    %4881 = vmatpush1.bf16.msra.mxu0 %v4778
    %4882 = vmatprep.subr.bf16.mxu0 0
    %4883 = vmatpush2.bf16.msra.mxu0 %v4793
    %4884 = vmatprep.subr.bf16.mxu0 0
    %4885 = vmatpush2.bf16.msra.mxu0 %v4792
    %4886 = vmatprep.subr.bf16.mxu0 0
    %4887 = vmatpush2.bf16.msra.mxu0 %v4791
    %4888 = vmatprep.subr.bf16.mxu0 0
    %4889 = vmatpush2.bf16.msra.mxu0 %v4790
    %4890 = vmatprep.subr.bf16.mxu0 0
    %4891 = vmatpush2.bf16.msra.mxu0 %v4789
    %4892 = vmatprep.subr.bf16.mxu0 0
    %4893 = vmatpush2.bf16.msra.mxu0 %v4788
    %4894 = vmatprep.subr.bf16.mxu0 0
    %4895 = vmatpush2.bf16.msra.mxu0 %v4787
    %4896 = vmatprep.subr.bf16.mxu0 0
    %4897 = vmatpush2.bf16.msra.mxu0 %v4786
    %4898 = vmatprep.mubr.bf16.mxu0 %v4725
    %4899 = vmatmul.mubr.bf16.gmra.mxu0 %v4724
    %v4900 = vpop.f32.mrf.mxu0
    %v4901 = vadd.f32 %v4861, %v4900
    %v4902 = vpop.f32.mrf.mxu0
    %v4903 = vpop.f32.mrf.mxu0
    %v4904 = vpop.f32.mrf.mxu0
    %4905 = vdwg.mxu0
    %4906 = vmatprep.subr.bf16.mxu0 0
    %4907 = vmatpush1.bf16.msra.mxu0 %v4801
    %4908 = vmatprep.subr.bf16.mxu0 0
    %4909 = vmatpush1.bf16.msra.mxu0 %v4800
    %4910 = vmatprep.subr.bf16.mxu0 0
    %4911 = vmatpush1.bf16.msra.mxu0 %v4799
    %4912 = vmatprep.subr.bf16.mxu0 0
    %4913 = vmatpush1.bf16.msra.mxu0 %v4798
    %4914 = vmatprep.subr.bf16.mxu0 0
    %4915 = vmatpush1.bf16.msra.mxu0 %v4797
    %4916 = vmatprep.subr.bf16.mxu0 0
    %4917 = vmatpush1.bf16.msra.mxu0 %v4796
    %4918 = vmatprep.subr.bf16.mxu0 0
    %4919 = vmatpush1.bf16.msra.mxu0 %v4795
    %4920 = vmatprep.subr.bf16.mxu0 0
    %4921 = vmatpush1.bf16.msra.mxu0 %v4794
    %4922 = vmatprep.subr.bf16.mxu0 0
    %4923 = vmatpush2.bf16.msra.mxu0 %v4809
    %4924 = vmatprep.subr.bf16.mxu0 0
    %4925 = vmatpush2.bf16.msra.mxu0 %v4808
    %4926 = vmatprep.subr.bf16.mxu0 0
    %4927 = vmatpush2.bf16.msra.mxu0 %v4807
    %4928 = vmatprep.subr.bf16.mxu0 0
    %4929 = vmatpush2.bf16.msra.mxu0 %v4806
    %4930 = vmatprep.subr.bf16.mxu0 0
    %4931 = vmatpush2.bf16.msra.mxu0 %v4805
    %4932 = vmatprep.subr.bf16.mxu0 0
    %4933 = vmatpush2.bf16.msra.mxu0 %v4804
    %4934 = vmatprep.subr.bf16.mxu0 0
    %4935 = vmatpush2.bf16.msra.mxu0 %v4803
    %4936 = vmatprep.subr.bf16.mxu0 0
    %4937 = vmatpush2.bf16.msra.mxu0 %v4802
    %4938 = vmatprep.mubr.bf16.mxu0 %v4727
    %4939 = vmatmul.mubr.bf16.gmra.mxu0 %v4726
    %v4940 = vpop.f32.mrf.mxu0
    %v4941 = vadd.f32 %v4901, %v4940
    %v4942 = vpop.f32.mrf.mxu0
    %v4943 = vpop.f32.mrf.mxu0
    %v4944 = vpop.f32.mrf.mxu0
    %4945 = vdwg.mxu0
    %4946 = vmatprep.subr.bf16.mxu0 0
    %4947 = vmatpush1.bf16.msra.mxu0 %v4817
    %4948 = vmatprep.subr.bf16.mxu0 0
    %4949 = vmatpush1.bf16.msra.mxu0 %v4816
    %4950 = vmatprep.subr.bf16.mxu0 0
    %4951 = vmatpush1.bf16.msra.mxu0 %v4815
    %4952 = vmatprep.subr.bf16.mxu0 0
    %4953 = vmatpush1.bf16.msra.mxu0 %v4814
    %4954 = vmatprep.subr.bf16.mxu0 0
    %4955 = vmatpush1.bf16.msra.mxu0 %v4813
    %4956 = vmatprep.subr.bf16.mxu0 0
    %4957 = vmatpush1.bf16.msra.mxu0 %v4812
    %4958 = vmatprep.subr.bf16.mxu0 0
    %4959 = vmatpush1.bf16.msra.mxu0 %v4811
    %4960 = vmatprep.subr.bf16.mxu0 0
    %4961 = vmatpush1.bf16.msra.mxu0 %v4810
    %4962 = vmatprep.subr.bf16.mxu0 0
    %4963 = vmatpush2.bf16.msra.mxu0 %v4825
    %4964 = vmatprep.subr.bf16.mxu0 0
    %4965 = vmatpush2.bf16.msra.mxu0 %v4824
    %4966 = vmatprep.subr.bf16.mxu0 0
    %4967 = vmatpush2.bf16.msra.mxu0 %v4823
    %4968 = vmatprep.subr.bf16.mxu0 0
    %4969 = vmatpush2.bf16.msra.mxu0 %v4822
    %4970 = vmatprep.subr.bf16.mxu0 0
    %4971 = vmatpush2.bf16.msra.mxu0 %v4821
    %4972 = vmatprep.subr.bf16.mxu0 0
    %4973 = vmatpush2.bf16.msra.mxu0 %v4820
    %4974 = vmatprep.subr.bf16.mxu0 0
    %4975 = vmatpush2.bf16.msra.mxu0 %v4819
    %4976 = vmatprep.subr.bf16.mxu0 0
    %4977 = vmatpush2.bf16.msra.mxu0 %v4818
    %4978 = vmatprep.mubr.bf16.mxu0 %v4729
    %4979 = vmatmul.mubr.bf16.gmra.mxu0 %v4728
    %v4980 = vpop.f32.mrf.mxu0
    %v4981 = vadd.f32 %v4941, %v4980
    %v4982 = vpop.f32.mrf.mxu0
    %v4983 = vpop.f32.mrf.mxu0
    %v4984 = vpop.f32.mrf.mxu0
    %4985 = vdwg.mxu0
    %v4986 = vld [vmem:[#allocation6 + $0x3] sm:$0x1]
    %v4987 = vlaneseq
    %v4988 = vshrl.u32 %v4987, 7
    %v4989 = vsub.s32 0, %v4988
    %v4990 = vrot.slane %v4986, %v4989
    %v4991 = vmul.f32 %v4981, %v4990
    %v4992 = vld [vmem:[#allocation7 + $0x3] sm:$0x1]
    %v4993 = vlaneseq
    %v4994 = vshrl.u32 %v4993, 7
    %v4995 = vsub.s32 0, %v4994
    %v4996 = vrot.slane %v4992, %v4995
    %v4997 = vadd.f32 %v4991, %v4996
    %v4998 = vtanh.pop %v4997
    %v4999 = vmul.f32 %v4998, 0.5
    %v5000 = vadd.f32 %v4999, 0.5
    %5001 = vst [vmem:[%s5] sm:$0xff] %v5000
    // Predicated region
    $region38: #{regressor_forward.1} parent=1 // pred_check
      _
    $region39: #{regressor_forward.1} parent=1 // pred_check_branch
      %5003 = sbr.rel (0) target = $region41
    $region40: #{regressor_forward.1} parent=1 // pred_region
      _
    $region41: #{regressor_forward.1} parent=1 // pred_fallthru
      _
    // Predicated region
    $region42: #{regressor_forward.1} parent=1 // pred_check
      _
    $region43: #{regressor_forward.1} parent=1 // pred_check_branch
      %5005 = sbr.rel (0) target = $region45
    $region44: #{regressor_forward.1} parent=1 // pred_region
      _
    $region45: #{regressor_forward.1} parent=1 // pred_fallthru
      _
    %5006 = vsyncpa [#allocation3], 1
    %5007 = vsyncpa [#allocation5], 1
    %5008 = vsyncpa [#allocation8], 1

</llo_original>
